<compile_context>
chip_gen: v7x
topology: tpu7x:2x2x1
jax: 0.10.0
libtpu: 0.0.40
codegen_flags: <defaults>
</compile_context>

<pallas_src>
import jax
import jax.numpy as jnp
import numpy as np
from jax.experimental import pallas as pl
from jax.experimental.pallas import tpu as pltpu

L = 11            # IMU window length (fixed by proj in_features = 256 * 1 * 11)
C_IN = 6          # IMU channels
C1, C2, C3 = 64, 128, 256
I_F_LEN = 256     # opt.i_f_len (must be 256 for the final .view to work)
BN_EPS = 1e-5
TB_MAX = 256      # IMU windows processed per grid step (matches 256-wide MXU)


def _inertial_kernel(x_ref,
                     w1_ref, t1_ref,
                     w2_ref, t2_ref,
                     w3_ref, t3_ref,
                     wp_ref, bp_ref,
                     out_ref):
    """One block of TB windows; x_ref is (L*TB, 18) bf16, time-major (row = l*TB + w)."""
    tb = out_ref.shape[0]
    r = x_ref.shape[0]                       # == L * tb

    def lrelu(y):                            # LeakyReLU(0.1): mul + max only
        return jnp.maximum(y, 0.1 * y)

    def shifts(h):
        """Time l-1 / l+1 views of a time-major block (zeros at the ends)."""
        zb = jnp.zeros((tb, h.shape[1]), jnp.bfloat16)
        prev = jnp.concatenate([zb, h[:r - tb, :]], axis=0)   # time l-1
        nxt = jnp.concatenate([h[tb:, :], zb], axis=0)        # time l+1
        return prev, nxt

    # Layer 1: pre-im2col'd input, single (18 -> 64) bf16 matmul.  BN scale is
    # folded into the weights; conv bias is folded into the shift.
    y = jnp.dot(x_ref[...], w1_ref[...], preferred_element_type=jnp.float32)
    h = lrelu(y + t1_ref[...]).astype(jnp.bfloat16)           # (r, 64)

    # Layer 2 (cin=64): three full-width bf16 matmuls with +/-1 time shifts.
    prev, nxt = shifts(h)
    y = (jnp.dot(prev, w2_ref[0], preferred_element_type=jnp.float32)
         + jnp.dot(h,    w2_ref[1], preferred_element_type=jnp.float32)
         + jnp.dot(nxt,  w2_ref[2], preferred_element_type=jnp.float32))
    h = lrelu(y + t2_ref[...]).astype(jnp.bfloat16)           # (r, 128)

    # Layer 3 (cin=128): fuse the three taps into one K=384 matmul (the lane
    # concat of 128-wide tiles is lane-tile aligned).
    prev, nxt = shifts(h)
    hcat = jnp.concatenate([prev, h, nxt], axis=1)            # (r, 384)
    y = jnp.dot(hcat, w3_ref[...], preferred_element_type=jnp.float32)
    h = lrelu(y + t3_ref[...]).astype(jnp.bfloat16)           # (r, 256)

    # proj: Linear(256*11 -> 256) as eleven (tb,256)@(256,256) bf16 matmuls.
    acc = jnp.dot(h[0:tb, :], wp_ref[0], preferred_element_type=jnp.float32)
    for l in range(1, L):
        acc = acc + jnp.dot(h[l * tb:(l + 1) * tb, :], wp_ref[l],
                            preferred_element_type=jnp.float32)
    out_ref[...] = acc + bp_ref[...]


def _round_up(v, m):
    return (v + m - 1) // m * m


def inertial_encoder_forward(x, params, tb=None):
    """x: (B, S, 11, 6) float32 -> (B, S, 256) float32."""
    B, S, Lx, Cx = x.shape
    assert (Lx, Cx) == (L, C_IN)
    N = B * S
    if tb is None:
        if N <= 2 * TB_MAX:
            # Keep nb >= 2 so both v7x TensorCores get work on small batches.
            tb = max(8, _round_up(pl.cdiv(N, 2), 8))
        else:
            tb = TB_MAX
    nb = pl.cdiv(N, tb)
    n_pad = nb * tb

    xr = x.reshape(N, L, C_IN).astype(jnp.float32)
    # Pre-im2col layer 1: concatenate the three k=3 taps along channels.
    xp = jnp.pad(xr, ((0, 0), (1, 1), (0, 0)))
    xi = jnp.concatenate([xp[:, k:k + L, :] for k in range(3)], axis=-1)  # (N,L,18)
    if n_pad != N:
        xi = jnp.pad(xi, ((0, n_pad - N), (0, 0), (0, 0)))
    # Block-local time-major layout: row (block n, time l, window w); bf16
    # halves HBM traffic and feeds the MXU directly.
    xt = (xi.reshape(nb, tb, L, 3 * C_IN)
            .transpose(0, 2, 1, 3)
            .reshape(nb * L * tb, 3 * C_IN)
            .astype(jnp.bfloat16))

    (w1, t1, w2, t2, w3, t3, wp, bp) = params

    def full(arr):
        return pl.BlockSpec(arr.shape, lambda n, _nd=arr.ndim: (0,) * _nd)

    out = pl.pallas_call(
        _inertial_kernel,
        out_shape=jax.ShapeDtypeStruct((n_pad, I_F_LEN), jnp.float32),
        grid_spec=pltpu.PrefetchScalarGridSpec(
            num_scalar_prefetch=0,
            grid=(nb,),
            in_specs=[
                pl.BlockSpec((L * tb, 3 * C_IN), lambda n: (n, 0)),
                full(w1), full(t1),
                full(w2), full(t2),
                full(w3), full(t3),
                full(wp), full(bp),
            ],
            out_specs=pl.BlockSpec((tb, I_F_LEN), lambda n: (n, 0)),
        ),
        compiler_params=pltpu.CompilerParams(
            dimension_semantics=("parallel",),
            vmem_limit_bytes=32 * 1024 * 1024),
    )(xt, w1, t1, w2, t2, w3, t3, wp, bp)

    return out[:N].reshape(B, S, I_F_LEN)


def init_params(key):
    """Deterministic synthetic params in PyTorch shapes, converted to kernel layout."""
    ks = jax.random.split(key, 12)

    def nrm(k, shape, scale):
        return scale * jax.random.normal(k, shape, jnp.float32)

    # PyTorch-shaped parameters
    w1_t = nrm(ks[0], (C1, C_IN, 3), 0.20); b1_t = nrm(ks[1], (C1,), 0.1)
    w2_t = nrm(ks[2], (C2, C1, 3), 0.05);   b2_t = nrm(ks[3], (C2,), 0.1)
    w3_t = nrm(ks[4], (C3, C2, 3), 0.05);   b3_t = nrm(ks[5], (C3,), 0.1)
    wp_t = nrm(ks[6], (I_F_LEN, C3 * L), 0.02); bp_t = nrm(ks[7], (I_F_LEN,), 0.1)

    def bn(k, c):
        k1, k2, k3, k4 = jax.random.split(k, 4)
        gamma = 1.0 + 0.1 * jax.random.normal(k1, (c,), jnp.float32)
        beta = 0.1 * jax.random.normal(k2, (c,), jnp.float32)
        mean = 0.1 * jax.random.normal(k3, (c,), jnp.float32)
        var = jax.random.uniform(k4, (c,), jnp.float32, minval=0.5, maxval=1.5)
        scale = gamma * jax.lax.rsqrt(var + BN_EPS)
        shift = beta - mean * scale
        return scale, shift

    bs1, bt1 = bn(ks[8], C1)
    bs2, bt2 = bn(ks[9], C2)
    bs3, bt3 = bn(ks[10], C3)

    # Kernel layouts.  Fold BN into the conv:
    #   ((x*W + b) * s + t)  ==  x*(W*s) + (t + b*s)
    def conv_w3d(wt, s):            # (Cout,Cin,K) -> (K,Cin,Cout) bf16, scale folded
        return (jnp.transpose(wt, (2, 1, 0)) * s[None, None, :]).astype(jnp.bfloat16)

    def conv_w2d(wt, s):            # (Cout,Cin,K) -> (K*Cin,Cout) bf16, scale folded
        return conv_w3d(wt, s).reshape(-1, wt.shape[0])

    row = lambda v: v.reshape(1, -1)
    fold = lambda b, s, t: row(t + b * s)     # conv bias folded into BN shift

    # proj: torch flattens (N, 256, 11) channel-major, so in-feature idx = c*11 + l.
    # wp_kernel[l, c, o] = wp_t[o, c*11 + l]
    wp = jnp.transpose(wp_t.reshape(I_F_LEN, C3, L), (2, 1, 0)).astype(jnp.bfloat16)

    return (conv_w2d(w1_t, bs1), fold(b1_t, bs1, bt1),
            conv_w3d(w2_t, bs2), fold(b2_t, bs2, bt2),
            conv_w2d(w3_t, bs3), fold(b3_t, bs3, bt3),
            wp, row(bp_t))


def ref_forward(x, params):
    """Pure-JAX reference with identical (eval-mode, bf16-matmul) semantics."""
    (w1, t1, w2, t2, w3, t3, wp, bp) = params
    B, S = x.shape[:2]
    h = x.reshape(B * S, L, C_IN).astype(jnp.float32)

    def lrelu(y):
        return jnp.maximum(y, 0.1 * y)

    # Layer 1 (im2col, fused taps).
    hp = jnp.pad(h, ((0, 0), (1, 1), (0, 0)))
    hi = jnp.concatenate([hp[:, k:k + L, :] for k in range(3)],
                         axis=-1).astype(jnp.bfloat16)
    h = lrelu(jnp.einsum('nlc,cd->nld', hi, w1,
                         preferred_element_type=jnp.float32) + t1[None])
    # Layer 2 (per-tap matmuls).
    h = h.astype(jnp.bfloat16)
    hp = jnp.pad(h, ((0, 0), (1, 1), (0, 0)))
    shifts = jnp.stack([hp[:, k:k + L, :] for k in range(3)], axis=0)
    h = lrelu(jnp.einsum('knlc,kcd->nld', shifts, w2,
                         preferred_element_type=jnp.float32) + t2[None])
    # Layer 3 (fused taps).
    h = h.astype(jnp.bfloat16)
    hp = jnp.pad(h, ((0, 0), (1, 1), (0, 0)))
    hcat = jnp.concatenate([hp[:, k:k + L, :] for k in range(3)], axis=-1)
    h = lrelu(jnp.einsum('nlc,cd->nld', hcat, w3,
                         preferred_element_type=jnp.float32) + t3[None])
    # proj
    h = h.astype(jnp.bfloat16)
    out = jnp.einsum('nlc,lcd->nd', h, wp,
                     preferred_element_type=jnp.float32) + bp
    return out.reshape(B, S, I_F_LEN)


if __name__ == "__main__":
    key = jax.random.PRNGKey(0)
    kx, kp = jax.random.split(key)
    B, S = 2, 8
    x = jax.random.normal(kx, (B, S, L, C_IN), jnp.float32)
    params = init_params(kp)

    out = inertial_encoder_forward(x, params)
    out = jax.block_until_ready(out)
    assert out.shape == (B, S, I_F_LEN), out.shape

    ref = ref_forward(x, params)
    # bf16 matmul path: both kernel and reference quantize at the same points,
    # so the residual difference is only f32 accumulation-order noise.
    np.testing.assert_allclose(np.asarray(out), np.asarray(ref),
                               rtol=1e-2, atol=1e-2)
    print("KERNEL_OK")
</pallas_src>

<mosaic_0001>
module attributes {stable_mosaic.version = 11 : i64} {
  func.func @_inertial_kernel(%arg0: i32, %arg1: memref<88x18xbf16, #tpu.memory_space<vmem>>, %arg2: memref<18x64xbf16, #tpu.memory_space<vmem>>, %arg3: memref<1x64xf32, #tpu.memory_space<vmem>>, %arg4: memref<3x64x128xbf16, #tpu.memory_space<vmem>>, %arg5: memref<1x128xf32, #tpu.memory_space<vmem>>, %arg6: memref<384x256xbf16, #tpu.memory_space<vmem>>, %arg7: memref<1x256xf32, #tpu.memory_space<vmem>>, %arg8: memref<11x256x256xbf16, #tpu.memory_space<vmem>>, %arg9: memref<1x256xf32, #tpu.memory_space<vmem>>, %arg10: memref<8x256xf32, #tpu.memory_space<vmem>>) attributes {dimension_semantics = [#tpu.dimension_semantics<parallel>], iteration_bounds = array<i64: 2>, scalar_prefetch = 0 : i64, scratch_operands = 0 : i64, tpu.core_type = #tpu.core_type<tc>, window_params = [{transform_indices = @transform_0, window_bounds = array<i64: 88, 18>}, {pipeline_mode = #tpu.pipeline_mode<synchronous>, transform_indices = @transform_1, window_bounds = array<i64: 18, 64>}, {pipeline_mode = #tpu.pipeline_mode<synchronous>, transform_indices = @transform_2, window_bounds = array<i64: 1, 64>}, {pipeline_mode = #tpu.pipeline_mode<synchronous>, transform_indices = @transform_3, window_bounds = array<i64: 3, 64, 128>}, {pipeline_mode = #tpu.pipeline_mode<synchronous>, transform_indices = @transform_4, window_bounds = array<i64: 1, 128>}, {pipeline_mode = #tpu.pipeline_mode<synchronous>, transform_indices = @transform_5, window_bounds = array<i64: 384, 256>}, {pipeline_mode = #tpu.pipeline_mode<synchronous>, transform_indices = @transform_6, window_bounds = array<i64: 1, 256>}, {pipeline_mode = #tpu.pipeline_mode<synchronous>, transform_indices = @transform_7, window_bounds = array<i64: 11, 256, 256>}, {pipeline_mode = #tpu.pipeline_mode<synchronous>, transform_indices = @transform_8, window_bounds = array<i64: 1, 256>}, {transform_indices = @transform_9, window_bounds = array<i64: 8, 256>}]} {
    %c0 = arith.constant 0 : index
    %c0_0 = arith.constant 0 : index
    %0 = vector.load %arg1[%c0, %c0_0] : memref<88x18xbf16, #tpu.memory_space<vmem>>, vector<88x18xbf16>
    %c0_1 = arith.constant 0 : index
    %c0_2 = arith.constant 0 : index
    %1 = vector.load %arg2[%c0_1, %c0_2] : memref<18x64xbf16, #tpu.memory_space<vmem>>, vector<18x64xbf16>
    %cst = arith.constant dense<0.000000e+00> : vector<88x64xf32>
    %2 = tpu.matmul %0, %1, %cst {dimension_numbers = #tpu.dot_dimension_numbers<[1], [0], [0], [1], [0, 0, 1, 1], [], []>} : vector<88x18xbf16>, vector<18x64xbf16>, vector<88x64xf32> -> vector<88x64xf32>
    %c0_3 = arith.constant 0 : index
    %c0_4 = arith.constant 0 : index
    %3 = vector.load %arg3[%c0_3, %c0_4] : memref<1x64xf32, #tpu.memory_space<vmem>>, vector<1x64xf32>
    %4 = vector.broadcast %3 : vector<1x64xf32> to vector<88x64xf32>
    %5 = arith.addf %2, %4 : vector<88x64xf32>
    %cst_5 = arith.constant 1.000000e-01 : f32
    %6 = vector.broadcast %cst_5 : f32 to vector<88x64xf32>
    %7 = arith.mulf %6, %5 : vector<88x64xf32>
    %8 = arith.maximumf %5, %7 : vector<88x64xf32>
    %9 = arith.truncf %8 : vector<88x64xf32> to vector<88x64xbf16>
    %cst_6 = arith.constant 0.000000e+00 : bf16
    %10 = vector.broadcast %cst_6 : bf16 to vector<8x64xbf16>
    %11 = vector.extract_strided_slice %9 {offsets = [0, 0], sizes = [80, 64], strides = [1, 1]} : vector<88x64xbf16> to vector<80x64xbf16>
    %12 = tpu.concatenate %10, %11 in 0 : vector<8x64xbf16>, vector<80x64xbf16> -> vector<88x64xbf16>
    %13 = vector.extract_strided_slice %9 {offsets = [8, 0], sizes = [80, 64], strides = [1, 1]} : vector<88x64xbf16> to vector<80x64xbf16>
    %14 = tpu.concatenate %13, %10 in 0 : vector<80x64xbf16>, vector<8x64xbf16> -> vector<88x64xbf16>
    %c0_7 = arith.constant 0 : index
    %c0_8 = arith.constant 0 : index
    %c0_9 = arith.constant 0 : index
    %15 = vector.load %arg4[%c0_7, %c0_8, %c0_9] : memref<3x64x128xbf16, #tpu.memory_space<vmem>>, vector<1x64x128xbf16>
    %16 = vector.shape_cast %15 : vector<1x64x128xbf16> to vector<64x128xbf16>
    %cst_10 = arith.constant dense<0.000000e+00> : vector<88x128xf32>
    %17 = tpu.matmul %12, %16, %cst_10 {dimension_numbers = #tpu.dot_dimension_numbers<[1], [0], [0], [1], [0, 0, 1, 1], [], []>} : vector<88x64xbf16>, vector<64x128xbf16>, vector<88x128xf32> -> vector<88x128xf32>
    %c1 = arith.constant 1 : index
    %c0_11 = arith.constant 0 : index
    %c0_12 = arith.constant 0 : index
    %18 = vector.load %arg4[%c1, %c0_11, %c0_12] : memref<3x64x128xbf16, #tpu.memory_space<vmem>>, vector<1x64x128xbf16>
    %19 = vector.shape_cast %18 : vector<1x64x128xbf16> to vector<64x128xbf16>
    %cst_13 = arith.constant dense<0.000000e+00> : vector<88x128xf32>
    %20 = tpu.matmul %9, %19, %cst_13 {dimension_numbers = #tpu.dot_dimension_numbers<[1], [0], [0], [1], [0, 0, 1, 1], [], []>} : vector<88x64xbf16>, vector<64x128xbf16>, vector<88x128xf32> -> vector<88x128xf32>
    %21 = arith.addf %17, %20 : vector<88x128xf32>
    %c2 = arith.constant 2 : index
    %c0_14 = arith.constant 0 : index
    %c0_15 = arith.constant 0 : index
    %22 = vector.load %arg4[%c2, %c0_14, %c0_15] : memref<3x64x128xbf16, #tpu.memory_space<vmem>>, vector<1x64x128xbf16>
    %23 = vector.shape_cast %22 : vector<1x64x128xbf16> to vector<64x128xbf16>
    %cst_16 = arith.constant dense<0.000000e+00> : vector<88x128xf32>
    %24 = tpu.matmul %14, %23, %cst_16 {dimension_numbers = #tpu.dot_dimension_numbers<[1], [0], [0], [1], [0, 0, 1, 1], [], []>} : vector<88x64xbf16>, vector<64x128xbf16>, vector<88x128xf32> -> vector<88x128xf32>
    %25 = arith.addf %21, %24 : vector<88x128xf32>
    %c0_17 = arith.constant 0 : index
    %c0_18 = arith.constant 0 : index
    %26 = vector.load %arg5[%c0_17, %c0_18] : memref<1x128xf32, #tpu.memory_space<vmem>>, vector<1x128xf32>
    %27 = vector.broadcast %26 : vector<1x128xf32> to vector<88x128xf32>
    %28 = arith.addf %25, %27 : vector<88x128xf32>
    %cst_19 = arith.constant 1.000000e-01 : f32
    %29 = vector.broadcast %cst_19 : f32 to vector<88x128xf32>
    %30 = arith.mulf %29, %28 : vector<88x128xf32>
    %31 = arith.maximumf %28, %30 : vector<88x128xf32>
    %32 = arith.truncf %31 : vector<88x128xf32> to vector<88x128xbf16>
    %cst_20 = arith.constant 0.000000e+00 : bf16
    %33 = vector.broadcast %cst_20 : bf16 to vector<8x128xbf16>
    %34 = vector.extract_strided_slice %32 {offsets = [0, 0], sizes = [80, 128], strides = [1, 1]} : vector<88x128xbf16> to vector<80x128xbf16>
    %35 = tpu.concatenate %33, %34 in 0 : vector<8x128xbf16>, vector<80x128xbf16> -> vector<88x128xbf16>
    %36 = vector.extract_strided_slice %32 {offsets = [8, 0], sizes = [80, 128], strides = [1, 1]} : vector<88x128xbf16> to vector<80x128xbf16>
    %37 = tpu.concatenate %36, %33 in 0 : vector<80x128xbf16>, vector<8x128xbf16> -> vector<88x128xbf16>
    %38 = tpu.concatenate %35, %32, %37 in 1 : vector<88x128xbf16>, vector<88x128xbf16>, vector<88x128xbf16> -> vector<88x384xbf16>
    %c0_21 = arith.constant 0 : index
    %c0_22 = arith.constant 0 : index
    %39 = vector.load %arg6[%c0_21, %c0_22] : memref<384x256xbf16, #tpu.memory_space<vmem>>, vector<384x256xbf16>
    %cst_23 = arith.constant dense<0.000000e+00> : vector<88x256xf32>
    %40 = tpu.matmul %38, %39, %cst_23 {dimension_numbers = #tpu.dot_dimension_numbers<[1], [0], [0], [1], [0, 0, 1, 1], [], []>} : vector<88x384xbf16>, vector<384x256xbf16>, vector<88x256xf32> -> vector<88x256xf32>
    %c0_24 = arith.constant 0 : index
    %c0_25 = arith.constant 0 : index
    %41 = vector.load %arg7[%c0_24, %c0_25] : memref<1x256xf32, #tpu.memory_space<vmem>>, vector<1x256xf32>
    %42 = vector.broadcast %41 : vector<1x256xf32> to vector<88x256xf32>
    %43 = arith.addf %40, %42 : vector<88x256xf32>
    %cst_26 = arith.constant 1.000000e-01 : f32
    %44 = vector.broadcast %cst_26 : f32 to vector<88x256xf32>
    %45 = arith.mulf %44, %43 : vector<88x256xf32>
    %46 = arith.maximumf %43, %45 : vector<88x256xf32>
    %47 = arith.truncf %46 : vector<88x256xf32> to vector<88x256xbf16>
    %48 = vector.extract_strided_slice %47 {offsets = [0, 0], sizes = [8, 256], strides = [1, 1]} : vector<88x256xbf16> to vector<8x256xbf16>
    %c0_27 = arith.constant 0 : index
    %c0_28 = arith.constant 0 : index
    %c0_29 = arith.constant 0 : index
    %49 = vector.load %arg8[%c0_27, %c0_28, %c0_29] : memref<11x256x256xbf16, #tpu.memory_space<vmem>>, vector<1x256x256xbf16>
    %50 = vector.shape_cast %49 : vector<1x256x256xbf16> to vector<256x256xbf16>
    %cst_30 = arith.constant dense<0.000000e+00> : vector<8x256xf32>
    %51 = tpu.matmul %48, %50, %cst_30 {dimension_numbers = #tpu.dot_dimension_numbers<[1], [0], [0], [1], [0, 0, 1, 1], [], []>} : vector<8x256xbf16>, vector<256x256xbf16>, vector<8x256xf32> -> vector<8x256xf32>
    %52 = vector.extract_strided_slice %47 {offsets = [8, 0], sizes = [8, 256], strides = [1, 1]} : vector<88x256xbf16> to vector<8x256xbf16>
    %c1_31 = arith.constant 1 : index
    %c0_32 = arith.constant 0 : index
    %c0_33 = arith.constant 0 : index
    %53 = vector.load %arg8[%c1_31, %c0_32, %c0_33] : memref<11x256x256xbf16, #tpu.memory_space<vmem>>, vector<1x256x256xbf16>
    %54 = vector.shape_cast %53 : vector<1x256x256xbf16> to vector<256x256xbf16>
    %cst_34 = arith.constant dense<0.000000e+00> : vector<8x256xf32>
    %55 = tpu.matmul %52, %54, %cst_34 {dimension_numbers = #tpu.dot_dimension_numbers<[1], [0], [0], [1], [0, 0, 1, 1], [], []>} : vector<8x256xbf16>, vector<256x256xbf16>, vector<8x256xf32> -> vector<8x256xf32>
    %56 = arith.addf %51, %55 : vector<8x256xf32>
    %57 = vector.extract_strided_slice %47 {offsets = [16, 0], sizes = [8, 256], strides = [1, 1]} : vector<88x256xbf16> to vector<8x256xbf16>
    %c2_35 = arith.constant 2 : index
    %c0_36 = arith.constant 0 : index
    %c0_37 = arith.constant 0 : index
    %58 = vector.load %arg8[%c2_35, %c0_36, %c0_37] : memref<11x256x256xbf16, #tpu.memory_space<vmem>>, vector<1x256x256xbf16>
    %59 = vector.shape_cast %58 : vector<1x256x256xbf16> to vector<256x256xbf16>
    %cst_38 = arith.constant dense<0.000000e+00> : vector<8x256xf32>
    %60 = tpu.matmul %57, %59, %cst_38 {dimension_numbers = #tpu.dot_dimension_numbers<[1], [0], [0], [1], [0, 0, 1, 1], [], []>} : vector<8x256xbf16>, vector<256x256xbf16>, vector<8x256xf32> -> vector<8x256xf32>
    %61 = arith.addf %56, %60 : vector<8x256xf32>
    %62 = vector.extract_strided_slice %47 {offsets = [24, 0], sizes = [8, 256], strides = [1, 1]} : vector<88x256xbf16> to vector<8x256xbf16>
    %c3 = arith.constant 3 : index
    %c0_39 = arith.constant 0 : index
    %c0_40 = arith.constant 0 : index
    %63 = vector.load %arg8[%c3, %c0_39, %c0_40] : memref<11x256x256xbf16, #tpu.memory_space<vmem>>, vector<1x256x256xbf16>
    %64 = vector.shape_cast %63 : vector<1x256x256xbf16> to vector<256x256xbf16>
    %cst_41 = arith.constant dense<0.000000e+00> : vector<8x256xf32>
    %65 = tpu.matmul %62, %64, %cst_41 {dimension_numbers = #tpu.dot_dimension_numbers<[1], [0], [0], [1], [0, 0, 1, 1], [], []>} : vector<8x256xbf16>, vector<256x256xbf16>, vector<8x256xf32> -> vector<8x256xf32>
    %66 = arith.addf %61, %65 : vector<8x256xf32>
    %67 = vector.extract_strided_slice %47 {offsets = [32, 0], sizes = [8, 256], strides = [1, 1]} : vector<88x256xbf16> to vector<8x256xbf16>
    %c4 = arith.constant 4 : index
    %c0_42 = arith.constant 0 : index
    %c0_43 = arith.constant 0 : index
    %68 = vector.load %arg8[%c4, %c0_42, %c0_43] : memref<11x256x256xbf16, #tpu.memory_space<vmem>>, vector<1x256x256xbf16>
    %69 = vector.shape_cast %68 : vector<1x256x256xbf16> to vector<256x256xbf16>
    %cst_44 = arith.constant dense<0.000000e+00> : vector<8x256xf32>
    %70 = tpu.matmul %67, %69, %cst_44 {dimension_numbers = #tpu.dot_dimension_numbers<[1], [0], [0], [1], [0, 0, 1, 1], [], []>} : vector<8x256xbf16>, vector<256x256xbf16>, vector<8x256xf32> -> vector<8x256xf32>
    %71 = arith.addf %66, %70 : vector<8x256xf32>
    %72 = vector.extract_strided_slice %47 {offsets = [40, 0], sizes = [8, 256], strides = [1, 1]} : vector<88x256xbf16> to vector<8x256xbf16>
    %c5 = arith.constant 5 : index
    %c0_45 = arith.constant 0 : index
    %c0_46 = arith.constant 0 : index
    %73 = vector.load %arg8[%c5, %c0_45, %c0_46] : memref<11x256x256xbf16, #tpu.memory_space<vmem>>, vector<1x256x256xbf16>
    %74 = vector.shape_cast %73 : vector<1x256x256xbf16> to vector<256x256xbf16>
    %cst_47 = arith.constant dense<0.000000e+00> : vector<8x256xf32>
    %75 = tpu.matmul %72, %74, %cst_47 {dimension_numbers = #tpu.dot_dimension_numbers<[1], [0], [0], [1], [0, 0, 1, 1], [], []>} : vector<8x256xbf16>, vector<256x256xbf16>, vector<8x256xf32> -> vector<8x256xf32>
    %76 = arith.addf %71, %75 : vector<8x256xf32>
    %77 = vector.extract_strided_slice %47 {offsets = [48, 0], sizes = [8, 256], strides = [1, 1]} : vector<88x256xbf16> to vector<8x256xbf16>
    %c6 = arith.constant 6 : index
    %c0_48 = arith.constant 0 : index
    %c0_49 = arith.constant 0 : index
    %78 = vector.load %arg8[%c6, %c0_48, %c0_49] : memref<11x256x256xbf16, #tpu.memory_space<vmem>>, vector<1x256x256xbf16>
    %79 = vector.shape_cast %78 : vector<1x256x256xbf16> to vector<256x256xbf16>
    %cst_50 = arith.constant dense<0.000000e+00> : vector<8x256xf32>
    %80 = tpu.matmul %77, %79, %cst_50 {dimension_numbers = #tpu.dot_dimension_numbers<[1], [0], [0], [1], [0, 0, 1, 1], [], []>} : vector<8x256xbf16>, vector<256x256xbf16>, vector<8x256xf32> -> vector<8x256xf32>
    %81 = arith.addf %76, %80 : vector<8x256xf32>
    %82 = vector.extract_strided_slice %47 {offsets = [56, 0], sizes = [8, 256], strides = [1, 1]} : vector<88x256xbf16> to vector<8x256xbf16>
    %c7 = arith.constant 7 : index
    %c0_51 = arith.constant 0 : index
    %c0_52 = arith.constant 0 : index
    %83 = vector.load %arg8[%c7, %c0_51, %c0_52] : memref<11x256x256xbf16, #tpu.memory_space<vmem>>, vector<1x256x256xbf16>
    %84 = vector.shape_cast %83 : vector<1x256x256xbf16> to vector<256x256xbf16>
    %cst_53 = arith.constant dense<0.000000e+00> : vector<8x256xf32>
    %85 = tpu.matmul %82, %84, %cst_53 {dimension_numbers = #tpu.dot_dimension_numbers<[1], [0], [0], [1], [0, 0, 1, 1], [], []>} : vector<8x256xbf16>, vector<256x256xbf16>, vector<8x256xf32> -> vector<8x256xf32>
    %86 = arith.addf %81, %85 : vector<8x256xf32>
    %87 = vector.extract_strided_slice %47 {offsets = [64, 0], sizes = [8, 256], strides = [1, 1]} : vector<88x256xbf16> to vector<8x256xbf16>
    %c8 = arith.constant 8 : index
    %c0_54 = arith.constant 0 : index
    %c0_55 = arith.constant 0 : index
    %88 = vector.load %arg8[%c8, %c0_54, %c0_55] : memref<11x256x256xbf16, #tpu.memory_space<vmem>>, vector<1x256x256xbf16>
    %89 = vector.shape_cast %88 : vector<1x256x256xbf16> to vector<256x256xbf16>
    %cst_56 = arith.constant dense<0.000000e+00> : vector<8x256xf32>
    %90 = tpu.matmul %87, %89, %cst_56 {dimension_numbers = #tpu.dot_dimension_numbers<[1], [0], [0], [1], [0, 0, 1, 1], [], []>} : vector<8x256xbf16>, vector<256x256xbf16>, vector<8x256xf32> -> vector<8x256xf32>
    %91 = arith.addf %86, %90 : vector<8x256xf32>
    %92 = vector.extract_strided_slice %47 {offsets = [72, 0], sizes = [8, 256], strides = [1, 1]} : vector<88x256xbf16> to vector<8x256xbf16>
    %c9 = arith.constant 9 : index
    %c0_57 = arith.constant 0 : index
    %c0_58 = arith.constant 0 : index
    %93 = vector.load %arg8[%c9, %c0_57, %c0_58] : memref<11x256x256xbf16, #tpu.memory_space<vmem>>, vector<1x256x256xbf16>
    %94 = vector.shape_cast %93 : vector<1x256x256xbf16> to vector<256x256xbf16>
    %cst_59 = arith.constant dense<0.000000e+00> : vector<8x256xf32>
    %95 = tpu.matmul %92, %94, %cst_59 {dimension_numbers = #tpu.dot_dimension_numbers<[1], [0], [0], [1], [0, 0, 1, 1], [], []>} : vector<8x256xbf16>, vector<256x256xbf16>, vector<8x256xf32> -> vector<8x256xf32>
    %96 = arith.addf %91, %95 : vector<8x256xf32>
    %97 = vector.extract_strided_slice %47 {offsets = [80, 0], sizes = [8, 256], strides = [1, 1]} : vector<88x256xbf16> to vector<8x256xbf16>
    %c10 = arith.constant 10 : index
    %c0_60 = arith.constant 0 : index
    %c0_61 = arith.constant 0 : index
    %98 = vector.load %arg8[%c10, %c0_60, %c0_61] : memref<11x256x256xbf16, #tpu.memory_space<vmem>>, vector<1x256x256xbf16>
    %99 = vector.shape_cast %98 : vector<1x256x256xbf16> to vector<256x256xbf16>
    %cst_62 = arith.constant dense<0.000000e+00> : vector<8x256xf32>
    %100 = tpu.matmul %97, %99, %cst_62 {dimension_numbers = #tpu.dot_dimension_numbers<[1], [0], [0], [1], [0, 0, 1, 1], [], []>} : vector<8x256xbf16>, vector<256x256xbf16>, vector<8x256xf32> -> vector<8x256xf32>
    %101 = arith.addf %96, %100 : vector<8x256xf32>
    %c0_63 = arith.constant 0 : index
    %c0_64 = arith.constant 0 : index
    %102 = vector.load %arg9[%c0_63, %c0_64] : memref<1x256xf32, #tpu.memory_space<vmem>>, vector<1x256xf32>
    %103 = vector.broadcast %102 : vector<1x256xf32> to vector<8x256xf32>
    %104 = arith.addf %101, %103 : vector<8x256xf32>
    %c0_65 = arith.constant 0 : index
    %c0_66 = arith.constant 0 : index
    %105 = vector.load %arg10[%c0_65, %c0_66] : memref<8x256xf32, #tpu.memory_space<vmem>>, vector<8x256xf32>
    tpu.vector_store %arg10[%c0_65, %c0_66], %104 {strides = array<i32>} : memref<8x256xf32, #tpu.memory_space<vmem>>, vector<8x256xf32>,
    return
  }
  func.func @transform_0(%arg0: i32) -> (i32, i32) {
    %c0_i32 = arith.constant 0 : i32
    %c0_i32_0 = arith.constant 0 : i32
    return %arg0, %c0_i32 : i32, i32
  }
  func.func @transform_1(%arg0: i32) -> (i32, i32) {
    %c0_i32 = arith.constant 0 : i32
    %c0_i32_0 = arith.constant 0 : i32
    %c0_i32_1 = arith.constant 0 : i32
    return %c0_i32, %c0_i32_0 : i32, i32
  }
  func.func @transform_2(%arg0: i32) -> (i32, i32) {
    %c0_i32 = arith.constant 0 : i32
    %c0_i32_0 = arith.constant 0 : i32
    %c0_i32_1 = arith.constant 0 : i32
    return %c0_i32, %c0_i32_0 : i32, i32
  }
  func.func @transform_3(%arg0: i32) -> (i32, i32, i32) {
    %c0_i32 = arith.constant 0 : i32
    %c0_i32_0 = arith.constant 0 : i32
    %c0_i32_1 = arith.constant 0 : i32
    %c0_i32_2 = arith.constant 0 : i32
    return %c0_i32, %c0_i32_0, %c0_i32_1 : i32, i32, i32
  }
  func.func @transform_4(%arg0: i32) -> (i32, i32) {
    %c0_i32 = arith.constant 0 : i32
    %c0_i32_0 = arith.constant 0 : i32
    %c0_i32_1 = arith.constant 0 : i32
    return %c0_i32, %c0_i32_0 : i32, i32
  }
  func.func @transform_5(%arg0: i32) -> (i32, i32) {
    %c0_i32 = arith.constant 0 : i32
    %c0_i32_0 = arith.constant 0 : i32
    %c0_i32_1 = arith.constant 0 : i32
    return %c0_i32, %c0_i32_0 : i32, i32
  }
  func.func @transform_6(%arg0: i32) -> (i32, i32) {
    %c0_i32 = arith.constant 0 : i32
    %c0_i32_0 = arith.constant 0 : i32
    %c0_i32_1 = arith.constant 0 : i32
    return %c0_i32, %c0_i32_0 : i32, i32
  }
  func.func @transform_7(%arg0: i32) -> (i32, i32, i32) {
    %c0_i32 = arith.constant 0 : i32
    %c0_i32_0 = arith.constant 0 : i32
    %c0_i32_1 = arith.constant 0 : i32
    %c0_i32_2 = arith.constant 0 : i32
    return %c0_i32, %c0_i32_0, %c0_i32_1 : i32, i32, i32
  }
  func.func @transform_8(%arg0: i32) -> (i32, i32) {
    %c0_i32 = arith.constant 0 : i32
    %c0_i32_0 = arith.constant 0 : i32
    %c0_i32_1 = arith.constant 0 : i32
    return %c0_i32, %c0_i32_0 : i32, i32
  }
  func.func @transform_9(%arg0: i32) -> (i32, i32) {
    %c0_i32 = arith.constant 0 : i32
    %c0_i32_0 = arith.constant 0 : i32
    return %arg0, %c0_i32 : i32, i32
  }
}

</mosaic_0001>

<llo_original>
// kernel: tpu_custom_call.1
$region0: #{tpu_custom_call.1}
  #allocation0 [shape = 'u32[]', space=smem, size = 0x4, offset = 0x4, fixed_abs, tag = 'smem constant byte address 0x4 - core index']
  #allocation1 [shape = 'u32[144,128]{1,0:T(1,128)}', space=vmem, size = 0x12000, scoped, tag = 'internal scratch']
  %s0 = inlined_call_operand.vmem [shape: bf16[176,18], index: 0, kind: input, shape index: {}]
  %s1 = inlined_call_operand.hbm [shape: bf16[18,64], index: 1, kind: input, shape index: {}]
  %s2 = inlined_call_operand.hbm [shape: f32[1,64], index: 2, kind: input, shape index: {}]
  %s3 = inlined_call_operand.hbm [shape: bf16[3,64,128], index: 3, kind: input, shape index: {}]
  %s4 = inlined_call_operand.hbm [shape: f32[1,128], index: 4, kind: input, shape index: {}]
  %s5 = inlined_call_operand.hbm [shape: bf16[384,256], index: 5, kind: input, shape index: {}]
  %s6 = inlined_call_operand.hbm [shape: f32[1,256], index: 6, kind: input, shape index: {}]
  %s7 = inlined_call_operand.hbm [shape: bf16[11,256,256], index: 7, kind: input, shape index: {}]
  %s8 = inlined_call_operand.hbm [shape: f32[1,256], index: 8, kind: input, shape index: {}]
  %s9 = inlined_call_operand.hbm [shape: f32[16,256], index: 9, kind: output, shape index: {}]
  %s10 = sld [smem:[#allocation0]]
  $region101: #{tpu_custom_call.1} parent=0
    _
  %s12 = ssub.s32 1, %s10
  %s13 = scalar_select 0, %s12, %s10
  $region1: #{tpu_custom_call.1} parent=0
    #allocation2 [shape = 'u8[6144]{0}', space=vmem, size = 0x1800, scoped, tag = 'input window, operand 1, single buffered']
    #allocation3 [shape = 's32[2]{0}', space=sflag, size = 0x8, scoped, tag = 'scoped memory for tpu_custom_call.1']
    #allocation4 [shape = 's32[2]{0}', space=sflag, size = 0x8, scoped, tag = 'scoped memory for tpu_custom_call.1']
    #allocation5 [shape = 'u8[512]{0}', space=vmem, size = 0x400, scoped, tag = 'input window, operand 2, single buffered']
    #allocation6 [shape = 's32[1]{0}', space=sflag, size = 0x4, scoped, tag = 'scoped memory for tpu_custom_call.1']
    #allocation7 [shape = 'u8[49152]{0}', space=vmem, size = 0xc000, scoped, tag = 'input window, operand 3, single buffered']
    #allocation8 [shape = 'u8[512]{0}', space=vmem, size = 0x400, scoped, tag = 'input window, operand 4, single buffered']
    #allocation9 [shape = 's32[1]{0}', space=sflag, size = 0x4, scoped, tag = 'scoped memory for tpu_custom_call.1']
    #allocation10 [shape = 'u8[196608]{0}', space=vmem, size = 0x30000, scoped, tag = 'input window, operand 5, single buffered']
    #allocation11 [shape = 'u8[1024]{0}', space=vmem, size = 0x400, scoped, tag = 'input window, operand 6, single buffered']
    #allocation12 [shape = 's32[1]{0}', space=sflag, size = 0x4, scoped, tag = 'scoped memory for tpu_custom_call.1']
    #allocation13 [shape = 'u8[1441792]{0}', space=vmem, size = 0x160000, scoped, tag = 'input window, operand 7, single buffered']
    #allocation14 [shape = 'u8[1024]{0}', space=vmem, size = 0x400, scoped, tag = 'input window, operand 8, single buffered']
    #allocation15 [shape = 's32[1]{0}', space=sflag, size = 0x4, scoped, tag = 'scoped memory for tpu_custom_call.1']
    #allocation16 [shape = 'u8[16384]{0}', space=vmem, size = 0x4000, scoped, tag = 'output window, operand 0']
    %14 = vsyncpa [#allocation3], 0
    %15 = vsyncpa [#allocation6], 0
    %16 = vsyncpa [#allocation9], 0
    %17 = vsyncpa [#allocation12], 0
    %18 = vsyncpa [#allocation15], 0
    %19 = vsyncpa [#allocation4], 0
    %s20 = scalar_lea.sflag [#allocation4], 1
    %21 = vsyncpa %s20, 0
    loop: start=0, step=1, limit=4
    $region2: #{tpu_custom_call.1} parent=1 // loop_pre_header
      _
    $region3: #{tpu_custom_call.1} parent=1 // loop_header
      %s23 = sphi 0, %s27
      %p24 = scmp.ge.s32.totalorder %s23, 4
      %s33 = sphi 0, %s35
      %s36 = sphi 0, %s33
      %s37 = sphi 0, %s36
      %s53 = sphi 0, %s37
      %s57 = sphi 0, %s57
      %s59 = sphi 0, %s57
      %s60 = sphi 0, %s59
      %s74 = sphi 0, %s60
      %s78 = sphi 0, %s78
      %s80 = sphi 0, %s78
      %s81 = sphi 0, %s80
      %s95 = sphi 0, %s81
      %s99 = sphi 0, %s99
      %s101 = sphi 0, %s99
      %s102 = sphi 0, %s101
      %s116 = sphi 0, %s102
      %s120 = sphi 0, %s120
      %s122 = sphi 0, %s120
      %s123 = sphi 0, %s122
      %s137 = sphi 0, %s123
      %s141 = sphi 0, %s141
      %s143 = sphi 0, %s141
      %s144 = sphi 0, %s143
      %s158 = sphi 0, %s144
      %s162 = sphi 0, %s162
      %s164 = sphi 0, %s162
      %s165 = sphi 0, %s164
      %s179 = sphi 0, %s165
      %s183 = sphi 0, %s183
      %s185 = sphi 0, %s183
      %s186 = sphi 0, %s185
      %s200 = sphi 0, %s186
      %s204 = sphi 0, %s204
      %s206 = sphi 0, %s204
      %s207 = sphi 0, %s206
      %s221 = sphi 0, %s207
      %s227 = sphi 0, %s229
      %s230 = sphi 0, %s227
      %s231 = sphi 0, %s230
      %s247 = sphi 0, %s231
    $region4: #{tpu_custom_call.1} parent=1 // loop_header_branch
      %26 = sbr.rel (%p24) target = $region8
    $region5: #{tpu_custom_call.1} parent=1 // loop_body
      %s28 = ssub.s32 %s23, 1
      %s29 = ssub.s32 %s23, 2
      %s30 = sadd.s32 %s23, 1
      %s31 = ssub.s32 %s23, %s30
      %p32 = scmp.eq.s32.totalorder %s31, 0
      %s34 = sadd.s32 %s33, 1
      %s35 = scalar_select %p32, %s33, %s34
      %p38 = pneg %p32
      %p39 = scmp.eq.s32.totalorder %s23, 1
      %p40 = por %p38, %p39
      %p41 = scmp.ne.s32.totalorder %s33, %s36
      %p42 = scmp.eq.s32.totalorder %s23, 0
      %p43 = por %p41, %p42
      %p44 = scmp.ne.s32.totalorder %s33, %s36
      %p45 = scmp.eq.s32.totalorder %s28, 1
      %p46 = por %p44, %p45
      %p47 = scmp.ne.s32.totalorder %s36, %s37
      %p48 = scmp.eq.s32.totalorder %s28, 0
      %p49 = por %p47, %p48
      %p50 = scmp.ne.s32.totalorder %s36, %s37
      %p51 = scmp.eq.s32.totalorder %s29, 1
      %p52 = por %p50, %p51
      %p54 = scmp.ne.s32.totalorder %s37, %s53
      %p55 = scmp.eq.s32.totalorder %s29, 0
      %p56 = por %p54, %p55
      %s58 = sadd.s32 %s57, 1
      %p61 = scmp.eq.s32.totalorder %s23, 1
      %p62 = scmp.ne.s32.totalorder %s57, %s59
      %p63 = scmp.eq.s32.totalorder %s23, 0
      %p64 = por %p62, %p63
      %p65 = scmp.ne.s32.totalorder %s57, %s59
      %p66 = scmp.eq.s32.totalorder %s28, 1
      %p67 = por %p65, %p66
      %p68 = scmp.ne.s32.totalorder %s59, %s60
      %p69 = scmp.eq.s32.totalorder %s28, 0
      %p70 = por %p68, %p69
      %p71 = scmp.ne.s32.totalorder %s59, %s60
      %p72 = scmp.eq.s32.totalorder %s29, 1
      %p73 = por %p71, %p72
      %p75 = scmp.ne.s32.totalorder %s60, %s74
      %p76 = scmp.eq.s32.totalorder %s29, 0
      %p77 = por %p75, %p76
      %s79 = sadd.s32 %s78, 1
      %p82 = scmp.eq.s32.totalorder %s23, 1
      %p83 = scmp.ne.s32.totalorder %s78, %s80
      %p84 = scmp.eq.s32.totalorder %s23, 0
      %p85 = por %p83, %p84
      %p86 = scmp.ne.s32.totalorder %s78, %s80
      %p87 = scmp.eq.s32.totalorder %s28, 1
      %p88 = por %p86, %p87
      %p89 = scmp.ne.s32.totalorder %s80, %s81
      %p90 = scmp.eq.s32.totalorder %s28, 0
      %p91 = por %p89, %p90
      %p92 = scmp.ne.s32.totalorder %s80, %s81
      %p93 = scmp.eq.s32.totalorder %s29, 1
      %p94 = por %p92, %p93
      %p96 = scmp.ne.s32.totalorder %s81, %s95
      %p97 = scmp.eq.s32.totalorder %s29, 0
      %p98 = por %p96, %p97
      %s100 = sadd.s32 %s99, 1
      %p103 = scmp.eq.s32.totalorder %s23, 1
      %p104 = scmp.ne.s32.totalorder %s99, %s101
      %p105 = scmp.eq.s32.totalorder %s23, 0
      %p106 = por %p104, %p105
      %p107 = scmp.ne.s32.totalorder %s99, %s101
      %p108 = scmp.eq.s32.totalorder %s28, 1
      %p109 = por %p107, %p108
      %p110 = scmp.ne.s32.totalorder %s101, %s102
      %p111 = scmp.eq.s32.totalorder %s28, 0
      %p112 = por %p110, %p111
      %p113 = scmp.ne.s32.totalorder %s101, %s102
      %p114 = scmp.eq.s32.totalorder %s29, 1
      %p115 = por %p113, %p114
      %p117 = scmp.ne.s32.totalorder %s102, %s116
      %p118 = scmp.eq.s32.totalorder %s29, 0
      %p119 = por %p117, %p118
      %s121 = sadd.s32 %s120, 1
      %p124 = scmp.eq.s32.totalorder %s23, 1
      %p125 = scmp.ne.s32.totalorder %s120, %s122
      %p126 = scmp.eq.s32.totalorder %s23, 0
      %p127 = por %p125, %p126
      %p128 = scmp.ne.s32.totalorder %s120, %s122
      %p129 = scmp.eq.s32.totalorder %s28, 1
      %p130 = por %p128, %p129
      %p131 = scmp.ne.s32.totalorder %s122, %s123
      %p132 = scmp.eq.s32.totalorder %s28, 0
      %p133 = por %p131, %p132
      %p134 = scmp.ne.s32.totalorder %s122, %s123
      %p135 = scmp.eq.s32.totalorder %s29, 1
      %p136 = por %p134, %p135
      %p138 = scmp.ne.s32.totalorder %s123, %s137
      %p139 = scmp.eq.s32.totalorder %s29, 0
      %p140 = por %p138, %p139
      %s142 = sadd.s32 %s141, 1
      %p145 = scmp.eq.s32.totalorder %s23, 1
      %p146 = scmp.ne.s32.totalorder %s141, %s143
      %p147 = scmp.eq.s32.totalorder %s23, 0
      %p148 = por %p146, %p147
      %p149 = scmp.ne.s32.totalorder %s141, %s143
      %p150 = scmp.eq.s32.totalorder %s28, 1
      %p151 = por %p149, %p150
      %p152 = scmp.ne.s32.totalorder %s143, %s144
      %p153 = scmp.eq.s32.totalorder %s28, 0
      %p154 = por %p152, %p153
      %p155 = scmp.ne.s32.totalorder %s143, %s144
      %p156 = scmp.eq.s32.totalorder %s29, 1
      %p157 = por %p155, %p156
      %p159 = scmp.ne.s32.totalorder %s144, %s158
      %p160 = scmp.eq.s32.totalorder %s29, 0
      %p161 = por %p159, %p160
      %s163 = sadd.s32 %s162, 1
      %p166 = scmp.eq.s32.totalorder %s23, 1
      %p167 = scmp.ne.s32.totalorder %s162, %s164
      %p168 = scmp.eq.s32.totalorder %s23, 0
      %p169 = por %p167, %p168
      %p170 = scmp.ne.s32.totalorder %s162, %s164
      %p171 = scmp.eq.s32.totalorder %s28, 1
      %p172 = por %p170, %p171
      %p173 = scmp.ne.s32.totalorder %s164, %s165
      %p174 = scmp.eq.s32.totalorder %s28, 0
      %p175 = por %p173, %p174
      %p176 = scmp.ne.s32.totalorder %s164, %s165
      %p177 = scmp.eq.s32.totalorder %s29, 1
      %p178 = por %p176, %p177
      %p180 = scmp.ne.s32.totalorder %s165, %s179
      %p181 = scmp.eq.s32.totalorder %s29, 0
      %p182 = por %p180, %p181
      %s184 = sadd.s32 %s183, 1
      %p187 = scmp.eq.s32.totalorder %s23, 1
      %p188 = scmp.ne.s32.totalorder %s183, %s185
      %p189 = scmp.eq.s32.totalorder %s23, 0
      %p190 = por %p188, %p189
      %p191 = scmp.ne.s32.totalorder %s183, %s185
      %p192 = scmp.eq.s32.totalorder %s28, 1
      %p193 = por %p191, %p192
      %p194 = scmp.ne.s32.totalorder %s185, %s186
      %p195 = scmp.eq.s32.totalorder %s28, 0
      %p196 = por %p194, %p195
      %p197 = scmp.ne.s32.totalorder %s185, %s186
      %p198 = scmp.eq.s32.totalorder %s29, 1
      %p199 = por %p197, %p198
      %p201 = scmp.ne.s32.totalorder %s186, %s200
      %p202 = scmp.eq.s32.totalorder %s29, 0
      %p203 = por %p201, %p202
      %s205 = sadd.s32 %s204, 1
      %p208 = scmp.eq.s32.totalorder %s23, 1
      %p209 = scmp.ne.s32.totalorder %s204, %s206
      %p210 = scmp.eq.s32.totalorder %s23, 0
      %p211 = por %p209, %p210
      %p212 = scmp.ne.s32.totalorder %s204, %s206
      %p213 = scmp.eq.s32.totalorder %s28, 1
      %p214 = por %p212, %p213
      %p215 = scmp.ne.s32.totalorder %s206, %s207
      %p216 = scmp.eq.s32.totalorder %s28, 0
      %p217 = por %p215, %p216
      %p218 = scmp.ne.s32.totalorder %s206, %s207
      %p219 = scmp.eq.s32.totalorder %s29, 1
      %p220 = por %p218, %p219
      %p222 = scmp.ne.s32.totalorder %s207, %s221
      %p223 = scmp.eq.s32.totalorder %s29, 0
      %p224 = por %p222, %p223
      %s225 = ssub.s32 %s23, %s30
      %p226 = scmp.eq.s32.totalorder %s225, 0
      %s228 = sadd.s32 %s227, 1
      %s229 = scalar_select %p226, %s227, %s228
      %p232 = pneg %p226
      %p233 = scmp.eq.s32.totalorder %s23, 1
      %p234 = por %p232, %p233
      %p235 = scmp.ne.s32.totalorder %s227, %s230
      %p236 = scmp.eq.s32.totalorder %s23, 0
      %p237 = por %p235, %p236
      %p238 = scmp.ne.s32.totalorder %s227, %s230
      %p239 = scmp.eq.s32.totalorder %s28, 1
      %p240 = por %p238, %p239
      %p241 = scmp.ne.s32.totalorder %s230, %s231
      %p242 = scmp.eq.s32.totalorder %s28, 0
      %p243 = por %p241, %p242
      %p244 = scmp.ne.s32.totalorder %s230, %s231
      %p245 = scmp.eq.s32.totalorder %s29, 1
      %p246 = por %p244, %p245
      %p248 = scmp.ne.s32.totalorder %s231, %s247
      %p249 = scmp.eq.s32.totalorder %s29, 0
      %p250 = por %p248, %p249
      %p251 = scmp.le.s32.totalorder 1, %s23
      %p252 = scmp.lt.s32.totalorder %s23, 3
      %p253 = pnand %p251, %p252
      %p254 = pneg %p253
      // Predicated region
      $region9: #{tpu_custom_call.1} parent=5 // pred_check
        _
      $region10: #{tpu_custom_call.1} parent=5 // pred_check_branch
        %256 = sbr.rel (%p253) target = $region12
      $region11: #{tpu_custom_call.1} parent=5 // pred_region
        %s257 = ssub.s32 %s23, 1
        // Predicated region
        $region13: #{tpu_custom_call.1} parent=11 // pred_check
          %p258 = pneg %p70
        $region14: #{tpu_custom_call.1} parent=11 // pred_check_branch
          %260 = sbr.rel (%p258) target = $region16
        $region15: #{tpu_custom_call.1} parent=11 // pred_region
          %s262 = ssub.s32 192, 192
          %263 = vsyncadd [#allocation3], %s262
          %s264 = sshll.u32 [#allocation2], 4
          %s265 = int_to_ptr.vmem [resolvable:$true] %s264
          %270 = dma.hbm_to_vmem [thread:$0]  %s1, 192, %s265, [#allocation3], 64, 64, 4
        $region16: #{tpu_custom_call.1} parent=11 // pred_fallthru
          _
        // Predicated region
        $region17: #{tpu_custom_call.1} parent=11 // pred_check
          %p271 = pneg %p91
        $region18: #{tpu_custom_call.1} parent=11 // pred_check_branch
          %273 = sbr.rel (%p271) target = $region20
        $region19: #{tpu_custom_call.1} parent=11 // pred_region
          %s275 = ssub.s32 16, 16
          %276 = vsyncadd [#allocation6], %s275
          %s278 = sshll.u32 [#allocation5], 4
          %s279 = int_to_ptr.vmem [resolvable:$true] %s278
          %281 = dma.hbm_to_vmem [thread:$0]  %s2, 16, %s279, [#allocation6]
        $region20: #{tpu_custom_call.1} parent=11 // pred_fallthru
          _
        // Predicated region
        $region21: #{tpu_custom_call.1} parent=11 // pred_check
          %p282 = pneg %p112
        $region22: #{tpu_custom_call.1} parent=11 // pred_check_branch
          %284 = sbr.rel (%p282) target = $region24
        $region23: #{tpu_custom_call.1} parent=11 // pred_region
          %s286 = ssub.s32 1536, 1536
          %287 = vsyncadd [#allocation6], %s286
          %s288 = sshll.u32 [#allocation7], 4
          %s289 = int_to_ptr.vmem [resolvable:$true] %s288
          %294 = dma.hbm_to_vmem [thread:$0]  %s3, 1536, %s289, [#allocation6], 64, 64, 4
        $region24: #{tpu_custom_call.1} parent=11 // pred_fallthru
          _
        // Predicated region
        $region25: #{tpu_custom_call.1} parent=11 // pred_check
          %p295 = pneg %p133
        $region26: #{tpu_custom_call.1} parent=11 // pred_check_branch
          %297 = sbr.rel (%p295) target = $region28
        $region27: #{tpu_custom_call.1} parent=11 // pred_region
          %s299 = ssub.s32 16, 16
          %300 = vsyncadd [#allocation9], %s299
          %s302 = sshll.u32 [#allocation8], 4
          %s303 = int_to_ptr.vmem [resolvable:$true] %s302
          %305 = dma.hbm_to_vmem [thread:$0]  %s4, 16, %s303, [#allocation9]
        $region28: #{tpu_custom_call.1} parent=11 // pred_fallthru
          _
        // Predicated region
        $region29: #{tpu_custom_call.1} parent=11 // pred_check
          %p306 = pneg %p154
        $region30: #{tpu_custom_call.1} parent=11 // pred_check_branch
          %308 = sbr.rel (%p306) target = $region32
        $region31: #{tpu_custom_call.1} parent=11 // pred_region
          %s310 = ssub.s32 6144, 6144
          %311 = vsyncadd [#allocation9], %s310
          %s312 = sshll.u32 [#allocation10], 4
          %s313 = int_to_ptr.vmem [resolvable:$true] %s312
          %318 = dma.hbm_to_vmem [thread:$0]  %s5, 6144, %s313, [#allocation9], 128, 128, 8
        $region32: #{tpu_custom_call.1} parent=11 // pred_fallthru
          _
        // Predicated region
        $region33: #{tpu_custom_call.1} parent=11 // pred_check
          %p319 = pneg %p175
        $region34: #{tpu_custom_call.1} parent=11 // pred_check_branch
          %321 = sbr.rel (%p319) target = $region36
        $region35: #{tpu_custom_call.1} parent=11 // pred_region
          %s323 = ssub.s32 32, 32
          %324 = vsyncadd [#allocation12], %s323
          %s326 = sshll.u32 [#allocation11], 4
          %s327 = int_to_ptr.vmem [resolvable:$true] %s326
          %329 = dma.hbm_to_vmem [thread:$0]  %s6, 32, %s327, [#allocation12]
        $region36: #{tpu_custom_call.1} parent=11 // pred_fallthru
          _
        // Predicated region
        $region37: #{tpu_custom_call.1} parent=11 // pred_check
          %p330 = pneg %p196
        $region38: #{tpu_custom_call.1} parent=11 // pred_check_branch
          %332 = sbr.rel (%p330) target = $region40
        $region39: #{tpu_custom_call.1} parent=11 // pred_region
          %s334 = ssub.s32 45056, 45056
          %335 = vsyncadd [#allocation12], %s334
          %s336 = sshll.u32 [#allocation13], 4
          %s337 = int_to_ptr.vmem [resolvable:$true] %s336
          %342 = dma.hbm_to_vmem [thread:$0]  %s7, 45056, %s337, [#allocation12], 128, 128, 8
        $region40: #{tpu_custom_call.1} parent=11 // pred_fallthru
          _
        // Predicated region
        $region41: #{tpu_custom_call.1} parent=11 // pred_check
          %p343 = pneg %p217
        $region42: #{tpu_custom_call.1} parent=11 // pred_check_branch
          %345 = sbr.rel (%p343) target = $region44
        $region43: #{tpu_custom_call.1} parent=11 // pred_region
          %s347 = ssub.s32 32, 32
          %348 = vsyncadd [#allocation15], %s347
          %s350 = sshll.u32 [#allocation14], 4
          %s351 = int_to_ptr.vmem [resolvable:$true] %s350
          %353 = dma.hbm_to_vmem [thread:$0]  %s8, 32, %s351, [#allocation15]
        $region44: #{tpu_custom_call.1} parent=11 // pred_fallthru
          _
      $region12: #{tpu_custom_call.1} parent=5 // pred_fallthru
        _
      %p354 = scmp.lt.s32.totalorder %s23, 2
      // Predicated region
      $region45: #{tpu_custom_call.1} parent=5 // pred_check
        %p355 = pneg %p354
      $region46: #{tpu_custom_call.1} parent=5 // pred_check_branch
        %357 = sbr.rel (%p355) target = $region48
      $region47: #{tpu_custom_call.1} parent=5 // pred_region
        // Predicated region
        $region49: #{tpu_custom_call.1} parent=47 // pred_check
          %p358 = pneg %p43
        $region50: #{tpu_custom_call.1} parent=47 // pred_check_branch
          %360 = sbr.rel (%p358) target = $region52
        $region51: #{tpu_custom_call.1} parent=47 // pred_region
          %s361 = smul.u32 11, %s23
          %p362 = scmp.lt.s32.totalorder %s361, 21
          %s363 = scalar_select %p362, %s361, 21
          %s364 = smul.addr %s363, 4
          %s365 = scalar_lea.vmem %s0, %s364
          %s366 = smul.u32 11, %s23
        $region52: #{tpu_custom_call.1} parent=47 // pred_fallthru
          _
      $region48: #{tpu_custom_call.1} parent=5 // pred_fallthru
        _
      %p367 = scmp.le.s32.totalorder 1, %s23
      %p368 = scmp.lt.s32.totalorder %s23, 3
      %p369 = pnand %p367, %p368
      %p370 = pneg %p369
      // Predicated region
      $region53: #{tpu_custom_call.1} parent=5 // pred_check
        _
      $region54: #{tpu_custom_call.1} parent=5 // pred_check_branch
        %372 = sbr.rel (%p369) target = $region56
      $region55: #{tpu_custom_call.1} parent=5 // pred_region
        %s373 = ssub.s32 %s23, 1
        // Predicated region
        $region57: #{tpu_custom_call.1} parent=55 // pred_check
          %p374 = pneg %p70
        $region58: #{tpu_custom_call.1} parent=55 // pred_check_branch
          %376 = sbr.rel (%p374) target = $region60
        $region59: #{tpu_custom_call.1} parent=55 // pred_region
          %377 = dma.done [#allocation3], 192
        $region60: #{tpu_custom_call.1} parent=55 // pred_fallthru
          _
        // Predicated region
        $region61: #{tpu_custom_call.1} parent=55 // pred_check
          %p378 = pneg %p91
        $region62: #{tpu_custom_call.1} parent=55 // pred_check_branch
          %380 = sbr.rel (%p378) target = $region64
        $region63: #{tpu_custom_call.1} parent=55 // pred_region
          %381 = dma.done [#allocation6], 16
        $region64: #{tpu_custom_call.1} parent=55 // pred_fallthru
          _
        // Predicated region
        $region65: #{tpu_custom_call.1} parent=55 // pred_check
          %p382 = pneg %p112
        $region66: #{tpu_custom_call.1} parent=55 // pred_check_branch
          %384 = sbr.rel (%p382) target = $region68
        $region67: #{tpu_custom_call.1} parent=55 // pred_region
          %385 = dma.done [#allocation6], 1536
        $region68: #{tpu_custom_call.1} parent=55 // pred_fallthru
          _
        // Predicated region
        $region69: #{tpu_custom_call.1} parent=55 // pred_check
          %p386 = pneg %p133
        $region70: #{tpu_custom_call.1} parent=55 // pred_check_branch
          %388 = sbr.rel (%p386) target = $region72
        $region71: #{tpu_custom_call.1} parent=55 // pred_region
          %389 = dma.done [#allocation9], 16
        $region72: #{tpu_custom_call.1} parent=55 // pred_fallthru
          _
        // Predicated region
        $region73: #{tpu_custom_call.1} parent=55 // pred_check
          %p390 = pneg %p154
        $region74: #{tpu_custom_call.1} parent=55 // pred_check_branch
          %392 = sbr.rel (%p390) target = $region76
        $region75: #{tpu_custom_call.1} parent=55 // pred_region
          %393 = dma.done [#allocation9], 6144
        $region76: #{tpu_custom_call.1} parent=55 // pred_fallthru
          _
        // Predicated region
        $region77: #{tpu_custom_call.1} parent=55 // pred_check
          %p394 = pneg %p175
        $region78: #{tpu_custom_call.1} parent=55 // pred_check_branch
          %396 = sbr.rel (%p394) target = $region80
        $region79: #{tpu_custom_call.1} parent=55 // pred_region
          %397 = dma.done [#allocation12], 32
        $region80: #{tpu_custom_call.1} parent=55 // pred_fallthru
          _
        // Predicated region
        $region81: #{tpu_custom_call.1} parent=55 // pred_check
          %p398 = pneg %p196
        $region82: #{tpu_custom_call.1} parent=55 // pred_check_branch
          %400 = sbr.rel (%p398) target = $region84
        $region83: #{tpu_custom_call.1} parent=55 // pred_region
          %401 = dma.done [#allocation12], 45056
        $region84: #{tpu_custom_call.1} parent=55 // pred_fallthru
          _
        // Predicated region
        $region85: #{tpu_custom_call.1} parent=55 // pred_check
          %p402 = pneg %p217
        $region86: #{tpu_custom_call.1} parent=55 // pred_check_branch
          %404 = sbr.rel (%p402) target = $region88
        $region87: #{tpu_custom_call.1} parent=55 // pred_region
          %405 = dma.done [#allocation15], 32
        $region88: #{tpu_custom_call.1} parent=55 // pred_fallthru
          _
        %s406 = smul.u32 11, %s28
        %p407 = scmp.lt.s32.totalorder %s406, 21
        %s408 = scalar_select %p407, %s406, 21
        %s409 = smul.addr %s408, 4
        %s410 = scalar_lea.vmem %s0, %s409
        %p411 = pneg %p49
        %p412 = pneg %p46
        %p413 = pneg %p70
        %p414 = pneg %p67
        %p415 = pneg %p91
        %p416 = pneg %p88
        %p417 = pneg %p112
        %p418 = pneg %p109
        %p419 = pneg %p133
        %p420 = pneg %p130
        %p421 = pneg %p154
        %p422 = pneg %p151
        %p423 = pneg %p175
        %p424 = pneg %p172
        %p425 = pneg %p196
        %p426 = pneg %p193
        %p427 = pneg %p217
        %p428 = pneg %p214
        %p429 = pneg %p243
        %p430 = pneg %p240
        %s431 = sand.u32 %s230, 1
        %s432 = scalar_lea.sflag [#allocation4], %s431
        %s433 = sand.u32 %s230, 1
        %s434 = smul.addr %s433, 16
        %s435 = scalar_lea.vmem [#allocation16], %s434
        %s436 = smul.u32 11, %s28
        %p437 = scmp.lt.s32.totalorder %s436, 21
        %s438 = scalar_select %p437, %s436, 21
        %s439 = smul.addr %s438, 4
        %s440 = scalar_lea.vmem %s0, %s439
        %s441 = smul.u32 11, %s28
        %v443 = vld [vmem:[%s440] sm:$0xf]
        %v444 = vld [vmem:[%s440 + $0x4] sm:$0xf]
        %v445 = vld [vmem:[%s440 + $0x8] sm:$0xf]
        %v446 = vld [vmem:[%s440 + $0xc] sm:$0xf]
        %v447 = vld [vmem:[%s440 + $0x10] sm:$0xf]
        %v448 = vld [vmem:[%s440 + $0x14] sm:$0xf]
        %v449 = vld [vmem:[%s440 + $0x18] sm:$0xf]
        %v450 = vld [vmem:[%s440 + $0x1c] sm:$0xf]
        %v451 = vld [vmem:[%s440 + $0x20] sm:$0xf]
        %v452 = vld [vmem:[%s440 + $0x24] sm:$0xf]
        %v453 = vld [vmem:[%s440 + $0x28] sm:$0xf]
        %v454 = vld [vmem:[#allocation2] sm:$0xf]
        %v455 = vld [vmem:[#allocation2 + $0x4] sm:$0xf]
        %v456 = vld [vmem:[#allocation2 + $0x8] sm:$0x1]
        %v457 = vld [vmem:[#allocation5] sm:$0x1]
        %v459 = vlaneseq
        %v460 = vshrl.u32 %v459, 7
        %v461 = vsub.s32 0, %v460
        %v462 = vrot.slane %v457, %v461
        %v475 = vunpack.c.l.b16 %v443
        %v476 = vunpack.c.l.b16 %v444
        %v477 = vunpack.c.l.b16 %v445
        %v478 = vunpack.c.l.b16 %v446
        %v479 = vunpack.c.l.b16 %v447
        %v480 = vunpack.c.l.b16 %v448
        %v481 = vunpack.c.l.b16 %v449
        %v482 = vunpack.c.l.b16 %v450
        %v483 = vunpack.c.l.b16 %v451
        %v484 = vunpack.c.l.b16 %v452
        %v485 = vunpack.c.l.b16 %v453
        %v486 = vpack.c.b16 %v476, %v475
        %v487 = vpack.c.b16 %v478, %v477
        %v488 = vpack.c.b16 %v480, %v479
        %v489 = vpack.c.b16 %v482, %v481
        %v490 = vpack.c.b16 %v484, %v483
        %v491 = vpack.c.b16 %v485, %v485
        %v495 = vunpack.c.l.b16 %v454
        %v496 = vunpack.c.l.b16 %v455
        %v497 = vunpack.c.l.b16 %v456
        %v498 = vpack.c.b16 %v496, %v495
        %v499 = vpack.c.b16 %v497, %v497
        %vm501 = vcmask 146432
        %v503 = vsel %vm501, %v486, 0
        %v506 = vsel %vm501, %v487, 0
        %v509 = vsel %vm501, %v488, 0
        %v512 = vsel %vm501, %v489, 0
        %v515 = vsel %vm501, %v490, 0
        %v518 = vsel %vm501, %v491, 0
        %vm520 = vcmask 1040384
        %v522 = vsel %vm520, %v499, 0
        %524 = vmatprep.subr.bf16.mxu0 0
        %525 = vmatpush1.bf16.msra.mxu0 %v498
        %526 = vmatprep.subr.bf16.mxu0 0
        %527 = vmatpush1.bf16.msra.mxu0 %v522
        %528 = vmatprep.subr.bf16.mxu0 0
        %529 = vmatpush1.bf16.msra.mxu0 0
        %530 = vmatprep.subr.bf16.mxu0 0
        %531 = vmatpush1.bf16.msra.mxu0 0
        %532 = vmatprep.subr.bf16.mxu0 0
        %533 = vmatpush1.bf16.msra.mxu0 0
        %534 = vmatprep.subr.bf16.mxu0 0
        %535 = vmatpush1.bf16.msra.mxu0 0
        %536 = vmatprep.subr.bf16.mxu0 0
        %537 = vmatpush1.bf16.msra.mxu0 0
        %538 = vmatprep.subr.bf16.mxu0 0
        %539 = vmatpush1.bf16.msra.mxu0 0
        %540 = vmatprep.subr.bf16.mxu0 0
        %541 = vmatpush1.bf16.msra.mxu0 0
        %542 = vmatprep.subr.bf16.mxu0 0
        %543 = vmatpush1.bf16.msra.mxu0 0
        %544 = vmatprep.subr.bf16.mxu0 0
        %545 = vmatpush1.bf16.msra.mxu0 0
        %546 = vmatprep.subr.bf16.mxu0 0
        %547 = vmatpush1.bf16.msra.mxu0 0
        %548 = vmatprep.subr.bf16.mxu0 0
        %549 = vmatpush1.bf16.msra.mxu0 0
        %550 = vmatprep.subr.bf16.mxu0 0
        %551 = vmatpush1.bf16.msra.mxu0 0
        %552 = vmatprep.subr.bf16.mxu0 0
        %553 = vmatpush1.bf16.msra.mxu0 0
        %554 = vmatprep.subr.bf16.mxu0 0
        %555 = vmatpush1.bf16.msra.mxu0 0
        %556 = vmatprep.mubr.bf16.mxu0 0
        %557 = vmatmul.mubr.bf16.gmra.mrb[0].mxu0 %v503
        %v558 = vpop.f32.mrb[0].mxu0
        %v559 = vadd.f32 %v462, %v558
        %v560 = vpop.f32.mrb[0].mxu0
        %v561 = vpop.f32.mrb[0].mxu0
        %v562 = vadd.f32 %v462, %v561
        %v563 = vpop.f32.mrb[0].mxu0
        %564 = vmatprep.mubr.bf16.mxu0 0
        %565 = vmatmul.mubr.bf16.gmra.mrb[0].mxu0 %v506
        %v566 = vpop.f32.mrb[0].mxu0
        %v567 = vadd.f32 %v462, %v566
        %v568 = vpop.f32.mrb[0].mxu0
        %v569 = vpop.f32.mrb[0].mxu0
        %v570 = vadd.f32 %v462, %v569
        %v571 = vpop.f32.mrb[0].mxu0
        %572 = vmatprep.mubr.bf16.mxu0 0
        %573 = vmatmul.mubr.bf16.gmra.mrb[0].mxu0 %v509
        %v574 = vpop.f32.mrb[0].mxu0
        %v575 = vadd.f32 %v462, %v574
        %v576 = vpop.f32.mrb[0].mxu0
        %v577 = vpop.f32.mrb[0].mxu0
        %v578 = vadd.f32 %v462, %v577
        %v579 = vpop.f32.mrb[0].mxu0
        %580 = vmatprep.mubr.bf16.mxu0 0
        %581 = vmatmul.mubr.bf16.gmra.mrb[0].mxu0 %v512
        %v582 = vpop.f32.mrb[0].mxu0
        %v583 = vadd.f32 %v462, %v582
        %v584 = vpop.f32.mrb[0].mxu0
        %v585 = vpop.f32.mrb[0].mxu0
        %v586 = vadd.f32 %v462, %v585
        %v587 = vpop.f32.mrb[0].mxu0
        %588 = vmatprep.mubr.bf16.mxu0 0
        %589 = vmatmul.mubr.bf16.gmra.mrb[0].mxu0 %v515
        %v590 = vpop.f32.mrb[0].mxu0
        %v591 = vadd.f32 %v462, %v590
        %v592 = vpop.f32.mrb[0].mxu0
        %v593 = vpop.f32.mrb[0].mxu0
        %v594 = vadd.f32 %v462, %v593
        %v595 = vpop.f32.mrb[0].mxu0
        %596 = vmatprep.mubr.bf16.mxu0 0
        %597 = vmatmul.mubr.bf16.gmra.mrb[0].mxu0 %v518
        %v598 = vpop.f32.mrb[0].mxu0
        %v599 = vadd.f32 %v462, %v598
        %v600 = vpop.f32.mrb[0].mxu0
        %v601 = vpop.f32.mrb[0].mxu0
        %v602 = vpop.f32.mrb[0].mxu0
        %603 = vdwg.mxu0
        %v604 = vmul.f32 %v559, 0.1
        %v605 = vmul.f32 %v562, 0.1
        %v606 = vmul.f32 %v567, 0.1
        %v607 = vmul.f32 %v570, 0.1
        %v608 = vmul.f32 %v575, 0.1
        %v609 = vmul.f32 %v578, 0.1
        %v610 = vmul.f32 %v583, 0.1
        %v611 = vmul.f32 %v586, 0.1
        %v612 = vmul.f32 %v591, 0.1
        %v613 = vmul.f32 %v594, 0.1
        %v614 = vmul.f32 %v599, 0.1
        %v615 = vmax.f32 %v559, %v604
        %v616 = vmax.f32 %v562, %v605
        %v617 = vmax.f32 %v567, %v606
        %v618 = vmax.f32 %v570, %v607
        %v619 = vmax.f32 %v575, %v608
        %v620 = vmax.f32 %v578, %v609
        %v621 = vmax.f32 %v583, %v610
        %v622 = vmax.f32 %v586, %v611
        %v623 = vmax.f32 %v591, %v612
        %v624 = vmax.f32 %v594, %v613
        %v625 = vmax.f32 %v599, %v614
        %v626 = vpack.c.bf16 %v616, %v615
        %v627 = vpack.c.bf16 %v618, %v617
        %v628 = vpack.c.bf16 %v620, %v619
        %v629 = vpack.c.bf16 %v622, %v621
        %v630 = vpack.c.bf16 %v624, %v623
        %v631 = vpack.c.bf16 %v625, %v625
        %vm637 = vcmask 1043456
        %v638 = vrot.slane %v626, 4
        %v639 = vrot.slane %v627, 4
        %v640 = vsel %vm637, %v638, %v639
        %v641 = vrot.slane %v628, 4
        %v642 = vsel %vm637, %v639, %v641
        %v643 = vrot.slane %v629, 4
        %v644 = vsel %vm637, %v641, %v643
        %v645 = vrot.slane %v630, 4
        %v646 = vsel %vm637, %v643, %v645
        %vm647 = vcmask 1043456
        %v650 = vsel %vm647, 0, %v638
        %v652 = vrot.slane %v631, 4
        %v653 = vsel %vm637, %v645, %v652
        %v654 = vld [vmem:[#allocation7] sm:$0xf]
        %v655 = vld [vmem:[#allocation7 + $0x4] sm:$0xf]
        %v656 = vld [vmem:[#allocation7 + $0x8] sm:$0xf]
        %v657 = vld [vmem:[#allocation7 + $0xc] sm:$0xf]
        %v658 = vld [vmem:[#allocation7 + $0x10] sm:$0xf]
        %v659 = vld [vmem:[#allocation7 + $0x14] sm:$0xf]
        %v660 = vld [vmem:[#allocation7 + $0x18] sm:$0xf]
        %v661 = vld [vmem:[#allocation7 + $0x1c] sm:$0xf]
        %s662 = scalar_lea.vmem [#allocation7], 32
        %v663 = vld [vmem:[%s662] sm:$0xf]
        %v664 = vld [vmem:[%s662 + $0x4] sm:$0xf]
        %v665 = vld [vmem:[%s662 + $0x8] sm:$0xf]
        %v666 = vld [vmem:[%s662 + $0xc] sm:$0xf]
        %v667 = vld [vmem:[%s662 + $0x10] sm:$0xf]
        %v668 = vld [vmem:[%s662 + $0x14] sm:$0xf]
        %v669 = vld [vmem:[%s662 + $0x18] sm:$0xf]
        %v670 = vld [vmem:[%s662 + $0x1c] sm:$0xf]
        %v679 = vunpack.c.l.b16 %v663
        %v680 = vunpack.c.l.b16 %v664
        %v681 = vunpack.c.l.b16 %v665
        %v682 = vunpack.c.l.b16 %v666
        %v683 = vunpack.c.l.b16 %v667
        %v684 = vunpack.c.l.b16 %v668
        %v685 = vunpack.c.l.b16 %v669
        %v686 = vunpack.c.l.b16 %v670
        %v687 = vpack.c.b16 %v680, %v679
        %v688 = vpack.c.b16 %v682, %v681
        %v689 = vpack.c.b16 %v684, %v683
        %v690 = vpack.c.b16 %v686, %v685
        %vm695 = vcmask 523264
        %v697 = vsel %vm695, %v626, 0
        %v700 = vsel %vm695, %v627, 0
        %v703 = vsel %vm695, %v628, 0
        %v706 = vsel %vm695, %v629, 0
        %v709 = vsel %vm695, %v630, 0
        %v712 = vsel %vm695, %v631, 0
        %714 = vmatprep.subr.bf16.mxu0 0
        %715 = vmatpush1.bf16.msra.mxu0 %v687
        %716 = vmatprep.subr.bf16.mxu0 0
        %717 = vmatpush1.bf16.msra.mxu0 %v688
        %718 = vmatprep.subr.bf16.mxu0 0
        %719 = vmatpush1.bf16.msra.mxu0 %v689
        %720 = vmatprep.subr.bf16.mxu0 0
        %721 = vmatpush1.bf16.msra.mxu0 %v690
        %722 = vmatprep.subr.bf16.mxu0 0
        %723 = vmatpush1.bf16.msra.mxu0 0
        %724 = vmatprep.subr.bf16.mxu0 0
        %725 = vmatpush1.bf16.msra.mxu0 0
        %726 = vmatprep.subr.bf16.mxu0 0
        %727 = vmatpush1.bf16.msra.mxu0 0
        %728 = vmatprep.subr.bf16.mxu0 0
        %729 = vmatpush1.bf16.msra.mxu0 0
        %730 = vmatprep.subr.bf16.mxu0 0
        %731 = vmatpush1.bf16.msra.mxu0 0
        %732 = vmatprep.subr.bf16.mxu0 0
        %733 = vmatpush1.bf16.msra.mxu0 0
        %734 = vmatprep.subr.bf16.mxu0 0
        %735 = vmatpush1.bf16.msra.mxu0 0
        %736 = vmatprep.subr.bf16.mxu0 0
        %737 = vmatpush1.bf16.msra.mxu0 0
        %738 = vmatprep.subr.bf16.mxu0 0
        %739 = vmatpush1.bf16.msra.mxu0 0
        %740 = vmatprep.subr.bf16.mxu0 0
        %741 = vmatpush1.bf16.msra.mxu0 0
        %742 = vmatprep.subr.bf16.mxu0 0
        %743 = vmatpush1.bf16.msra.mxu0 0
        %744 = vmatprep.subr.bf16.mxu0 0
        %745 = vmatpush1.bf16.msra.mxu0 0
        %746 = vmatprep.mubr.bf16.mxu0 0
        %747 = vmatmul.mubr.bf16.gmra.mrb[0].mxu0 %v697
        %v748 = vpop.f32.mrb[0].mxu0
        %v749 = vadd.f32 0.0, %v748
        %v750 = vpop.f32.mrb[0].mxu0
        %v751 = vpop.f32.mrb[0].mxu0
        %v752 = vadd.f32 0.0, %v751
        %v753 = vpop.f32.mrb[0].mxu0
        %754 = vmatprep.mubr.bf16.mxu0 0
        %755 = vmatmul.mubr.bf16.gmra.mrb[0].mxu0 %v700
        %v756 = vpop.f32.mrb[0].mxu0
        %v757 = vadd.f32 0.0, %v756
        %v758 = vpop.f32.mrb[0].mxu0
        %v759 = vpop.f32.mrb[0].mxu0
        %v760 = vadd.f32 0.0, %v759
        %v761 = vpop.f32.mrb[0].mxu0
        %762 = vmatprep.mubr.bf16.mxu0 0
        %763 = vmatmul.mubr.bf16.gmra.mrb[0].mxu0 %v703
        %v764 = vpop.f32.mrb[0].mxu0
        %v765 = vadd.f32 0.0, %v764
        %v766 = vpop.f32.mrb[0].mxu0
        %v767 = vpop.f32.mrb[0].mxu0
        %v768 = vadd.f32 0.0, %v767
        %v769 = vpop.f32.mrb[0].mxu0
        %770 = vmatprep.mubr.bf16.mxu0 0
        %771 = vmatmul.mubr.bf16.gmra.mrb[0].mxu0 %v706
        %v772 = vpop.f32.mrb[0].mxu0
        %v773 = vadd.f32 0.0, %v772
        %v774 = vpop.f32.mrb[0].mxu0
        %v775 = vpop.f32.mrb[0].mxu0
        %v776 = vadd.f32 0.0, %v775
        %v777 = vpop.f32.mrb[0].mxu0
        %778 = vmatprep.mubr.bf16.mxu0 0
        %779 = vmatmul.mubr.bf16.gmra.mrb[0].mxu0 %v709
        %v780 = vpop.f32.mrb[0].mxu0
        %v781 = vadd.f32 0.0, %v780
        %v782 = vpop.f32.mrb[0].mxu0
        %v783 = vpop.f32.mrb[0].mxu0
        %v784 = vadd.f32 0.0, %v783
        %v785 = vpop.f32.mrb[0].mxu0
        %786 = vmatprep.mubr.bf16.mxu0 0
        %787 = vmatmul.mubr.bf16.gmra.mrb[0].mxu0 %v712
        %v788 = vpop.f32.mrb[0].mxu0
        %v789 = vadd.f32 0.0, %v788
        %v790 = vpop.f32.mrb[0].mxu0
        %v791 = vpop.f32.mrb[0].mxu0
        %v792 = vpop.f32.mrb[0].mxu0
        %793 = vdwg.mxu0
        %v802 = vunpack.c.l.b16 %v654
        %v803 = vunpack.c.l.b16 %v655
        %v804 = vunpack.c.l.b16 %v656
        %v805 = vunpack.c.l.b16 %v657
        %v806 = vunpack.c.l.b16 %v658
        %v807 = vunpack.c.l.b16 %v659
        %v808 = vunpack.c.l.b16 %v660
        %v809 = vunpack.c.l.b16 %v661
        %v810 = vpack.c.b16 %v803, %v802
        %v811 = vpack.c.b16 %v805, %v804
        %v812 = vpack.c.b16 %v807, %v806
        %v813 = vpack.c.b16 %v809, %v808
        %v818 = vsel %vm695, %v650, 0
        %v821 = vsel %vm695, %v640, 0
        %v824 = vsel %vm695, %v642, 0
        %v827 = vsel %vm695, %v644, 0
        %v830 = vsel %vm695, %v646, 0
        %v833 = vsel %vm695, %v645, 0
        %835 = vmatprep.subr.bf16.mxu0 0
        %836 = vmatpush1.bf16.msra.mxu0 %v810
        %837 = vmatprep.subr.bf16.mxu0 0
        %838 = vmatpush1.bf16.msra.mxu0 %v811
        %839 = vmatprep.subr.bf16.mxu0 0
        %840 = vmatpush1.bf16.msra.mxu0 %v812
        %841 = vmatprep.subr.bf16.mxu0 0
        %842 = vmatpush1.bf16.msra.mxu0 %v813
        %843 = vmatprep.subr.bf16.mxu0 0
        %844 = vmatpush1.bf16.msra.mxu0 0
        %845 = vmatprep.subr.bf16.mxu0 0
        %846 = vmatpush1.bf16.msra.mxu0 0
        %847 = vmatprep.subr.bf16.mxu0 0
        %848 = vmatpush1.bf16.msra.mxu0 0
        %849 = vmatprep.subr.bf16.mxu0 0
        %850 = vmatpush1.bf16.msra.mxu0 0
        %851 = vmatprep.subr.bf16.mxu0 0
        %852 = vmatpush1.bf16.msra.mxu0 0
        %853 = vmatprep.subr.bf16.mxu0 0
        %854 = vmatpush1.bf16.msra.mxu0 0
        %855 = vmatprep.subr.bf16.mxu0 0
        %856 = vmatpush1.bf16.msra.mxu0 0
        %857 = vmatprep.subr.bf16.mxu0 0
        %858 = vmatpush1.bf16.msra.mxu0 0
        %859 = vmatprep.subr.bf16.mxu0 0
        %860 = vmatpush1.bf16.msra.mxu0 0
        %861 = vmatprep.subr.bf16.mxu0 0
        %862 = vmatpush1.bf16.msra.mxu0 0
        %863 = vmatprep.subr.bf16.mxu0 0
        %864 = vmatpush1.bf16.msra.mxu0 0
        %865 = vmatprep.subr.bf16.mxu0 0
        %866 = vmatpush1.bf16.msra.mxu0 0
        %867 = vmatprep.mubr.bf16.mxu0 0
        %868 = vmatmul.mubr.bf16.gmra.mrb[0].mxu0 %v818
        %v869 = vpop.f32.mrb[0].mxu0
        %v870 = vadd.f32 %v749, %v869
        %v871 = vpop.f32.mrb[0].mxu0
        %v872 = vpop.f32.mrb[0].mxu0
        %v873 = vadd.f32 %v752, %v872
        %v874 = vpop.f32.mrb[0].mxu0
        %875 = vmatprep.mubr.bf16.mxu0 0
        %876 = vmatmul.mubr.bf16.gmra.mrb[0].mxu0 %v821
        %v877 = vpop.f32.mrb[0].mxu0
        %v878 = vadd.f32 %v757, %v877
        %v879 = vpop.f32.mrb[0].mxu0
        %v880 = vpop.f32.mrb[0].mxu0
        %v881 = vadd.f32 %v760, %v880
        %v882 = vpop.f32.mrb[0].mxu0
        %883 = vmatprep.mubr.bf16.mxu0 0
        %884 = vmatmul.mubr.bf16.gmra.mrb[0].mxu0 %v824
        %v885 = vpop.f32.mrb[0].mxu0
        %v886 = vadd.f32 %v765, %v885
        %v887 = vpop.f32.mrb[0].mxu0
        %v888 = vpop.f32.mrb[0].mxu0
        %v889 = vadd.f32 %v768, %v888
        %v890 = vpop.f32.mrb[0].mxu0
        %891 = vmatprep.mubr.bf16.mxu0 0
        %892 = vmatmul.mubr.bf16.gmra.mrb[0].mxu0 %v827
        %v893 = vpop.f32.mrb[0].mxu0
        %v894 = vadd.f32 %v773, %v893
        %v895 = vpop.f32.mrb[0].mxu0
        %v896 = vpop.f32.mrb[0].mxu0
        %v897 = vadd.f32 %v776, %v896
        %v898 = vpop.f32.mrb[0].mxu0
        %899 = vmatprep.mubr.bf16.mxu0 0
        %900 = vmatmul.mubr.bf16.gmra.mrb[0].mxu0 %v830
        %v901 = vpop.f32.mrb[0].mxu0
        %v902 = vadd.f32 %v781, %v901
        %v903 = vpop.f32.mrb[0].mxu0
        %v904 = vpop.f32.mrb[0].mxu0
        %v905 = vadd.f32 %v784, %v904
        %v906 = vpop.f32.mrb[0].mxu0
        %907 = vmatprep.mubr.bf16.mxu0 0
        %908 = vmatmul.mubr.bf16.gmra.mrb[0].mxu0 %v833
        %v909 = vpop.f32.mrb[0].mxu0
        %v910 = vadd.f32 %v789, %v909
        %v911 = vpop.f32.mrb[0].mxu0
        %v912 = vpop.f32.mrb[0].mxu0
        %v913 = vpop.f32.mrb[0].mxu0
        %914 = vdwg.mxu0
        %s915 = scalar_lea.vmem [#allocation7], 64
        %v916 = vld [vmem:[%s915] sm:$0xf]
        %v917 = vld [vmem:[%s915 + $0x4] sm:$0xf]
        %v918 = vld [vmem:[%s915 + $0x8] sm:$0xf]
        %v919 = vld [vmem:[%s915 + $0xc] sm:$0xf]
        %v920 = vld [vmem:[%s915 + $0x10] sm:$0xf]
        %v921 = vld [vmem:[%s915 + $0x14] sm:$0xf]
        %v922 = vld [vmem:[%s915 + $0x18] sm:$0xf]
        %v923 = vld [vmem:[%s915 + $0x1c] sm:$0xf]
        %v932 = vunpack.c.l.b16 %v916
        %v933 = vunpack.c.l.b16 %v917
        %v934 = vunpack.c.l.b16 %v918
        %v935 = vunpack.c.l.b16 %v919
        %v936 = vunpack.c.l.b16 %v920
        %v937 = vunpack.c.l.b16 %v921
        %v938 = vunpack.c.l.b16 %v922
        %v939 = vunpack.c.l.b16 %v923
        %v940 = vpack.c.b16 %v933, %v932
        %v941 = vpack.c.b16 %v935, %v934
        %v942 = vpack.c.b16 %v937, %v936
        %v943 = vpack.c.b16 %v939, %v938
        %v949 = vsel %vm695, %v653, 0
        %v951 = vsel %vm695, 0, 0
        %953 = vmatprep.subr.bf16.mxu0 0
        %954 = vmatpush1.bf16.msra.mxu0 %v940
        %955 = vmatprep.subr.bf16.mxu0 0
        %956 = vmatpush1.bf16.msra.mxu0 %v941
        %957 = vmatprep.subr.bf16.mxu0 0
        %958 = vmatpush1.bf16.msra.mxu0 %v942
        %959 = vmatprep.subr.bf16.mxu0 0
        %960 = vmatpush1.bf16.msra.mxu0 %v943
        %961 = vmatprep.subr.bf16.mxu0 0
        %962 = vmatpush1.bf16.msra.mxu0 0
        %963 = vmatprep.subr.bf16.mxu0 0
        %964 = vmatpush1.bf16.msra.mxu0 0
        %965 = vmatprep.subr.bf16.mxu0 0
        %966 = vmatpush1.bf16.msra.mxu0 0
        %967 = vmatprep.subr.bf16.mxu0 0
        %968 = vmatpush1.bf16.msra.mxu0 0
        %969 = vmatprep.subr.bf16.mxu0 0
        %970 = vmatpush1.bf16.msra.mxu0 0
        %971 = vmatprep.subr.bf16.mxu0 0
        %972 = vmatpush1.bf16.msra.mxu0 0
        %973 = vmatprep.subr.bf16.mxu0 0
        %974 = vmatpush1.bf16.msra.mxu0 0
        %975 = vmatprep.subr.bf16.mxu0 0
        %976 = vmatpush1.bf16.msra.mxu0 0
        %977 = vmatprep.subr.bf16.mxu0 0
        %978 = vmatpush1.bf16.msra.mxu0 0
        %979 = vmatprep.subr.bf16.mxu0 0
        %980 = vmatpush1.bf16.msra.mxu0 0
        %981 = vmatprep.subr.bf16.mxu0 0
        %982 = vmatpush1.bf16.msra.mxu0 0
        %983 = vmatprep.subr.bf16.mxu0 0
        %984 = vmatpush1.bf16.msra.mxu0 0
        %985 = vmatprep.mubr.bf16.mxu0 0
        %986 = vmatmul.mubr.bf16.gmra.mrb[0].mxu0 %v821
        %v987 = vpop.f32.mrb[0].mxu0
        %v988 = vadd.f32 0.0, %v987
        %v989 = vpop.f32.mrb[0].mxu0
        %v990 = vpop.f32.mrb[0].mxu0
        %v991 = vadd.f32 0.0, %v990
        %v992 = vpop.f32.mrb[0].mxu0
        %993 = vmatprep.mubr.bf16.mxu0 0
        %994 = vmatmul.mubr.bf16.gmra.mrb[0].mxu0 %v824
        %v995 = vpop.f32.mrb[0].mxu0
        %v996 = vadd.f32 0.0, %v995
        %v997 = vpop.f32.mrb[0].mxu0
        %v998 = vpop.f32.mrb[0].mxu0
        %v999 = vadd.f32 0.0, %v998
        %v1000 = vpop.f32.mrb[0].mxu0
        %1001 = vmatprep.mubr.bf16.mxu0 0
        %1002 = vmatmul.mubr.bf16.gmra.mrb[0].mxu0 %v827
        %v1003 = vpop.f32.mrb[0].mxu0
        %v1004 = vadd.f32 0.0, %v1003
        %v1005 = vpop.f32.mrb[0].mxu0
        %v1006 = vpop.f32.mrb[0].mxu0
        %v1007 = vadd.f32 0.0, %v1006
        %v1008 = vpop.f32.mrb[0].mxu0
        %1009 = vmatprep.mubr.bf16.mxu0 0
        %1010 = vmatmul.mubr.bf16.gmra.mrb[0].mxu0 %v830
        %v1011 = vpop.f32.mrb[0].mxu0
        %v1012 = vadd.f32 0.0, %v1011
        %v1013 = vpop.f32.mrb[0].mxu0
        %v1014 = vpop.f32.mrb[0].mxu0
        %v1015 = vadd.f32 0.0, %v1014
        %v1016 = vpop.f32.mrb[0].mxu0
        %1017 = vmatprep.mubr.bf16.mxu0 0
        %1018 = vmatmul.mubr.bf16.gmra.mrb[0].mxu0 %v949
        %v1019 = vpop.f32.mrb[0].mxu0
        %v1020 = vadd.f32 0.0, %v1019
        %v1021 = vpop.f32.mrb[0].mxu0
        %v1022 = vpop.f32.mrb[0].mxu0
        %v1023 = vadd.f32 0.0, %v1022
        %v1024 = vpop.f32.mrb[0].mxu0
        %1025 = vmatprep.mubr.bf16.mxu0 0
        %1026 = vmatmul.mubr.bf16.gmra.mrb[0].mxu0 %v951
        %v1027 = vpop.f32.mrb[0].mxu0
        %v1028 = vadd.f32 0.0, %v1027
        %v1029 = vpop.f32.mrb[0].mxu0
        %v1030 = vpop.f32.mrb[0].mxu0
        %v1031 = vpop.f32.mrb[0].mxu0
        %1032 = vdwg.mxu0
        %v1033 = vadd.f32 %v870, %v988
        %v1034 = vadd.f32 %v873, %v991
        %v1035 = vadd.f32 %v878, %v996
        %v1036 = vadd.f32 %v881, %v999
        %v1037 = vadd.f32 %v886, %v1004
        %v1038 = vadd.f32 %v889, %v1007
        %v1039 = vadd.f32 %v894, %v1012
        %v1040 = vadd.f32 %v897, %v1015
        %v1041 = vadd.f32 %v902, %v1020
        %v1042 = vadd.f32 %v905, %v1023
        %v1043 = vadd.f32 %v910, %v1028
        %v1044 = vld [vmem:[#allocation8] sm:$0x1]
        %v1046 = vlaneseq
        %v1047 = vshrl.u32 %v1046, 7
        %v1048 = vsub.s32 0, %v1047
        %v1049 = vrot.slane %v1044, %v1048
        %v1051 = vadd.f32 %v1033, %v1049
        %v1052 = vadd.f32 %v1034, %v1049
        %v1053 = vadd.f32 %v1035, %v1049
        %v1054 = vadd.f32 %v1036, %v1049
        %v1055 = vadd.f32 %v1037, %v1049
        %v1056 = vadd.f32 %v1038, %v1049
        %v1057 = vadd.f32 %v1039, %v1049
        %v1058 = vadd.f32 %v1040, %v1049
        %v1059 = vadd.f32 %v1041, %v1049
        %v1060 = vadd.f32 %v1042, %v1049
        %v1061 = vadd.f32 %v1043, %v1049
        %v1062 = vmul.f32 %v1051, 0.1
        %v1063 = vmul.f32 %v1052, 0.1
        %v1064 = vmul.f32 %v1053, 0.1
        %v1065 = vmul.f32 %v1054, 0.1
        %v1066 = vmul.f32 %v1055, 0.1
        %v1067 = vmul.f32 %v1056, 0.1
        %v1068 = vmul.f32 %v1057, 0.1
        %v1069 = vmul.f32 %v1058, 0.1
        %v1070 = vmul.f32 %v1059, 0.1
        %v1071 = vmul.f32 %v1060, 0.1
        %v1072 = vmul.f32 %v1061, 0.1
        %v1073 = vmax.f32 %v1051, %v1062
        %v1074 = vmax.f32 %v1052, %v1063
        %v1075 = vmax.f32 %v1053, %v1064
        %v1076 = vmax.f32 %v1054, %v1065
        %v1077 = vmax.f32 %v1055, %v1066
        %v1078 = vmax.f32 %v1056, %v1067
        %v1079 = vmax.f32 %v1057, %v1068
        %v1080 = vmax.f32 %v1058, %v1069
        %v1081 = vmax.f32 %v1059, %v1070
        %v1082 = vmax.f32 %v1060, %v1071
        %v1083 = vmax.f32 %v1061, %v1072
        %v1084 = vpack.c.bf16 %v1074, %v1073
        %v1085 = vpack.c.bf16 %v1076, %v1075
        %v1086 = vpack.c.bf16 %v1078, %v1077
        %v1087 = vpack.c.bf16 %v1080, %v1079
        %v1088 = vpack.c.bf16 %v1082, %v1081
        %v1089 = vpack.c.bf16 %v1083, %v1083
        %v1095 = vrot.slane %v1084, 4
        %v1096 = vrot.slane %v1085, 4
        %v1097 = vsel %vm637, %v1095, %v1096
        %v1098 = vrot.slane %v1086, 4
        %v1099 = vsel %vm637, %v1096, %v1098
        %v1100 = vrot.slane %v1087, 4
        %v1101 = vsel %vm637, %v1098, %v1100
        %v1102 = vrot.slane %v1088, 4
        %v1103 = vsel %vm637, %v1100, %v1102
        %v1110 = vsel %vm647, 0, %v1095
        %v1113 = vrot.slane %v1089, 4
        %v1114 = vsel %vm637, %v1102, %v1113
        %v1116 = vld [vmem:[#allocation10] sm:$0xff]
        %v1117 = vld [vmem:[#allocation10 + $0x8] sm:$0xff]
        %v1118 = vld [vmem:[#allocation10 + $0x10] sm:$0xff]
        %v1119 = vld [vmem:[#allocation10 + $0x18] sm:$0xff]
        %v1120 = vld [vmem:[#allocation10 + $0x20] sm:$0xff]
        %v1121 = vld [vmem:[#allocation10 + $0x28] sm:$0xff]
        %v1122 = vld [vmem:[#allocation10 + $0x30] sm:$0xff]
        %v1123 = vld [vmem:[#allocation10 + $0x38] sm:$0xff]
        %v1124 = vld [vmem:[#allocation10 + $0x40] sm:$0xff]
        %v1125 = vld [vmem:[#allocation10 + $0x48] sm:$0xff]
        %v1126 = vld [vmem:[#allocation10 + $0x50] sm:$0xff]
        %v1127 = vld [vmem:[#allocation10 + $0x58] sm:$0xff]
        %v1128 = vld [vmem:[#allocation10 + $0x60] sm:$0xff]
        %v1129 = vld [vmem:[#allocation10 + $0x68] sm:$0xff]
        %v1130 = vld [vmem:[#allocation10 + $0x70] sm:$0xff]
        %v1131 = vld [vmem:[#allocation10 + $0x78] sm:$0xff]
        %v1132 = vld [vmem:[#allocation10 + $0x80] sm:$0xff]
        %v1133 = vld [vmem:[#allocation10 + $0x88] sm:$0xff]
        %v1134 = vld [vmem:[#allocation10 + $0x90] sm:$0xff]
        %v1135 = vld [vmem:[#allocation10 + $0x98] sm:$0xff]
        %v1136 = vld [vmem:[#allocation10 + $0xa0] sm:$0xff]
        %v1137 = vld [vmem:[#allocation10 + $0xa8] sm:$0xff]
        %v1138 = vld [vmem:[#allocation10 + $0xb0] sm:$0xff]
        %v1139 = vld [vmem:[#allocation10 + $0xb8] sm:$0xff]
        %v1140 = vld [vmem:[#allocation10 + $0xc0] sm:$0xff]
        %v1141 = vld [vmem:[#allocation10 + $0xc8] sm:$0xff]
        %v1142 = vld [vmem:[#allocation10 + $0xd0] sm:$0xff]
        %v1143 = vld [vmem:[#allocation10 + $0xd8] sm:$0xff]
        %v1144 = vld [vmem:[#allocation10 + $0xe0] sm:$0xff]
        %v1145 = vld [vmem:[#allocation10 + $0xe8] sm:$0xff]
        %v1146 = vld [vmem:[#allocation10 + $0xf0] sm:$0xff]
        %v1147 = vld [vmem:[#allocation10 + $0xf8] sm:$0xff]
        %v1148 = vld [vmem:[#allocation10 + $0x100] sm:$0xff]
        %v1149 = vld [vmem:[#allocation10 + $0x108] sm:$0xff]
        %v1150 = vld [vmem:[#allocation10 + $0x110] sm:$0xff]
        %v1151 = vld [vmem:[#allocation10 + $0x118] sm:$0xff]
        %v1152 = vld [vmem:[#allocation10 + $0x120] sm:$0xff]
        %v1153 = vld [vmem:[#allocation10 + $0x128] sm:$0xff]
        %v1154 = vld [vmem:[#allocation10 + $0x130] sm:$0xff]
        %v1155 = vld [vmem:[#allocation10 + $0x138] sm:$0xff]
        %v1156 = vld [vmem:[#allocation10 + $0x140] sm:$0xff]
        %v1157 = vld [vmem:[#allocation10 + $0x148] sm:$0xff]
        %v1158 = vld [vmem:[#allocation10 + $0x150] sm:$0xff]
        %v1159 = vld [vmem:[#allocation10 + $0x158] sm:$0xff]
        %v1160 = vld [vmem:[#allocation10 + $0x160] sm:$0xff]
        %v1161 = vld [vmem:[#allocation10 + $0x168] sm:$0xff]
        %v1162 = vld [vmem:[#allocation10 + $0x170] sm:$0xff]
        %v1163 = vld [vmem:[#allocation10 + $0x178] sm:$0xff]
        %v1164 = vld [vmem:[#allocation11] sm:$0x3]
        %v1166 = vlaneseq
        %v1167 = vshrl.u32 %v1166, 7
        %v1168 = vsub.s32 0, %v1167
        %v1169 = vrot.slane %v1164, %v1168
        %v1170 = vlaneseq
        %v1171 = vshrl.u32 %v1170, 7
        %v1172 = vsub.s32 1, %v1171
        %v1173 = vrot.slane %v1164, %v1172
        %v1224 = vunpack.c.l.b16 %v1116
        %v1225 = vunpack.c.h.b16 %v1116
        %v1226 = vunpack.c.l.b16 %v1117
        %v1227 = vunpack.c.h.b16 %v1117
        %v1228 = vunpack.c.l.b16 %v1118
        %v1229 = vunpack.c.h.b16 %v1118
        %v1230 = vunpack.c.l.b16 %v1119
        %v1231 = vunpack.c.h.b16 %v1119
        %v1232 = vunpack.c.l.b16 %v1120
        %v1233 = vunpack.c.h.b16 %v1120
        %v1234 = vunpack.c.l.b16 %v1121
        %v1235 = vunpack.c.h.b16 %v1121
        %v1236 = vunpack.c.l.b16 %v1122
        %v1237 = vunpack.c.h.b16 %v1122
        %v1238 = vunpack.c.l.b16 %v1123
        %v1239 = vunpack.c.h.b16 %v1123
        %v1240 = vunpack.c.l.b16 %v1124
        %v1241 = vunpack.c.h.b16 %v1124
        %v1242 = vunpack.c.l.b16 %v1125
        %v1243 = vunpack.c.h.b16 %v1125
        %v1244 = vunpack.c.l.b16 %v1126
        %v1245 = vunpack.c.h.b16 %v1126
        %v1246 = vunpack.c.l.b16 %v1127
        %v1247 = vunpack.c.h.b16 %v1127
        %v1248 = vunpack.c.l.b16 %v1128
        %v1249 = vunpack.c.h.b16 %v1128
        %v1250 = vunpack.c.l.b16 %v1129
        %v1251 = vunpack.c.h.b16 %v1129
        %v1252 = vunpack.c.l.b16 %v1130
        %v1253 = vunpack.c.h.b16 %v1130
        %v1254 = vunpack.c.l.b16 %v1131
        %v1255 = vunpack.c.h.b16 %v1131
        %v1256 = vunpack.c.l.b16 %v1132
        %v1257 = vunpack.c.h.b16 %v1132
        %v1258 = vunpack.c.l.b16 %v1133
        %v1259 = vunpack.c.h.b16 %v1133
        %v1260 = vunpack.c.l.b16 %v1134
        %v1261 = vunpack.c.h.b16 %v1134
        %v1262 = vunpack.c.l.b16 %v1135
        %v1263 = vunpack.c.h.b16 %v1135
        %v1264 = vunpack.c.l.b16 %v1136
        %v1265 = vunpack.c.h.b16 %v1136
        %v1266 = vunpack.c.l.b16 %v1137
        %v1267 = vunpack.c.h.b16 %v1137
        %v1268 = vunpack.c.l.b16 %v1138
        %v1269 = vunpack.c.h.b16 %v1138
        %v1270 = vunpack.c.l.b16 %v1139
        %v1271 = vunpack.c.h.b16 %v1139
        %v1272 = vunpack.c.l.b16 %v1140
        %v1273 = vunpack.c.h.b16 %v1140
        %v1274 = vunpack.c.l.b16 %v1141
        %v1275 = vunpack.c.h.b16 %v1141
        %v1276 = vunpack.c.l.b16 %v1142
        %v1277 = vunpack.c.h.b16 %v1142
        %v1278 = vunpack.c.l.b16 %v1143
        %v1279 = vunpack.c.h.b16 %v1143
        %v1280 = vunpack.c.l.b16 %v1144
        %v1281 = vunpack.c.h.b16 %v1144
        %v1282 = vunpack.c.l.b16 %v1145
        %v1283 = vunpack.c.h.b16 %v1145
        %v1284 = vunpack.c.l.b16 %v1146
        %v1285 = vunpack.c.h.b16 %v1146
        %v1286 = vunpack.c.l.b16 %v1147
        %v1287 = vunpack.c.h.b16 %v1147
        %v1288 = vunpack.c.l.b16 %v1148
        %v1289 = vunpack.c.h.b16 %v1148
        %v1290 = vunpack.c.l.b16 %v1149
        %v1291 = vunpack.c.h.b16 %v1149
        %v1292 = vunpack.c.l.b16 %v1150
        %v1293 = vunpack.c.h.b16 %v1150
        %v1294 = vunpack.c.l.b16 %v1151
        %v1295 = vunpack.c.h.b16 %v1151
        %v1296 = vunpack.c.l.b16 %v1152
        %v1297 = vunpack.c.h.b16 %v1152
        %v1298 = vunpack.c.l.b16 %v1153
        %v1299 = vunpack.c.h.b16 %v1153
        %v1300 = vunpack.c.l.b16 %v1154
        %v1301 = vunpack.c.h.b16 %v1154
        %v1302 = vunpack.c.l.b16 %v1155
        %v1303 = vunpack.c.h.b16 %v1155
        %v1304 = vunpack.c.l.b16 %v1156
        %v1305 = vunpack.c.h.b16 %v1156
        %v1306 = vunpack.c.l.b16 %v1157
        %v1307 = vunpack.c.h.b16 %v1157
        %v1308 = vunpack.c.l.b16 %v1158
        %v1309 = vunpack.c.h.b16 %v1158
        %v1310 = vunpack.c.l.b16 %v1159
        %v1311 = vunpack.c.h.b16 %v1159
        %v1312 = vunpack.c.l.b16 %v1160
        %v1313 = vunpack.c.h.b16 %v1160
        %v1314 = vunpack.c.l.b16 %v1161
        %v1315 = vunpack.c.h.b16 %v1161
        %v1316 = vunpack.c.l.b16 %v1162
        %v1317 = vunpack.c.h.b16 %v1162
        %v1318 = vunpack.c.l.b16 %v1163
        %v1319 = vunpack.c.h.b16 %v1163
        %v1320 = vpack.c.b16 %v1226, %v1224
        %v1321 = vpack.c.b16 %v1227, %v1225
        %v1322 = vpack.c.b16 %v1230, %v1228
        %v1323 = vpack.c.b16 %v1231, %v1229
        %v1324 = vpack.c.b16 %v1234, %v1232
        %v1325 = vpack.c.b16 %v1235, %v1233
        %v1326 = vpack.c.b16 %v1238, %v1236
        %v1327 = vpack.c.b16 %v1239, %v1237
        %v1328 = vpack.c.b16 %v1242, %v1240
        %v1329 = vpack.c.b16 %v1243, %v1241
        %v1330 = vpack.c.b16 %v1246, %v1244
        %v1331 = vpack.c.b16 %v1247, %v1245
        %v1332 = vpack.c.b16 %v1250, %v1248
        %v1333 = vpack.c.b16 %v1251, %v1249
        %v1334 = vpack.c.b16 %v1254, %v1252
        %v1335 = vpack.c.b16 %v1255, %v1253
        %v1336 = vpack.c.b16 %v1258, %v1256
        %v1337 = vpack.c.b16 %v1259, %v1257
        %v1338 = vpack.c.b16 %v1262, %v1260
        %v1339 = vpack.c.b16 %v1263, %v1261
        %v1340 = vpack.c.b16 %v1266, %v1264
        %v1341 = vpack.c.b16 %v1267, %v1265
        %v1342 = vpack.c.b16 %v1270, %v1268
        %v1343 = vpack.c.b16 %v1271, %v1269
        %v1344 = vpack.c.b16 %v1274, %v1272
        %v1345 = vpack.c.b16 %v1275, %v1273
        %v1346 = vpack.c.b16 %v1278, %v1276
        %v1347 = vpack.c.b16 %v1279, %v1277
        %v1348 = vpack.c.b16 %v1282, %v1280
        %v1349 = vpack.c.b16 %v1283, %v1281
        %v1350 = vpack.c.b16 %v1286, %v1284
        %v1351 = vpack.c.b16 %v1287, %v1285
        %v1352 = vpack.c.b16 %v1290, %v1288
        %v1353 = vpack.c.b16 %v1291, %v1289
        %v1354 = vpack.c.b16 %v1294, %v1292
        %v1355 = vpack.c.b16 %v1295, %v1293
        %v1356 = vpack.c.b16 %v1298, %v1296
        %v1357 = vpack.c.b16 %v1299, %v1297
        %v1358 = vpack.c.b16 %v1302, %v1300
        %v1359 = vpack.c.b16 %v1303, %v1301
        %v1360 = vpack.c.b16 %v1306, %v1304
        %v1361 = vpack.c.b16 %v1307, %v1305
        %v1362 = vpack.c.b16 %v1310, %v1308
        %v1363 = vpack.c.b16 %v1311, %v1309
        %v1364 = vpack.c.b16 %v1314, %v1312
        %v1365 = vpack.c.b16 %v1315, %v1313
        %v1366 = vpack.c.b16 %v1318, %v1316
        %v1367 = vpack.c.b16 %v1319, %v1317
        %1416 = vmatprep.subr.bf16.mxu0 %v1321
        %1417 = vmatpush1.bf16.msra.mxu0 %v1320
        %1418 = vmatprep.subr.bf16.mxu0 %v1323
        %1419 = vmatpush1.bf16.msra.mxu0 %v1322
        %1420 = vmatprep.subr.bf16.mxu0 %v1325
        %1421 = vmatpush1.bf16.msra.mxu0 %v1324
        %1422 = vmatprep.subr.bf16.mxu0 %v1327
        %1423 = vmatpush1.bf16.msra.mxu0 %v1326
        %1424 = vmatprep.subr.bf16.mxu0 %v1329
        %1425 = vmatpush1.bf16.msra.mxu0 %v1328
        %1426 = vmatprep.subr.bf16.mxu0 %v1331
        %1427 = vmatpush1.bf16.msra.mxu0 %v1330
        %1428 = vmatprep.subr.bf16.mxu0 %v1333
        %1429 = vmatpush1.bf16.msra.mxu0 %v1332
        %1430 = vmatprep.subr.bf16.mxu0 %v1335
        %1431 = vmatpush1.bf16.msra.mxu0 %v1334
        %1432 = vmatprep.subr.bf16.mxu0 %v1337
        %1433 = vmatpush1.bf16.msra.mxu0 %v1336
        %1434 = vmatprep.subr.bf16.mxu0 %v1339
        %1435 = vmatpush1.bf16.msra.mxu0 %v1338
        %1436 = vmatprep.subr.bf16.mxu0 %v1341
        %1437 = vmatpush1.bf16.msra.mxu0 %v1340
        %1438 = vmatprep.subr.bf16.mxu0 %v1343
        %1439 = vmatpush1.bf16.msra.mxu0 %v1342
        %1440 = vmatprep.subr.bf16.mxu0 %v1345
        %1441 = vmatpush1.bf16.msra.mxu0 %v1344
        %1442 = vmatprep.subr.bf16.mxu0 %v1347
        %1443 = vmatpush1.bf16.msra.mxu0 %v1346
        %1444 = vmatprep.subr.bf16.mxu0 %v1349
        %1445 = vmatpush1.bf16.msra.mxu0 %v1348
        %1446 = vmatprep.subr.bf16.mxu0 %v1351
        %1447 = vmatpush1.bf16.msra.mxu0 %v1350
        %1448 = vmatprep.mubr.bf16.mxu0 %v1084
        %1449 = vmatmul.mubr.bf16.gmra.mrb[0].mxu0 %v1110
        %v1450 = vpop.f32.mrb[0].mxu0
        %v1451 = vadd.f32 %v1169, %v1450
        %v1452 = vpop.f32.mrb[0].mxu0
        %v1453 = vadd.f32 %v1173, %v1452
        %v1454 = vpop.f32.mrb[0].mxu0
        %v1455 = vadd.f32 %v1169, %v1454
        %v1456 = vpop.f32.mrb[0].mxu0
        %v1457 = vadd.f32 %v1173, %v1456
        %1458 = vmatprep.mubr.bf16.mxu0 %v1085
        %1459 = vmatmul.mubr.bf16.gmra.mrb[0].mxu0 %v1097
        %v1460 = vpop.f32.mrb[0].mxu0
        %v1461 = vadd.f32 %v1169, %v1460
        %v1462 = vpop.f32.mrb[0].mxu0
        %v1463 = vadd.f32 %v1173, %v1462
        %v1464 = vpop.f32.mrb[0].mxu0
        %v1465 = vadd.f32 %v1169, %v1464
        %v1466 = vpop.f32.mrb[0].mxu0
        %v1467 = vadd.f32 %v1173, %v1466
        %1468 = vmatprep.mubr.bf16.mxu0 %v1086
        %1469 = vmatmul.mubr.bf16.gmra.mrb[0].mxu0 %v1099
        %v1470 = vpop.f32.mrb[0].mxu0
        %v1471 = vadd.f32 %v1169, %v1470
        %v1472 = vpop.f32.mrb[0].mxu0
        %v1473 = vadd.f32 %v1173, %v1472
        %v1474 = vpop.f32.mrb[0].mxu0
        %v1475 = vadd.f32 %v1169, %v1474
        %v1476 = vpop.f32.mrb[0].mxu0
        %v1477 = vadd.f32 %v1173, %v1476
        %1478 = vmatprep.mubr.bf16.mxu0 %v1087
        %1479 = vmatmul.mubr.bf16.gmra.mrb[0].mxu0 %v1101
        %v1480 = vpop.f32.mrb[0].mxu0
        %v1481 = vadd.f32 %v1169, %v1480
        %v1482 = vpop.f32.mrb[0].mxu0
        %v1483 = vadd.f32 %v1173, %v1482
        %v1484 = vpop.f32.mrb[0].mxu0
        %v1485 = vadd.f32 %v1169, %v1484
        %v1486 = vpop.f32.mrb[0].mxu0
        %v1487 = vadd.f32 %v1173, %v1486
        %1488 = vmatprep.mubr.bf16.mxu0 %v1088
        %1489 = vmatmul.mubr.bf16.gmra.mrb[0].mxu0 %v1103
        %v1490 = vpop.f32.mrb[0].mxu0
        %v1491 = vadd.f32 %v1169, %v1490
        %v1492 = vpop.f32.mrb[0].mxu0
        %v1493 = vadd.f32 %v1173, %v1492
        %v1494 = vpop.f32.mrb[0].mxu0
        %v1495 = vadd.f32 %v1169, %v1494
        %v1496 = vpop.f32.mrb[0].mxu0
        %v1497 = vadd.f32 %v1173, %v1496
        %1498 = vmatprep.mubr.bf16.mxu0 %v1089
        %1499 = vmatmul.mubr.bf16.gmra.mrb[0].mxu0 %v1102
        %v1500 = vpop.f32.mrb[0].mxu0
        %v1501 = vadd.f32 %v1169, %v1500
        %v1502 = vpop.f32.mrb[0].mxu0
        %v1503 = vadd.f32 %v1173, %v1502
        %v1504 = vpop.f32.mrb[0].mxu0
        %v1505 = vpop.f32.mrb[0].mxu0
        %1506 = vdwg.mxu0
        %1507 = vmatprep.subr.bf16.mxu0 %v1353
        %1508 = vmatpush1.bf16.msra.mxu0 %v1352
        %1509 = vmatprep.subr.bf16.mxu0 %v1355
        %1510 = vmatpush1.bf16.msra.mxu0 %v1354
        %1511 = vmatprep.subr.bf16.mxu0 %v1357
        %1512 = vmatpush1.bf16.msra.mxu0 %v1356
        %1513 = vmatprep.subr.bf16.mxu0 %v1359
        %1514 = vmatpush1.bf16.msra.mxu0 %v1358
        %1515 = vmatprep.subr.bf16.mxu0 %v1361
        %1516 = vmatpush1.bf16.msra.mxu0 %v1360
        %1517 = vmatprep.subr.bf16.mxu0 %v1363
        %1518 = vmatpush1.bf16.msra.mxu0 %v1362
        %1519 = vmatprep.subr.bf16.mxu0 %v1365
        %1520 = vmatpush1.bf16.msra.mxu0 %v1364
        %1521 = vmatprep.subr.bf16.mxu0 %v1367
        %1522 = vmatpush1.bf16.msra.mxu0 %v1366
        %1523 = vmatprep.subr.bf16.mxu0 0
        %1524 = vmatpush1.bf16.msra.mxu0 0
        %1525 = vmatprep.subr.bf16.mxu0 0
        %1526 = vmatpush1.bf16.msra.mxu0 0
        %1527 = vmatprep.subr.bf16.mxu0 0
        %1528 = vmatpush1.bf16.msra.mxu0 0
        %1529 = vmatprep.subr.bf16.mxu0 0
        %1530 = vmatpush1.bf16.msra.mxu0 0
        %1531 = vmatprep.subr.bf16.mxu0 0
        %1532 = vmatpush1.bf16.msra.mxu0 0
        %1533 = vmatprep.subr.bf16.mxu0 0
        %1534 = vmatpush1.bf16.msra.mxu0 0
        %1535 = vmatprep.subr.bf16.mxu0 0
        %1536 = vmatpush1.bf16.msra.mxu0 0
        %1537 = vmatprep.subr.bf16.mxu0 0
        %1538 = vmatpush1.bf16.msra.mxu0 0
        %1539 = vmatprep.mubr.bf16.mxu0 0
        %1540 = vmatmul.mubr.bf16.gmra.mrb[0].mxu0 %v1097
        %v1541 = vpop.f32.mrb[0].mxu0
        %v1542 = vadd.f32 %v1451, %v1541
        %v1543 = vpop.f32.mrb[0].mxu0
        %v1544 = vadd.f32 %v1453, %v1543
        %v1545 = vpop.f32.mrb[0].mxu0
        %v1546 = vadd.f32 %v1455, %v1545
        %v1547 = vpop.f32.mrb[0].mxu0
        %v1548 = vadd.f32 %v1457, %v1547
        %1549 = vmatprep.mubr.bf16.mxu0 0
        %1550 = vmatmul.mubr.bf16.gmra.mrb[0].mxu0 %v1099
        %v1551 = vpop.f32.mrb[0].mxu0
        %v1552 = vadd.f32 %v1461, %v1551
        %v1553 = vpop.f32.mrb[0].mxu0
        %v1554 = vadd.f32 %v1463, %v1553
        %v1555 = vpop.f32.mrb[0].mxu0
        %v1556 = vadd.f32 %v1465, %v1555
        %v1557 = vpop.f32.mrb[0].mxu0
        %v1558 = vadd.f32 %v1467, %v1557
        %1559 = vmatprep.mubr.bf16.mxu0 0
        %1560 = vmatmul.mubr.bf16.gmra.mrb[0].mxu0 %v1101
        %v1561 = vpop.f32.mrb[0].mxu0
        %v1562 = vadd.f32 %v1471, %v1561
        %v1563 = vpop.f32.mrb[0].mxu0
        %v1564 = vadd.f32 %v1473, %v1563
        %v1565 = vpop.f32.mrb[0].mxu0
        %v1566 = vadd.f32 %v1475, %v1565
        %v1567 = vpop.f32.mrb[0].mxu0
        %v1568 = vadd.f32 %v1477, %v1567
        %1569 = vmatprep.mubr.bf16.mxu0 0
        %1570 = vmatmul.mubr.bf16.gmra.mrb[0].mxu0 %v1103
        %v1571 = vpop.f32.mrb[0].mxu0
        %v1572 = vadd.f32 %v1481, %v1571
        %v1573 = vpop.f32.mrb[0].mxu0
        %v1574 = vadd.f32 %v1483, %v1573
        %v1575 = vpop.f32.mrb[0].mxu0
        %v1576 = vadd.f32 %v1485, %v1575
        %v1577 = vpop.f32.mrb[0].mxu0
        %v1578 = vadd.f32 %v1487, %v1577
        %1579 = vmatprep.mubr.bf16.mxu0 0
        %1580 = vmatmul.mubr.bf16.gmra.mrb[0].mxu0 %v1114
        %v1581 = vpop.f32.mrb[0].mxu0
        %v1582 = vadd.f32 %v1491, %v1581
        %v1583 = vpop.f32.mrb[0].mxu0
        %v1584 = vadd.f32 %v1493, %v1583
        %v1585 = vpop.f32.mrb[0].mxu0
        %v1586 = vadd.f32 %v1495, %v1585
        %v1587 = vpop.f32.mrb[0].mxu0
        %v1588 = vadd.f32 %v1497, %v1587
        %1589 = vmatprep.mubr.bf16.mxu0 0
        %1590 = vmatmul.mubr.bf16.gmra.mrb[0].mxu0 0
        %v1591 = vpop.f32.mrb[0].mxu0
        %v1592 = vadd.f32 %v1501, %v1591
        %v1593 = vpop.f32.mrb[0].mxu0
        %v1594 = vadd.f32 %v1503, %v1593
        %v1595 = vpop.f32.mrb[0].mxu0
        %v1596 = vpop.f32.mrb[0].mxu0
        %1597 = vdwg.mxu0
        %v1598 = vmul.f32 %v1542, 0.1
        %v1599 = vmul.f32 %v1544, 0.1
        %v1600 = vmul.f32 %v1546, 0.1
        %v1601 = vmul.f32 %v1548, 0.1
        %v1602 = vmul.f32 %v1552, 0.1
        %v1603 = vmul.f32 %v1554, 0.1
        %v1604 = vmul.f32 %v1556, 0.1
        %v1605 = vmul.f32 %v1558, 0.1
        %v1606 = vmul.f32 %v1562, 0.1
        %v1607 = vmul.f32 %v1564, 0.1
        %v1608 = vmul.f32 %v1566, 0.1
        %v1609 = vmul.f32 %v1568, 0.1
        %v1610 = vmul.f32 %v1572, 0.1
        %v1611 = vmul.f32 %v1574, 0.1
        %v1612 = vmul.f32 %v1576, 0.1
        %v1613 = vmul.f32 %v1578, 0.1
        %v1614 = vmul.f32 %v1582, 0.1
        %v1615 = vmul.f32 %v1584, 0.1
        %v1616 = vmul.f32 %v1586, 0.1
        %v1617 = vmul.f32 %v1588, 0.1
        %v1618 = vmul.f32 %v1592, 0.1
        %v1619 = vmul.f32 %v1594, 0.1
        %v1620 = vmax.f32 %v1542, %v1598
        %v1621 = vmax.f32 %v1544, %v1599
        %v1622 = vmax.f32 %v1546, %v1600
        %v1623 = vmax.f32 %v1548, %v1601
        %v1624 = vmax.f32 %v1552, %v1602
        %v1625 = vmax.f32 %v1554, %v1603
        %v1626 = vmax.f32 %v1556, %v1604
        %v1627 = vmax.f32 %v1558, %v1605
        %v1628 = vmax.f32 %v1562, %v1606
        %v1629 = vmax.f32 %v1564, %v1607
        %v1630 = vmax.f32 %v1566, %v1608
        %v1631 = vmax.f32 %v1568, %v1609
        %v1632 = vmax.f32 %v1572, %v1610
        %v1633 = vmax.f32 %v1574, %v1611
        %v1634 = vmax.f32 %v1576, %v1612
        %v1635 = vmax.f32 %v1578, %v1613
        %v1636 = vmax.f32 %v1582, %v1614
        %v1637 = vmax.f32 %v1584, %v1615
        %v1638 = vmax.f32 %v1586, %v1616
        %v1639 = vmax.f32 %v1588, %v1617
        %v1640 = vmax.f32 %v1592, %v1618
        %v1641 = vmax.f32 %v1594, %v1619
        %v1642 = vpack.c.bf16 %v1622, %v1620
        %v1643 = vpack.c.bf16 %v1623, %v1621
        %v1644 = vpack.c.bf16 %v1626, %v1624
        %v1645 = vpack.c.bf16 %v1627, %v1625
        %v1646 = vpack.c.bf16 %v1630, %v1628
        %v1647 = vpack.c.bf16 %v1631, %v1629
        %v1648 = vpack.c.bf16 %v1634, %v1632
        %v1649 = vpack.c.bf16 %v1635, %v1633
        %v1650 = vpack.c.bf16 %v1638, %v1636
        %v1651 = vpack.c.bf16 %v1639, %v1637
        %v1652 = vpack.c.bf16 %v1640, %v1640
        %v1653 = vpack.c.bf16 %v1641, %v1641
        %v1654 = vld [vmem:[#allocation13] sm:$0xff]
        %v1655 = vld [vmem:[#allocation13 + $0x8] sm:$0xff]
        %v1656 = vld [vmem:[#allocation13 + $0x10] sm:$0xff]
        %v1657 = vld [vmem:[#allocation13 + $0x18] sm:$0xff]
        %v1658 = vld [vmem:[#allocation13 + $0x20] sm:$0xff]
        %v1659 = vld [vmem:[#allocation13 + $0x28] sm:$0xff]
        %v1660 = vld [vmem:[#allocation13 + $0x30] sm:$0xff]
        %v1661 = vld [vmem:[#allocation13 + $0x38] sm:$0xff]
        %v1662 = vld [vmem:[#allocation13 + $0x40] sm:$0xff]
        %v1663 = vld [vmem:[#allocation13 + $0x48] sm:$0xff]
        %v1664 = vld [vmem:[#allocation13 + $0x50] sm:$0xff]
        %v1665 = vld [vmem:[#allocation13 + $0x58] sm:$0xff]
        %v1666 = vld [vmem:[#allocation13 + $0x60] sm:$0xff]
        %v1667 = vld [vmem:[#allocation13 + $0x68] sm:$0xff]
        %v1668 = vld [vmem:[#allocation13 + $0x70] sm:$0xff]
        %v1669 = vld [vmem:[#allocation13 + $0x78] sm:$0xff]
        %v1670 = vld [vmem:[#allocation13 + $0x80] sm:$0xff]
        %v1671 = vld [vmem:[#allocation13 + $0x88] sm:$0xff]
        %v1672 = vld [vmem:[#allocation13 + $0x90] sm:$0xff]
        %v1673 = vld [vmem:[#allocation13 + $0x98] sm:$0xff]
        %v1674 = vld [vmem:[#allocation13 + $0xa0] sm:$0xff]
        %v1675 = vld [vmem:[#allocation13 + $0xa8] sm:$0xff]
        %v1676 = vld [vmem:[#allocation13 + $0xb0] sm:$0xff]
        %v1677 = vld [vmem:[#allocation13 + $0xb8] sm:$0xff]
        %v1678 = vld [vmem:[#allocation13 + $0xc0] sm:$0xff]
        %v1679 = vld [vmem:[#allocation13 + $0xc8] sm:$0xff]
        %v1680 = vld [vmem:[#allocation13 + $0xd0] sm:$0xff]
        %v1681 = vld [vmem:[#allocation13 + $0xd8] sm:$0xff]
        %v1682 = vld [vmem:[#allocation13 + $0xe0] sm:$0xff]
        %v1683 = vld [vmem:[#allocation13 + $0xe8] sm:$0xff]
        %v1684 = vld [vmem:[#allocation13 + $0xf0] sm:$0xff]
        %v1685 = vld [vmem:[#allocation13 + $0xf8] sm:$0xff]
        %s1686 = scalar_lea.vmem [#allocation13], 256
        %v1687 = vld [vmem:[%s1686] sm:$0xff]
        %v1688 = vld [vmem:[%s1686 + $0x8] sm:$0xff]
        %v1689 = vld [vmem:[%s1686 + $0x10] sm:$0xff]
        %v1690 = vld [vmem:[%s1686 + $0x18] sm:$0xff]
        %v1691 = vld [vmem:[%s1686 + $0x20] sm:$0xff]
        %v1692 = vld [vmem:[%s1686 + $0x28] sm:$0xff]
        %v1693 = vld [vmem:[%s1686 + $0x30] sm:$0xff]
        %v1694 = vld [vmem:[%s1686 + $0x38] sm:$0xff]
        %v1695 = vld [vmem:[%s1686 + $0x40] sm:$0xff]
        %v1696 = vld [vmem:[%s1686 + $0x48] sm:$0xff]
        %v1697 = vld [vmem:[%s1686 + $0x50] sm:$0xff]
        %v1698 = vld [vmem:[%s1686 + $0x58] sm:$0xff]
        %v1699 = vld [vmem:[%s1686 + $0x60] sm:$0xff]
        %v1700 = vld [vmem:[%s1686 + $0x68] sm:$0xff]
        %v1701 = vld [vmem:[%s1686 + $0x70] sm:$0xff]
        %v1702 = vld [vmem:[%s1686 + $0x78] sm:$0xff]
        %v1703 = vld [vmem:[%s1686 + $0x80] sm:$0xff]
        %v1704 = vld [vmem:[%s1686 + $0x88] sm:$0xff]
        %v1705 = vld [vmem:[%s1686 + $0x90] sm:$0xff]
        %v1706 = vld [vmem:[%s1686 + $0x98] sm:$0xff]
        %v1707 = vld [vmem:[%s1686 + $0xa0] sm:$0xff]
        %v1708 = vld [vmem:[%s1686 + $0xa8] sm:$0xff]
        %v1709 = vld [vmem:[%s1686 + $0xb0] sm:$0xff]
        %v1710 = vld [vmem:[%s1686 + $0xb8] sm:$0xff]
        %v1711 = vld [vmem:[%s1686 + $0xc0] sm:$0xff]
        %v1712 = vld [vmem:[%s1686 + $0xc8] sm:$0xff]
        %v1713 = vld [vmem:[%s1686 + $0xd0] sm:$0xff]
        %v1714 = vld [vmem:[%s1686 + $0xd8] sm:$0xff]
        %v1715 = vld [vmem:[%s1686 + $0xe0] sm:$0xff]
        %v1716 = vld [vmem:[%s1686 + $0xe8] sm:$0xff]
        %v1717 = vld [vmem:[%s1686 + $0xf0] sm:$0xff]
        %v1718 = vld [vmem:[%s1686 + $0xf8] sm:$0xff]
        %v1721 = vrot.slane %v1642, 4
        %v1722 = vrot.slane %v1643, 4
        %v1757 = vunpack.c.l.b16 %v1687
        %v1758 = vunpack.c.h.b16 %v1687
        %v1759 = vunpack.c.l.b16 %v1688
        %v1760 = vunpack.c.h.b16 %v1688
        %v1761 = vunpack.c.l.b16 %v1689
        %v1762 = vunpack.c.h.b16 %v1689
        %v1763 = vunpack.c.l.b16 %v1690
        %v1764 = vunpack.c.h.b16 %v1690
        %v1765 = vunpack.c.l.b16 %v1691
        %v1766 = vunpack.c.h.b16 %v1691
        %v1767 = vunpack.c.l.b16 %v1692
        %v1768 = vunpack.c.h.b16 %v1692
        %v1769 = vunpack.c.l.b16 %v1693
        %v1770 = vunpack.c.h.b16 %v1693
        %v1771 = vunpack.c.l.b16 %v1694
        %v1772 = vunpack.c.h.b16 %v1694
        %v1773 = vunpack.c.l.b16 %v1695
        %v1774 = vunpack.c.h.b16 %v1695
        %v1775 = vunpack.c.l.b16 %v1696
        %v1776 = vunpack.c.h.b16 %v1696
        %v1777 = vunpack.c.l.b16 %v1697
        %v1778 = vunpack.c.h.b16 %v1697
        %v1779 = vunpack.c.l.b16 %v1698
        %v1780 = vunpack.c.h.b16 %v1698
        %v1781 = vunpack.c.l.b16 %v1699
        %v1782 = vunpack.c.h.b16 %v1699
        %v1783 = vunpack.c.l.b16 %v1700
        %v1784 = vunpack.c.h.b16 %v1700
        %v1785 = vunpack.c.l.b16 %v1701
        %v1786 = vunpack.c.h.b16 %v1701
        %v1787 = vunpack.c.l.b16 %v1702
        %v1788 = vunpack.c.h.b16 %v1702
        %v1789 = vunpack.c.l.b16 %v1703
        %v1790 = vunpack.c.h.b16 %v1703
        %v1791 = vunpack.c.l.b16 %v1704
        %v1792 = vunpack.c.h.b16 %v1704
        %v1793 = vunpack.c.l.b16 %v1705
        %v1794 = vunpack.c.h.b16 %v1705
        %v1795 = vunpack.c.l.b16 %v1706
        %v1796 = vunpack.c.h.b16 %v1706
        %v1797 = vunpack.c.l.b16 %v1707
        %v1798 = vunpack.c.h.b16 %v1707
        %v1799 = vunpack.c.l.b16 %v1708
        %v1800 = vunpack.c.h.b16 %v1708
        %v1801 = vunpack.c.l.b16 %v1709
        %v1802 = vunpack.c.h.b16 %v1709
        %v1803 = vunpack.c.l.b16 %v1710
        %v1804 = vunpack.c.h.b16 %v1710
        %v1805 = vunpack.c.l.b16 %v1711
        %v1806 = vunpack.c.h.b16 %v1711
        %v1807 = vunpack.c.l.b16 %v1712
        %v1808 = vunpack.c.h.b16 %v1712
        %v1809 = vunpack.c.l.b16 %v1713
        %v1810 = vunpack.c.h.b16 %v1713
        %v1811 = vunpack.c.l.b16 %v1714
        %v1812 = vunpack.c.h.b16 %v1714
        %v1813 = vunpack.c.l.b16 %v1715
        %v1814 = vunpack.c.h.b16 %v1715
        %v1815 = vunpack.c.l.b16 %v1716
        %v1816 = vunpack.c.h.b16 %v1716
        %v1817 = vunpack.c.l.b16 %v1717
        %v1818 = vunpack.c.h.b16 %v1717
        %v1819 = vunpack.c.l.b16 %v1718
        %v1820 = vunpack.c.h.b16 %v1718
        %v1821 = vpack.c.b16 %v1759, %v1757
        %v1822 = vpack.c.b16 %v1760, %v1758
        %v1823 = vpack.c.b16 %v1763, %v1761
        %v1824 = vpack.c.b16 %v1764, %v1762
        %v1825 = vpack.c.b16 %v1767, %v1765
        %v1826 = vpack.c.b16 %v1768, %v1766
        %v1827 = vpack.c.b16 %v1771, %v1769
        %v1828 = vpack.c.b16 %v1772, %v1770
        %v1829 = vpack.c.b16 %v1775, %v1773
        %v1830 = vpack.c.b16 %v1776, %v1774
        %v1831 = vpack.c.b16 %v1779, %v1777
        %v1832 = vpack.c.b16 %v1780, %v1778
        %v1833 = vpack.c.b16 %v1783, %v1781
        %v1834 = vpack.c.b16 %v1784, %v1782
        %v1835 = vpack.c.b16 %v1787, %v1785
        %v1836 = vpack.c.b16 %v1788, %v1786
        %v1837 = vpack.c.b16 %v1791, %v1789
        %v1838 = vpack.c.b16 %v1792, %v1790
        %v1839 = vpack.c.b16 %v1795, %v1793
        %v1840 = vpack.c.b16 %v1796, %v1794
        %v1841 = vpack.c.b16 %v1799, %v1797
        %v1842 = vpack.c.b16 %v1800, %v1798
        %v1843 = vpack.c.b16 %v1803, %v1801
        %v1844 = vpack.c.b16 %v1804, %v1802
        %v1845 = vpack.c.b16 %v1807, %v1805
        %v1846 = vpack.c.b16 %v1808, %v1806
        %v1847 = vpack.c.b16 %v1811, %v1809
        %v1848 = vpack.c.b16 %v1812, %v1810
        %v1849 = vpack.c.b16 %v1815, %v1813
        %v1850 = vpack.c.b16 %v1816, %v1814
        %v1851 = vpack.c.b16 %v1819, %v1817
        %v1852 = vpack.c.b16 %v1820, %v1818
        %1885 = vmatprep.subr.bf16.mxu0 %v1822
        %1886 = vmatpush1.bf16.msra.mxu0 %v1821
        %1887 = vmatprep.subr.bf16.mxu0 %v1824
        %1888 = vmatpush1.bf16.msra.mxu0 %v1823
        %1889 = vmatprep.subr.bf16.mxu0 %v1826
        %1890 = vmatpush1.bf16.msra.mxu0 %v1825
        %1891 = vmatprep.subr.bf16.mxu0 %v1828
        %1892 = vmatpush1.bf16.msra.mxu0 %v1827
        %1893 = vmatprep.subr.bf16.mxu0 %v1830
        %1894 = vmatpush1.bf16.msra.mxu0 %v1829
        %1895 = vmatprep.subr.bf16.mxu0 %v1832
        %1896 = vmatpush1.bf16.msra.mxu0 %v1831
        %1897 = vmatprep.subr.bf16.mxu0 %v1834
        %1898 = vmatpush1.bf16.msra.mxu0 %v1833
        %1899 = vmatprep.subr.bf16.mxu0 %v1836
        %1900 = vmatpush1.bf16.msra.mxu0 %v1835
        %1901 = vmatprep.subr.bf16.mxu0 %v1838
        %1902 = vmatpush1.bf16.msra.mxu0 %v1837
        %1903 = vmatprep.subr.bf16.mxu0 %v1840
        %1904 = vmatpush1.bf16.msra.mxu0 %v1839
        %1905 = vmatprep.subr.bf16.mxu0 %v1842
        %1906 = vmatpush1.bf16.msra.mxu0 %v1841
        %1907 = vmatprep.subr.bf16.mxu0 %v1844
        %1908 = vmatpush1.bf16.msra.mxu0 %v1843
        %1909 = vmatprep.subr.bf16.mxu0 %v1846
        %1910 = vmatpush1.bf16.msra.mxu0 %v1845
        %1911 = vmatprep.subr.bf16.mxu0 %v1848
        %1912 = vmatpush1.bf16.msra.mxu0 %v1847
        %1913 = vmatprep.subr.bf16.mxu0 %v1850
        %1914 = vmatpush1.bf16.msra.mxu0 %v1849
        %1915 = vmatprep.subr.bf16.mxu0 %v1852
        %1916 = vmatpush1.bf16.msra.mxu0 %v1851
        %1917 = vmatprep.mubr.bf16.mxu0 %v1722
        %1918 = vmatmul.mubr.bf16.gmra.mrb[0].mxu0 %v1721
        %v1919 = vpop.f32.mrb[0].mxu0
        %v1920 = vadd.f32 0.0, %v1919
        %v1921 = vpop.f32.mrb[0].mxu0
        %v1922 = vadd.f32 0.0, %v1921
        %v1923 = vpop.f32.mrb[0].mxu0
        %v1924 = vpop.f32.mrb[0].mxu0
        %1925 = vdwg.mxu0
        %v1958 = vunpack.c.l.b16 %v1654
        %v1959 = vunpack.c.h.b16 %v1654
        %v1960 = vunpack.c.l.b16 %v1655
        %v1961 = vunpack.c.h.b16 %v1655
        %v1962 = vunpack.c.l.b16 %v1656
        %v1963 = vunpack.c.h.b16 %v1656
        %v1964 = vunpack.c.l.b16 %v1657
        %v1965 = vunpack.c.h.b16 %v1657
        %v1966 = vunpack.c.l.b16 %v1658
        %v1967 = vunpack.c.h.b16 %v1658
        %v1968 = vunpack.c.l.b16 %v1659
        %v1969 = vunpack.c.h.b16 %v1659
        %v1970 = vunpack.c.l.b16 %v1660
        %v1971 = vunpack.c.h.b16 %v1660
        %v1972 = vunpack.c.l.b16 %v1661
        %v1973 = vunpack.c.h.b16 %v1661
        %v1974 = vunpack.c.l.b16 %v1662
        %v1975 = vunpack.c.h.b16 %v1662
        %v1976 = vunpack.c.l.b16 %v1663
        %v1977 = vunpack.c.h.b16 %v1663
        %v1978 = vunpack.c.l.b16 %v1664
        %v1979 = vunpack.c.h.b16 %v1664
        %v1980 = vunpack.c.l.b16 %v1665
        %v1981 = vunpack.c.h.b16 %v1665
        %v1982 = vunpack.c.l.b16 %v1666
        %v1983 = vunpack.c.h.b16 %v1666
        %v1984 = vunpack.c.l.b16 %v1667
        %v1985 = vunpack.c.h.b16 %v1667
        %v1986 = vunpack.c.l.b16 %v1668
        %v1987 = vunpack.c.h.b16 %v1668
        %v1988 = vunpack.c.l.b16 %v1669
        %v1989 = vunpack.c.h.b16 %v1669
        %v1990 = vunpack.c.l.b16 %v1670
        %v1991 = vunpack.c.h.b16 %v1670
        %v1992 = vunpack.c.l.b16 %v1671
        %v1993 = vunpack.c.h.b16 %v1671
        %v1994 = vunpack.c.l.b16 %v1672
        %v1995 = vunpack.c.h.b16 %v1672
        %v1996 = vunpack.c.l.b16 %v1673
        %v1997 = vunpack.c.h.b16 %v1673
        %v1998 = vunpack.c.l.b16 %v1674
        %v1999 = vunpack.c.h.b16 %v1674
        %v2000 = vunpack.c.l.b16 %v1675
        %v2001 = vunpack.c.h.b16 %v1675
        %v2002 = vunpack.c.l.b16 %v1676
        %v2003 = vunpack.c.h.b16 %v1676
        %v2004 = vunpack.c.l.b16 %v1677
        %v2005 = vunpack.c.h.b16 %v1677
        %v2006 = vunpack.c.l.b16 %v1678
        %v2007 = vunpack.c.h.b16 %v1678
        %v2008 = vunpack.c.l.b16 %v1679
        %v2009 = vunpack.c.h.b16 %v1679
        %v2010 = vunpack.c.l.b16 %v1680
        %v2011 = vunpack.c.h.b16 %v1680
        %v2012 = vunpack.c.l.b16 %v1681
        %v2013 = vunpack.c.h.b16 %v1681
        %v2014 = vunpack.c.l.b16 %v1682
        %v2015 = vunpack.c.h.b16 %v1682
        %v2016 = vunpack.c.l.b16 %v1683
        %v2017 = vunpack.c.h.b16 %v1683
        %v2018 = vunpack.c.l.b16 %v1684
        %v2019 = vunpack.c.h.b16 %v1684
        %v2020 = vunpack.c.l.b16 %v1685
        %v2021 = vunpack.c.h.b16 %v1685
        %v2022 = vpack.c.b16 %v1960, %v1958
        %v2023 = vpack.c.b16 %v1961, %v1959
        %v2024 = vpack.c.b16 %v1964, %v1962
        %v2025 = vpack.c.b16 %v1965, %v1963
        %v2026 = vpack.c.b16 %v1968, %v1966
        %v2027 = vpack.c.b16 %v1969, %v1967
        %v2028 = vpack.c.b16 %v1972, %v1970
        %v2029 = vpack.c.b16 %v1973, %v1971
        %v2030 = vpack.c.b16 %v1976, %v1974
        %v2031 = vpack.c.b16 %v1977, %v1975
        %v2032 = vpack.c.b16 %v1980, %v1978
        %v2033 = vpack.c.b16 %v1981, %v1979
        %v2034 = vpack.c.b16 %v1984, %v1982
        %v2035 = vpack.c.b16 %v1985, %v1983
        %v2036 = vpack.c.b16 %v1988, %v1986
        %v2037 = vpack.c.b16 %v1989, %v1987
        %v2038 = vpack.c.b16 %v1992, %v1990
        %v2039 = vpack.c.b16 %v1993, %v1991
        %v2040 = vpack.c.b16 %v1996, %v1994
        %v2041 = vpack.c.b16 %v1997, %v1995
        %v2042 = vpack.c.b16 %v2000, %v1998
        %v2043 = vpack.c.b16 %v2001, %v1999
        %v2044 = vpack.c.b16 %v2004, %v2002
        %v2045 = vpack.c.b16 %v2005, %v2003
        %v2046 = vpack.c.b16 %v2008, %v2006
        %v2047 = vpack.c.b16 %v2009, %v2007
        %v2048 = vpack.c.b16 %v2012, %v2010
        %v2049 = vpack.c.b16 %v2013, %v2011
        %v2050 = vpack.c.b16 %v2016, %v2014
        %v2051 = vpack.c.b16 %v2017, %v2015
        %v2052 = vpack.c.b16 %v2020, %v2018
        %v2053 = vpack.c.b16 %v2021, %v2019
        %2086 = vmatprep.subr.bf16.mxu0 %v2023
        %2087 = vmatpush1.bf16.msra.mxu0 %v2022
        %2088 = vmatprep.subr.bf16.mxu0 %v2025
        %2089 = vmatpush1.bf16.msra.mxu0 %v2024
        %2090 = vmatprep.subr.bf16.mxu0 %v2027
        %2091 = vmatpush1.bf16.msra.mxu0 %v2026
        %2092 = vmatprep.subr.bf16.mxu0 %v2029
        %2093 = vmatpush1.bf16.msra.mxu0 %v2028
        %2094 = vmatprep.subr.bf16.mxu0 %v2031
        %2095 = vmatpush1.bf16.msra.mxu0 %v2030
        %2096 = vmatprep.subr.bf16.mxu0 %v2033
        %2097 = vmatpush1.bf16.msra.mxu0 %v2032
        %2098 = vmatprep.subr.bf16.mxu0 %v2035
        %2099 = vmatpush1.bf16.msra.mxu0 %v2034
        %2100 = vmatprep.subr.bf16.mxu0 %v2037
        %2101 = vmatpush1.bf16.msra.mxu0 %v2036
        %2102 = vmatprep.subr.bf16.mxu0 %v2039
        %2103 = vmatpush1.bf16.msra.mxu0 %v2038
        %2104 = vmatprep.subr.bf16.mxu0 %v2041
        %2105 = vmatpush1.bf16.msra.mxu0 %v2040
        %2106 = vmatprep.subr.bf16.mxu0 %v2043
        %2107 = vmatpush1.bf16.msra.mxu0 %v2042
        %2108 = vmatprep.subr.bf16.mxu0 %v2045
        %2109 = vmatpush1.bf16.msra.mxu0 %v2044
        %2110 = vmatprep.subr.bf16.mxu0 %v2047
        %2111 = vmatpush1.bf16.msra.mxu0 %v2046
        %2112 = vmatprep.subr.bf16.mxu0 %v2049
        %2113 = vmatpush1.bf16.msra.mxu0 %v2048
        %2114 = vmatprep.subr.bf16.mxu0 %v2051
        %2115 = vmatpush1.bf16.msra.mxu0 %v2050
        %2116 = vmatprep.subr.bf16.mxu0 %v2053
        %2117 = vmatpush1.bf16.msra.mxu0 %v2052
        %2118 = vmatprep.mubr.bf16.mxu0 %v1643
        %2119 = vmatmul.mubr.bf16.gmra.mrb[0].mxu0 %v1642
        %v2120 = vpop.f32.mrb[0].mxu0
        %v2121 = vadd.f32 %v1920, %v2120
        %v2122 = vpop.f32.mrb[0].mxu0
        %v2123 = vadd.f32 %v1922, %v2122
        %v2124 = vpop.f32.mrb[0].mxu0
        %v2125 = vpop.f32.mrb[0].mxu0
        %2126 = vdwg.mxu0
        %s2127 = scalar_lea.vmem [#allocation13], 512
        %v2128 = vld [vmem:[%s2127] sm:$0xff]
        %v2129 = vld [vmem:[%s2127 + $0x8] sm:$0xff]
        %v2130 = vld [vmem:[%s2127 + $0x10] sm:$0xff]
        %v2131 = vld [vmem:[%s2127 + $0x18] sm:$0xff]
        %v2132 = vld [vmem:[%s2127 + $0x20] sm:$0xff]
        %v2133 = vld [vmem:[%s2127 + $0x28] sm:$0xff]
        %v2134 = vld [vmem:[%s2127 + $0x30] sm:$0xff]
        %v2135 = vld [vmem:[%s2127 + $0x38] sm:$0xff]
        %v2136 = vld [vmem:[%s2127 + $0x40] sm:$0xff]
        %v2137 = vld [vmem:[%s2127 + $0x48] sm:$0xff]
        %v2138 = vld [vmem:[%s2127 + $0x50] sm:$0xff]
        %v2139 = vld [vmem:[%s2127 + $0x58] sm:$0xff]
        %v2140 = vld [vmem:[%s2127 + $0x60] sm:$0xff]
        %v2141 = vld [vmem:[%s2127 + $0x68] sm:$0xff]
        %v2142 = vld [vmem:[%s2127 + $0x70] sm:$0xff]
        %v2143 = vld [vmem:[%s2127 + $0x78] sm:$0xff]
        %v2144 = vld [vmem:[%s2127 + $0x80] sm:$0xff]
        %v2145 = vld [vmem:[%s2127 + $0x88] sm:$0xff]
        %v2146 = vld [vmem:[%s2127 + $0x90] sm:$0xff]
        %v2147 = vld [vmem:[%s2127 + $0x98] sm:$0xff]
        %v2148 = vld [vmem:[%s2127 + $0xa0] sm:$0xff]
        %v2149 = vld [vmem:[%s2127 + $0xa8] sm:$0xff]
        %v2150 = vld [vmem:[%s2127 + $0xb0] sm:$0xff]
        %v2151 = vld [vmem:[%s2127 + $0xb8] sm:$0xff]
        %v2152 = vld [vmem:[%s2127 + $0xc0] sm:$0xff]
        %v2153 = vld [vmem:[%s2127 + $0xc8] sm:$0xff]
        %v2154 = vld [vmem:[%s2127 + $0xd0] sm:$0xff]
        %v2155 = vld [vmem:[%s2127 + $0xd8] sm:$0xff]
        %v2156 = vld [vmem:[%s2127 + $0xe0] sm:$0xff]
        %v2157 = vld [vmem:[%s2127 + $0xe8] sm:$0xff]
        %v2158 = vld [vmem:[%s2127 + $0xf0] sm:$0xff]
        %v2159 = vld [vmem:[%s2127 + $0xf8] sm:$0xff]
        %v2192 = vunpack.c.l.b16 %v2128
        %v2193 = vunpack.c.h.b16 %v2128
        %v2194 = vunpack.c.l.b16 %v2129
        %v2195 = vunpack.c.h.b16 %v2129
        %v2196 = vunpack.c.l.b16 %v2130
        %v2197 = vunpack.c.h.b16 %v2130
        %v2198 = vunpack.c.l.b16 %v2131
        %v2199 = vunpack.c.h.b16 %v2131
        %v2200 = vunpack.c.l.b16 %v2132
        %v2201 = vunpack.c.h.b16 %v2132
        %v2202 = vunpack.c.l.b16 %v2133
        %v2203 = vunpack.c.h.b16 %v2133
        %v2204 = vunpack.c.l.b16 %v2134
        %v2205 = vunpack.c.h.b16 %v2134
        %v2206 = vunpack.c.l.b16 %v2135
        %v2207 = vunpack.c.h.b16 %v2135
        %v2208 = vunpack.c.l.b16 %v2136
        %v2209 = vunpack.c.h.b16 %v2136
        %v2210 = vunpack.c.l.b16 %v2137
        %v2211 = vunpack.c.h.b16 %v2137
        %v2212 = vunpack.c.l.b16 %v2138
        %v2213 = vunpack.c.h.b16 %v2138
        %v2214 = vunpack.c.l.b16 %v2139
        %v2215 = vunpack.c.h.b16 %v2139
        %v2216 = vunpack.c.l.b16 %v2140
        %v2217 = vunpack.c.h.b16 %v2140
        %v2218 = vunpack.c.l.b16 %v2141
        %v2219 = vunpack.c.h.b16 %v2141
        %v2220 = vunpack.c.l.b16 %v2142
        %v2221 = vunpack.c.h.b16 %v2142
        %v2222 = vunpack.c.l.b16 %v2143
        %v2223 = vunpack.c.h.b16 %v2143
        %v2224 = vunpack.c.l.b16 %v2144
        %v2225 = vunpack.c.h.b16 %v2144
        %v2226 = vunpack.c.l.b16 %v2145
        %v2227 = vunpack.c.h.b16 %v2145
        %v2228 = vunpack.c.l.b16 %v2146
        %v2229 = vunpack.c.h.b16 %v2146
        %v2230 = vunpack.c.l.b16 %v2147
        %v2231 = vunpack.c.h.b16 %v2147
        %v2232 = vunpack.c.l.b16 %v2148
        %v2233 = vunpack.c.h.b16 %v2148
        %v2234 = vunpack.c.l.b16 %v2149
        %v2235 = vunpack.c.h.b16 %v2149
        %v2236 = vunpack.c.l.b16 %v2150
        %v2237 = vunpack.c.h.b16 %v2150
        %v2238 = vunpack.c.l.b16 %v2151
        %v2239 = vunpack.c.h.b16 %v2151
        %v2240 = vunpack.c.l.b16 %v2152
        %v2241 = vunpack.c.h.b16 %v2152
        %v2242 = vunpack.c.l.b16 %v2153
        %v2243 = vunpack.c.h.b16 %v2153
        %v2244 = vunpack.c.l.b16 %v2154
        %v2245 = vunpack.c.h.b16 %v2154
        %v2246 = vunpack.c.l.b16 %v2155
        %v2247 = vunpack.c.h.b16 %v2155
        %v2248 = vunpack.c.l.b16 %v2156
        %v2249 = vunpack.c.h.b16 %v2156
        %v2250 = vunpack.c.l.b16 %v2157
        %v2251 = vunpack.c.h.b16 %v2157
        %v2252 = vunpack.c.l.b16 %v2158
        %v2253 = vunpack.c.h.b16 %v2158
        %v2254 = vunpack.c.l.b16 %v2159
        %v2255 = vunpack.c.h.b16 %v2159
        %v2256 = vpack.c.b16 %v2194, %v2192
        %v2257 = vpack.c.b16 %v2195, %v2193
        %v2258 = vpack.c.b16 %v2198, %v2196
        %v2259 = vpack.c.b16 %v2199, %v2197
        %v2260 = vpack.c.b16 %v2202, %v2200
        %v2261 = vpack.c.b16 %v2203, %v2201
        %v2262 = vpack.c.b16 %v2206, %v2204
        %v2263 = vpack.c.b16 %v2207, %v2205
        %v2264 = vpack.c.b16 %v2210, %v2208
        %v2265 = vpack.c.b16 %v2211, %v2209
        %v2266 = vpack.c.b16 %v2214, %v2212
        %v2267 = vpack.c.b16 %v2215, %v2213
        %v2268 = vpack.c.b16 %v2218, %v2216
        %v2269 = vpack.c.b16 %v2219, %v2217
        %v2270 = vpack.c.b16 %v2222, %v2220
        %v2271 = vpack.c.b16 %v2223, %v2221
        %v2272 = vpack.c.b16 %v2226, %v2224
        %v2273 = vpack.c.b16 %v2227, %v2225
        %v2274 = vpack.c.b16 %v2230, %v2228
        %v2275 = vpack.c.b16 %v2231, %v2229
        %v2276 = vpack.c.b16 %v2234, %v2232
        %v2277 = vpack.c.b16 %v2235, %v2233
        %v2278 = vpack.c.b16 %v2238, %v2236
        %v2279 = vpack.c.b16 %v2239, %v2237
        %v2280 = vpack.c.b16 %v2242, %v2240
        %v2281 = vpack.c.b16 %v2243, %v2241
        %v2282 = vpack.c.b16 %v2246, %v2244
        %v2283 = vpack.c.b16 %v2247, %v2245
        %v2284 = vpack.c.b16 %v2250, %v2248
        %v2285 = vpack.c.b16 %v2251, %v2249
        %v2286 = vpack.c.b16 %v2254, %v2252
        %v2287 = vpack.c.b16 %v2255, %v2253
        %2320 = vmatprep.subr.bf16.mxu0 %v2257
        %2321 = vmatpush1.bf16.msra.mxu0 %v2256
        %2322 = vmatprep.subr.bf16.mxu0 %v2259
        %2323 = vmatpush1.bf16.msra.mxu0 %v2258
        %2324 = vmatprep.subr.bf16.mxu0 %v2261
        %2325 = vmatpush1.bf16.msra.mxu0 %v2260
        %2326 = vmatprep.subr.bf16.mxu0 %v2263
        %2327 = vmatpush1.bf16.msra.mxu0 %v2262
        %2328 = vmatprep.subr.bf16.mxu0 %v2265
        %2329 = vmatpush1.bf16.msra.mxu0 %v2264
        %2330 = vmatprep.subr.bf16.mxu0 %v2267
        %2331 = vmatpush1.bf16.msra.mxu0 %v2266
        %2332 = vmatprep.subr.bf16.mxu0 %v2269
        %2333 = vmatpush1.bf16.msra.mxu0 %v2268
        %2334 = vmatprep.subr.bf16.mxu0 %v2271
        %2335 = vmatpush1.bf16.msra.mxu0 %v2270
        %2336 = vmatprep.subr.bf16.mxu0 %v2273
        %2337 = vmatpush1.bf16.msra.mxu0 %v2272
        %2338 = vmatprep.subr.bf16.mxu0 %v2275
        %2339 = vmatpush1.bf16.msra.mxu0 %v2274
        %2340 = vmatprep.subr.bf16.mxu0 %v2277
        %2341 = vmatpush1.bf16.msra.mxu0 %v2276
        %2342 = vmatprep.subr.bf16.mxu0 %v2279
        %2343 = vmatpush1.bf16.msra.mxu0 %v2278
        %2344 = vmatprep.subr.bf16.mxu0 %v2281
        %2345 = vmatpush1.bf16.msra.mxu0 %v2280
        %2346 = vmatprep.subr.bf16.mxu0 %v2283
        %2347 = vmatpush1.bf16.msra.mxu0 %v2282
        %2348 = vmatprep.subr.bf16.mxu0 %v2285
        %2349 = vmatpush1.bf16.msra.mxu0 %v2284
        %2350 = vmatprep.subr.bf16.mxu0 %v2287
        %2351 = vmatpush1.bf16.msra.mxu0 %v2286
        %2352 = vmatprep.mubr.bf16.mxu0 %v1645
        %2353 = vmatmul.mubr.bf16.gmra.mrb[0].mxu0 %v1644
        %v2354 = vpop.f32.mrb[0].mxu0
        %v2355 = vadd.f32 0.0, %v2354
        %v2356 = vpop.f32.mrb[0].mxu0
        %v2357 = vadd.f32 0.0, %v2356
        %v2358 = vpop.f32.mrb[0].mxu0
        %v2359 = vpop.f32.mrb[0].mxu0
        %2360 = vdwg.mxu0
        %v2361 = vadd.f32 %v2121, %v2355
        %v2362 = vadd.f32 %v2123, %v2357
        %s2363 = scalar_lea.vmem [#allocation13], 768
        %v2364 = vld [vmem:[%s2363] sm:$0xff]
        %v2365 = vld [vmem:[%s2363 + $0x8] sm:$0xff]
        %v2366 = vld [vmem:[%s2363 + $0x10] sm:$0xff]
        %v2367 = vld [vmem:[%s2363 + $0x18] sm:$0xff]
        %v2368 = vld [vmem:[%s2363 + $0x20] sm:$0xff]
        %v2369 = vld [vmem:[%s2363 + $0x28] sm:$0xff]
        %v2370 = vld [vmem:[%s2363 + $0x30] sm:$0xff]
        %v2371 = vld [vmem:[%s2363 + $0x38] sm:$0xff]
        %v2372 = vld [vmem:[%s2363 + $0x40] sm:$0xff]
        %v2373 = vld [vmem:[%s2363 + $0x48] sm:$0xff]
        %v2374 = vld [vmem:[%s2363 + $0x50] sm:$0xff]
        %v2375 = vld [vmem:[%s2363 + $0x58] sm:$0xff]
        %v2376 = vld [vmem:[%s2363 + $0x60] sm:$0xff]
        %v2377 = vld [vmem:[%s2363 + $0x68] sm:$0xff]
        %v2378 = vld [vmem:[%s2363 + $0x70] sm:$0xff]
        %v2379 = vld [vmem:[%s2363 + $0x78] sm:$0xff]
        %v2380 = vld [vmem:[%s2363 + $0x80] sm:$0xff]
        %v2381 = vld [vmem:[%s2363 + $0x88] sm:$0xff]
        %v2382 = vld [vmem:[%s2363 + $0x90] sm:$0xff]
        %v2383 = vld [vmem:[%s2363 + $0x98] sm:$0xff]
        %v2384 = vld [vmem:[%s2363 + $0xa0] sm:$0xff]
        %v2385 = vld [vmem:[%s2363 + $0xa8] sm:$0xff]
        %v2386 = vld [vmem:[%s2363 + $0xb0] sm:$0xff]
        %v2387 = vld [vmem:[%s2363 + $0xb8] sm:$0xff]
        %v2388 = vld [vmem:[%s2363 + $0xc0] sm:$0xff]
        %v2389 = vld [vmem:[%s2363 + $0xc8] sm:$0xff]
        %v2390 = vld [vmem:[%s2363 + $0xd0] sm:$0xff]
        %v2391 = vld [vmem:[%s2363 + $0xd8] sm:$0xff]
        %v2392 = vld [vmem:[%s2363 + $0xe0] sm:$0xff]
        %v2393 = vld [vmem:[%s2363 + $0xe8] sm:$0xff]
        %v2394 = vld [vmem:[%s2363 + $0xf0] sm:$0xff]
        %v2395 = vld [vmem:[%s2363 + $0xf8] sm:$0xff]
        %v2398 = vrot.slane %v1644, 4
        %v2399 = vrot.slane %v1645, 4
        %v2434 = vunpack.c.l.b16 %v2364
        %v2435 = vunpack.c.h.b16 %v2364
        %v2436 = vunpack.c.l.b16 %v2365
        %v2437 = vunpack.c.h.b16 %v2365
        %v2438 = vunpack.c.l.b16 %v2366
        %v2439 = vunpack.c.h.b16 %v2366
        %v2440 = vunpack.c.l.b16 %v2367
        %v2441 = vunpack.c.h.b16 %v2367
        %v2442 = vunpack.c.l.b16 %v2368
        %v2443 = vunpack.c.h.b16 %v2368
        %v2444 = vunpack.c.l.b16 %v2369
        %v2445 = vunpack.c.h.b16 %v2369
        %v2446 = vunpack.c.l.b16 %v2370
        %v2447 = vunpack.c.h.b16 %v2370
        %v2448 = vunpack.c.l.b16 %v2371
        %v2449 = vunpack.c.h.b16 %v2371
        %v2450 = vunpack.c.l.b16 %v2372
        %v2451 = vunpack.c.h.b16 %v2372
        %v2452 = vunpack.c.l.b16 %v2373
        %v2453 = vunpack.c.h.b16 %v2373
        %v2454 = vunpack.c.l.b16 %v2374
        %v2455 = vunpack.c.h.b16 %v2374
        %v2456 = vunpack.c.l.b16 %v2375
        %v2457 = vunpack.c.h.b16 %v2375
        %v2458 = vunpack.c.l.b16 %v2376
        %v2459 = vunpack.c.h.b16 %v2376
        %v2460 = vunpack.c.l.b16 %v2377
        %v2461 = vunpack.c.h.b16 %v2377
        %v2462 = vunpack.c.l.b16 %v2378
        %v2463 = vunpack.c.h.b16 %v2378
        %v2464 = vunpack.c.l.b16 %v2379
        %v2465 = vunpack.c.h.b16 %v2379
        %v2466 = vunpack.c.l.b16 %v2380
        %v2467 = vunpack.c.h.b16 %v2380
        %v2468 = vunpack.c.l.b16 %v2381
        %v2469 = vunpack.c.h.b16 %v2381
        %v2470 = vunpack.c.l.b16 %v2382
        %v2471 = vunpack.c.h.b16 %v2382
        %v2472 = vunpack.c.l.b16 %v2383
        %v2473 = vunpack.c.h.b16 %v2383
        %v2474 = vunpack.c.l.b16 %v2384
        %v2475 = vunpack.c.h.b16 %v2384
        %v2476 = vunpack.c.l.b16 %v2385
        %v2477 = vunpack.c.h.b16 %v2385
        %v2478 = vunpack.c.l.b16 %v2386
        %v2479 = vunpack.c.h.b16 %v2386
        %v2480 = vunpack.c.l.b16 %v2387
        %v2481 = vunpack.c.h.b16 %v2387
        %v2482 = vunpack.c.l.b16 %v2388
        %v2483 = vunpack.c.h.b16 %v2388
        %v2484 = vunpack.c.l.b16 %v2389
        %v2485 = vunpack.c.h.b16 %v2389
        %v2486 = vunpack.c.l.b16 %v2390
        %v2487 = vunpack.c.h.b16 %v2390
        %v2488 = vunpack.c.l.b16 %v2391
        %v2489 = vunpack.c.h.b16 %v2391
        %v2490 = vunpack.c.l.b16 %v2392
        %v2491 = vunpack.c.h.b16 %v2392
        %v2492 = vunpack.c.l.b16 %v2393
        %v2493 = vunpack.c.h.b16 %v2393
        %v2494 = vunpack.c.l.b16 %v2394
        %v2495 = vunpack.c.h.b16 %v2394
        %v2496 = vunpack.c.l.b16 %v2395
        %v2497 = vunpack.c.h.b16 %v2395
        %v2498 = vpack.c.b16 %v2436, %v2434
        %v2499 = vpack.c.b16 %v2437, %v2435
        %v2500 = vpack.c.b16 %v2440, %v2438
        %v2501 = vpack.c.b16 %v2441, %v2439
        %v2502 = vpack.c.b16 %v2444, %v2442
        %v2503 = vpack.c.b16 %v2445, %v2443
        %v2504 = vpack.c.b16 %v2448, %v2446
        %v2505 = vpack.c.b16 %v2449, %v2447
        %v2506 = vpack.c.b16 %v2452, %v2450
        %v2507 = vpack.c.b16 %v2453, %v2451
        %v2508 = vpack.c.b16 %v2456, %v2454
        %v2509 = vpack.c.b16 %v2457, %v2455
        %v2510 = vpack.c.b16 %v2460, %v2458
        %v2511 = vpack.c.b16 %v2461, %v2459
        %v2512 = vpack.c.b16 %v2464, %v2462
        %v2513 = vpack.c.b16 %v2465, %v2463
        %v2514 = vpack.c.b16 %v2468, %v2466
        %v2515 = vpack.c.b16 %v2469, %v2467
        %v2516 = vpack.c.b16 %v2472, %v2470
        %v2517 = vpack.c.b16 %v2473, %v2471
        %v2518 = vpack.c.b16 %v2476, %v2474
        %v2519 = vpack.c.b16 %v2477, %v2475
        %v2520 = vpack.c.b16 %v2480, %v2478
        %v2521 = vpack.c.b16 %v2481, %v2479
        %v2522 = vpack.c.b16 %v2484, %v2482
        %v2523 = vpack.c.b16 %v2485, %v2483
        %v2524 = vpack.c.b16 %v2488, %v2486
        %v2525 = vpack.c.b16 %v2489, %v2487
        %v2526 = vpack.c.b16 %v2492, %v2490
        %v2527 = vpack.c.b16 %v2493, %v2491
        %v2528 = vpack.c.b16 %v2496, %v2494
        %v2529 = vpack.c.b16 %v2497, %v2495
        %2562 = vmatprep.subr.bf16.mxu0 %v2499
        %2563 = vmatpush1.bf16.msra.mxu0 %v2498
        %2564 = vmatprep.subr.bf16.mxu0 %v2501
        %2565 = vmatpush1.bf16.msra.mxu0 %v2500
        %2566 = vmatprep.subr.bf16.mxu0 %v2503
        %2567 = vmatpush1.bf16.msra.mxu0 %v2502
        %2568 = vmatprep.subr.bf16.mxu0 %v2505
        %2569 = vmatpush1.bf16.msra.mxu0 %v2504
        %2570 = vmatprep.subr.bf16.mxu0 %v2507
        %2571 = vmatpush1.bf16.msra.mxu0 %v2506
        %2572 = vmatprep.subr.bf16.mxu0 %v2509
        %2573 = vmatpush1.bf16.msra.mxu0 %v2508
        %2574 = vmatprep.subr.bf16.mxu0 %v2511
        %2575 = vmatpush1.bf16.msra.mxu0 %v2510
        %2576 = vmatprep.subr.bf16.mxu0 %v2513
        %2577 = vmatpush1.bf16.msra.mxu0 %v2512
        %2578 = vmatprep.subr.bf16.mxu0 %v2515
        %2579 = vmatpush1.bf16.msra.mxu0 %v2514
        %2580 = vmatprep.subr.bf16.mxu0 %v2517
        %2581 = vmatpush1.bf16.msra.mxu0 %v2516
        %2582 = vmatprep.subr.bf16.mxu0 %v2519
        %2583 = vmatpush1.bf16.msra.mxu0 %v2518
        %2584 = vmatprep.subr.bf16.mxu0 %v2521
        %2585 = vmatpush1.bf16.msra.mxu0 %v2520
        %2586 = vmatprep.subr.bf16.mxu0 %v2523
        %2587 = vmatpush1.bf16.msra.mxu0 %v2522
        %2588 = vmatprep.subr.bf16.mxu0 %v2525
        %2589 = vmatpush1.bf16.msra.mxu0 %v2524
        %2590 = vmatprep.subr.bf16.mxu0 %v2527
        %2591 = vmatpush1.bf16.msra.mxu0 %v2526
        %2592 = vmatprep.subr.bf16.mxu0 %v2529
        %2593 = vmatpush1.bf16.msra.mxu0 %v2528
        %2594 = vmatprep.mubr.bf16.mxu0 %v2399
        %2595 = vmatmul.mubr.bf16.gmra.mrb[0].mxu0 %v2398
        %v2596 = vpop.f32.mrb[0].mxu0
        %v2597 = vadd.f32 0.0, %v2596
        %v2598 = vpop.f32.mrb[0].mxu0
        %v2599 = vadd.f32 0.0, %v2598
        %v2600 = vpop.f32.mrb[0].mxu0
        %v2601 = vpop.f32.mrb[0].mxu0
        %2602 = vdwg.mxu0
        %v2603 = vadd.f32 %v2361, %v2597
        %v2604 = vadd.f32 %v2362, %v2599
        %s2605 = scalar_lea.vmem [#allocation13], 1024
        %v2606 = vld [vmem:[%s2605] sm:$0xff]
        %v2607 = vld [vmem:[%s2605 + $0x8] sm:$0xff]
        %v2608 = vld [vmem:[%s2605 + $0x10] sm:$0xff]
        %v2609 = vld [vmem:[%s2605 + $0x18] sm:$0xff]
        %v2610 = vld [vmem:[%s2605 + $0x20] sm:$0xff]
        %v2611 = vld [vmem:[%s2605 + $0x28] sm:$0xff]
        %v2612 = vld [vmem:[%s2605 + $0x30] sm:$0xff]
        %v2613 = vld [vmem:[%s2605 + $0x38] sm:$0xff]
        %v2614 = vld [vmem:[%s2605 + $0x40] sm:$0xff]
        %v2615 = vld [vmem:[%s2605 + $0x48] sm:$0xff]
        %v2616 = vld [vmem:[%s2605 + $0x50] sm:$0xff]
        %v2617 = vld [vmem:[%s2605 + $0x58] sm:$0xff]
        %v2618 = vld [vmem:[%s2605 + $0x60] sm:$0xff]
        %v2619 = vld [vmem:[%s2605 + $0x68] sm:$0xff]
        %v2620 = vld [vmem:[%s2605 + $0x70] sm:$0xff]
        %v2621 = vld [vmem:[%s2605 + $0x78] sm:$0xff]
        %v2622 = vld [vmem:[%s2605 + $0x80] sm:$0xff]
        %v2623 = vld [vmem:[%s2605 + $0x88] sm:$0xff]
        %v2624 = vld [vmem:[%s2605 + $0x90] sm:$0xff]
        %v2625 = vld [vmem:[%s2605 + $0x98] sm:$0xff]
        %v2626 = vld [vmem:[%s2605 + $0xa0] sm:$0xff]
        %v2627 = vld [vmem:[%s2605 + $0xa8] sm:$0xff]
        %v2628 = vld [vmem:[%s2605 + $0xb0] sm:$0xff]
        %v2629 = vld [vmem:[%s2605 + $0xb8] sm:$0xff]
        %v2630 = vld [vmem:[%s2605 + $0xc0] sm:$0xff]
        %v2631 = vld [vmem:[%s2605 + $0xc8] sm:$0xff]
        %v2632 = vld [vmem:[%s2605 + $0xd0] sm:$0xff]
        %v2633 = vld [vmem:[%s2605 + $0xd8] sm:$0xff]
        %v2634 = vld [vmem:[%s2605 + $0xe0] sm:$0xff]
        %v2635 = vld [vmem:[%s2605 + $0xe8] sm:$0xff]
        %v2636 = vld [vmem:[%s2605 + $0xf0] sm:$0xff]
        %v2637 = vld [vmem:[%s2605 + $0xf8] sm:$0xff]
        %v2670 = vunpack.c.l.b16 %v2606
        %v2671 = vunpack.c.h.b16 %v2606
        %v2672 = vunpack.c.l.b16 %v2607
        %v2673 = vunpack.c.h.b16 %v2607
        %v2674 = vunpack.c.l.b16 %v2608
        %v2675 = vunpack.c.h.b16 %v2608
        %v2676 = vunpack.c.l.b16 %v2609
        %v2677 = vunpack.c.h.b16 %v2609
        %v2678 = vunpack.c.l.b16 %v2610
        %v2679 = vunpack.c.h.b16 %v2610
        %v2680 = vunpack.c.l.b16 %v2611
        %v2681 = vunpack.c.h.b16 %v2611
        %v2682 = vunpack.c.l.b16 %v2612
        %v2683 = vunpack.c.h.b16 %v2612
        %v2684 = vunpack.c.l.b16 %v2613
        %v2685 = vunpack.c.h.b16 %v2613
        %v2686 = vunpack.c.l.b16 %v2614
        %v2687 = vunpack.c.h.b16 %v2614
        %v2688 = vunpack.c.l.b16 %v2615
        %v2689 = vunpack.c.h.b16 %v2615
        %v2690 = vunpack.c.l.b16 %v2616
        %v2691 = vunpack.c.h.b16 %v2616
        %v2692 = vunpack.c.l.b16 %v2617
        %v2693 = vunpack.c.h.b16 %v2617
        %v2694 = vunpack.c.l.b16 %v2618
        %v2695 = vunpack.c.h.b16 %v2618
        %v2696 = vunpack.c.l.b16 %v2619
        %v2697 = vunpack.c.h.b16 %v2619
        %v2698 = vunpack.c.l.b16 %v2620
        %v2699 = vunpack.c.h.b16 %v2620
        %v2700 = vunpack.c.l.b16 %v2621
        %v2701 = vunpack.c.h.b16 %v2621
        %v2702 = vunpack.c.l.b16 %v2622
        %v2703 = vunpack.c.h.b16 %v2622
        %v2704 = vunpack.c.l.b16 %v2623
        %v2705 = vunpack.c.h.b16 %v2623
        %v2706 = vunpack.c.l.b16 %v2624
        %v2707 = vunpack.c.h.b16 %v2624
        %v2708 = vunpack.c.l.b16 %v2625
        %v2709 = vunpack.c.h.b16 %v2625
        %v2710 = vunpack.c.l.b16 %v2626
        %v2711 = vunpack.c.h.b16 %v2626
        %v2712 = vunpack.c.l.b16 %v2627
        %v2713 = vunpack.c.h.b16 %v2627
        %v2714 = vunpack.c.l.b16 %v2628
        %v2715 = vunpack.c.h.b16 %v2628
        %v2716 = vunpack.c.l.b16 %v2629
        %v2717 = vunpack.c.h.b16 %v2629
        %v2718 = vunpack.c.l.b16 %v2630
        %v2719 = vunpack.c.h.b16 %v2630
        %v2720 = vunpack.c.l.b16 %v2631
        %v2721 = vunpack.c.h.b16 %v2631
        %v2722 = vunpack.c.l.b16 %v2632
        %v2723 = vunpack.c.h.b16 %v2632
        %v2724 = vunpack.c.l.b16 %v2633
        %v2725 = vunpack.c.h.b16 %v2633
        %v2726 = vunpack.c.l.b16 %v2634
        %v2727 = vunpack.c.h.b16 %v2634
        %v2728 = vunpack.c.l.b16 %v2635
        %v2729 = vunpack.c.h.b16 %v2635
        %v2730 = vunpack.c.l.b16 %v2636
        %v2731 = vunpack.c.h.b16 %v2636
        %v2732 = vunpack.c.l.b16 %v2637
        %v2733 = vunpack.c.h.b16 %v2637
        %v2734 = vpack.c.b16 %v2672, %v2670
        %v2735 = vpack.c.b16 %v2673, %v2671
        %v2736 = vpack.c.b16 %v2676, %v2674
        %v2737 = vpack.c.b16 %v2677, %v2675
        %v2738 = vpack.c.b16 %v2680, %v2678
        %v2739 = vpack.c.b16 %v2681, %v2679
        %v2740 = vpack.c.b16 %v2684, %v2682
        %v2741 = vpack.c.b16 %v2685, %v2683
        %v2742 = vpack.c.b16 %v2688, %v2686
        %v2743 = vpack.c.b16 %v2689, %v2687
        %v2744 = vpack.c.b16 %v2692, %v2690
        %v2745 = vpack.c.b16 %v2693, %v2691
        %v2746 = vpack.c.b16 %v2696, %v2694
        %v2747 = vpack.c.b16 %v2697, %v2695
        %v2748 = vpack.c.b16 %v2700, %v2698
        %v2749 = vpack.c.b16 %v2701, %v2699
        %v2750 = vpack.c.b16 %v2704, %v2702
        %v2751 = vpack.c.b16 %v2705, %v2703
        %v2752 = vpack.c.b16 %v2708, %v2706
        %v2753 = vpack.c.b16 %v2709, %v2707
        %v2754 = vpack.c.b16 %v2712, %v2710
        %v2755 = vpack.c.b16 %v2713, %v2711
        %v2756 = vpack.c.b16 %v2716, %v2714
        %v2757 = vpack.c.b16 %v2717, %v2715
        %v2758 = vpack.c.b16 %v2720, %v2718
        %v2759 = vpack.c.b16 %v2721, %v2719
        %v2760 = vpack.c.b16 %v2724, %v2722
        %v2761 = vpack.c.b16 %v2725, %v2723
        %v2762 = vpack.c.b16 %v2728, %v2726
        %v2763 = vpack.c.b16 %v2729, %v2727
        %v2764 = vpack.c.b16 %v2732, %v2730
        %v2765 = vpack.c.b16 %v2733, %v2731
        %2798 = vmatprep.subr.bf16.mxu0 %v2735
        %2799 = vmatpush1.bf16.msra.mxu0 %v2734
        %2800 = vmatprep.subr.bf16.mxu0 %v2737
        %2801 = vmatpush1.bf16.msra.mxu0 %v2736
        %2802 = vmatprep.subr.bf16.mxu0 %v2739
        %2803 = vmatpush1.bf16.msra.mxu0 %v2738
        %2804 = vmatprep.subr.bf16.mxu0 %v2741
        %2805 = vmatpush1.bf16.msra.mxu0 %v2740
        %2806 = vmatprep.subr.bf16.mxu0 %v2743
        %2807 = vmatpush1.bf16.msra.mxu0 %v2742
        %2808 = vmatprep.subr.bf16.mxu0 %v2745
        %2809 = vmatpush1.bf16.msra.mxu0 %v2744
        %2810 = vmatprep.subr.bf16.mxu0 %v2747
        %2811 = vmatpush1.bf16.msra.mxu0 %v2746
        %2812 = vmatprep.subr.bf16.mxu0 %v2749
        %2813 = vmatpush1.bf16.msra.mxu0 %v2748
        %2814 = vmatprep.subr.bf16.mxu0 %v2751
        %2815 = vmatpush1.bf16.msra.mxu0 %v2750
        %2816 = vmatprep.subr.bf16.mxu0 %v2753
        %2817 = vmatpush1.bf16.msra.mxu0 %v2752
        %2818 = vmatprep.subr.bf16.mxu0 %v2755
        %2819 = vmatpush1.bf16.msra.mxu0 %v2754
        %2820 = vmatprep.subr.bf16.mxu0 %v2757
        %2821 = vmatpush1.bf16.msra.mxu0 %v2756
        %2822 = vmatprep.subr.bf16.mxu0 %v2759
        %2823 = vmatpush1.bf16.msra.mxu0 %v2758
        %2824 = vmatprep.subr.bf16.mxu0 %v2761
        %2825 = vmatpush1.bf16.msra.mxu0 %v2760
        %2826 = vmatprep.subr.bf16.mxu0 %v2763
        %2827 = vmatpush1.bf16.msra.mxu0 %v2762
        %2828 = vmatprep.subr.bf16.mxu0 %v2765
        %2829 = vmatpush1.bf16.msra.mxu0 %v2764
        %2830 = vmatprep.mubr.bf16.mxu0 %v1647
        %2831 = vmatmul.mubr.bf16.gmra.mrb[0].mxu0 %v1646
        %v2832 = vpop.f32.mrb[0].mxu0
        %v2833 = vadd.f32 0.0, %v2832
        %v2834 = vpop.f32.mrb[0].mxu0
        %v2835 = vadd.f32 0.0, %v2834
        %v2836 = vpop.f32.mrb[0].mxu0
        %v2837 = vpop.f32.mrb[0].mxu0
        %2838 = vdwg.mxu0
        %v2839 = vadd.f32 %v2603, %v2833
        %v2840 = vadd.f32 %v2604, %v2835
        %s2841 = scalar_lea.vmem [#allocation13], 1280
        %v2842 = vld [vmem:[%s2841] sm:$0xff]
        %v2843 = vld [vmem:[%s2841 + $0x8] sm:$0xff]
        %v2844 = vld [vmem:[%s2841 + $0x10] sm:$0xff]
        %v2845 = vld [vmem:[%s2841 + $0x18] sm:$0xff]
        %v2846 = vld [vmem:[%s2841 + $0x20] sm:$0xff]
        %v2847 = vld [vmem:[%s2841 + $0x28] sm:$0xff]
        %v2848 = vld [vmem:[%s2841 + $0x30] sm:$0xff]
        %v2849 = vld [vmem:[%s2841 + $0x38] sm:$0xff]
        %v2850 = vld [vmem:[%s2841 + $0x40] sm:$0xff]
        %v2851 = vld [vmem:[%s2841 + $0x48] sm:$0xff]
        %v2852 = vld [vmem:[%s2841 + $0x50] sm:$0xff]
        %v2853 = vld [vmem:[%s2841 + $0x58] sm:$0xff]
        %v2854 = vld [vmem:[%s2841 + $0x60] sm:$0xff]
        %v2855 = vld [vmem:[%s2841 + $0x68] sm:$0xff]
        %v2856 = vld [vmem:[%s2841 + $0x70] sm:$0xff]
        %v2857 = vld [vmem:[%s2841 + $0x78] sm:$0xff]
        %v2858 = vld [vmem:[%s2841 + $0x80] sm:$0xff]
        %v2859 = vld [vmem:[%s2841 + $0x88] sm:$0xff]
        %v2860 = vld [vmem:[%s2841 + $0x90] sm:$0xff]
        %v2861 = vld [vmem:[%s2841 + $0x98] sm:$0xff]
        %v2862 = vld [vmem:[%s2841 + $0xa0] sm:$0xff]
        %v2863 = vld [vmem:[%s2841 + $0xa8] sm:$0xff]
        %v2864 = vld [vmem:[%s2841 + $0xb0] sm:$0xff]
        %v2865 = vld [vmem:[%s2841 + $0xb8] sm:$0xff]
        %v2866 = vld [vmem:[%s2841 + $0xc0] sm:$0xff]
        %v2867 = vld [vmem:[%s2841 + $0xc8] sm:$0xff]
        %v2868 = vld [vmem:[%s2841 + $0xd0] sm:$0xff]
        %v2869 = vld [vmem:[%s2841 + $0xd8] sm:$0xff]
        %v2870 = vld [vmem:[%s2841 + $0xe0] sm:$0xff]
        %v2871 = vld [vmem:[%s2841 + $0xe8] sm:$0xff]
        %v2872 = vld [vmem:[%s2841 + $0xf0] sm:$0xff]
        %v2873 = vld [vmem:[%s2841 + $0xf8] sm:$0xff]
        %v2876 = vrot.slane %v1646, 4
        %v2877 = vrot.slane %v1647, 4
        %v2912 = vunpack.c.l.b16 %v2842
        %v2913 = vunpack.c.h.b16 %v2842
        %v2914 = vunpack.c.l.b16 %v2843
        %v2915 = vunpack.c.h.b16 %v2843
        %v2916 = vunpack.c.l.b16 %v2844
        %v2917 = vunpack.c.h.b16 %v2844
        %v2918 = vunpack.c.l.b16 %v2845
        %v2919 = vunpack.c.h.b16 %v2845
        %v2920 = vunpack.c.l.b16 %v2846
        %v2921 = vunpack.c.h.b16 %v2846
        %v2922 = vunpack.c.l.b16 %v2847
        %v2923 = vunpack.c.h.b16 %v2847
        %v2924 = vunpack.c.l.b16 %v2848
        %v2925 = vunpack.c.h.b16 %v2848
        %v2926 = vunpack.c.l.b16 %v2849
        %v2927 = vunpack.c.h.b16 %v2849
        %v2928 = vunpack.c.l.b16 %v2850
        %v2929 = vunpack.c.h.b16 %v2850
        %v2930 = vunpack.c.l.b16 %v2851
        %v2931 = vunpack.c.h.b16 %v2851
        %v2932 = vunpack.c.l.b16 %v2852
        %v2933 = vunpack.c.h.b16 %v2852
        %v2934 = vunpack.c.l.b16 %v2853
        %v2935 = vunpack.c.h.b16 %v2853
        %v2936 = vunpack.c.l.b16 %v2854
        %v2937 = vunpack.c.h.b16 %v2854
        %v2938 = vunpack.c.l.b16 %v2855
        %v2939 = vunpack.c.h.b16 %v2855
        %v2940 = vunpack.c.l.b16 %v2856
        %v2941 = vunpack.c.h.b16 %v2856
        %v2942 = vunpack.c.l.b16 %v2857
        %v2943 = vunpack.c.h.b16 %v2857
        %v2944 = vunpack.c.l.b16 %v2858
        %v2945 = vunpack.c.h.b16 %v2858
        %v2946 = vunpack.c.l.b16 %v2859
        %v2947 = vunpack.c.h.b16 %v2859
        %v2948 = vunpack.c.l.b16 %v2860
        %v2949 = vunpack.c.h.b16 %v2860
        %v2950 = vunpack.c.l.b16 %v2861
        %v2951 = vunpack.c.h.b16 %v2861
        %v2952 = vunpack.c.l.b16 %v2862
        %v2953 = vunpack.c.h.b16 %v2862
        %v2954 = vunpack.c.l.b16 %v2863
        %v2955 = vunpack.c.h.b16 %v2863
        %v2956 = vunpack.c.l.b16 %v2864
        %v2957 = vunpack.c.h.b16 %v2864
        %v2958 = vunpack.c.l.b16 %v2865
        %v2959 = vunpack.c.h.b16 %v2865
        %v2960 = vunpack.c.l.b16 %v2866
        %v2961 = vunpack.c.h.b16 %v2866
        %v2962 = vunpack.c.l.b16 %v2867
        %v2963 = vunpack.c.h.b16 %v2867
        %v2964 = vunpack.c.l.b16 %v2868
        %v2965 = vunpack.c.h.b16 %v2868
        %v2966 = vunpack.c.l.b16 %v2869
        %v2967 = vunpack.c.h.b16 %v2869
        %v2968 = vunpack.c.l.b16 %v2870
        %v2969 = vunpack.c.h.b16 %v2870
        %v2970 = vunpack.c.l.b16 %v2871
        %v2971 = vunpack.c.h.b16 %v2871
        %v2972 = vunpack.c.l.b16 %v2872
        %v2973 = vunpack.c.h.b16 %v2872
        %v2974 = vunpack.c.l.b16 %v2873
        %v2975 = vunpack.c.h.b16 %v2873
        %v2976 = vpack.c.b16 %v2914, %v2912
        %v2977 = vpack.c.b16 %v2915, %v2913
        %v2978 = vpack.c.b16 %v2918, %v2916
        %v2979 = vpack.c.b16 %v2919, %v2917
        %v2980 = vpack.c.b16 %v2922, %v2920
        %v2981 = vpack.c.b16 %v2923, %v2921
        %v2982 = vpack.c.b16 %v2926, %v2924
        %v2983 = vpack.c.b16 %v2927, %v2925
        %v2984 = vpack.c.b16 %v2930, %v2928
        %v2985 = vpack.c.b16 %v2931, %v2929
        %v2986 = vpack.c.b16 %v2934, %v2932
        %v2987 = vpack.c.b16 %v2935, %v2933
        %v2988 = vpack.c.b16 %v2938, %v2936
        %v2989 = vpack.c.b16 %v2939, %v2937
        %v2990 = vpack.c.b16 %v2942, %v2940
        %v2991 = vpack.c.b16 %v2943, %v2941
        %v2992 = vpack.c.b16 %v2946, %v2944
        %v2993 = vpack.c.b16 %v2947, %v2945
        %v2994 = vpack.c.b16 %v2950, %v2948
        %v2995 = vpack.c.b16 %v2951, %v2949
        %v2996 = vpack.c.b16 %v2954, %v2952
        %v2997 = vpack.c.b16 %v2955, %v2953
        %v2998 = vpack.c.b16 %v2958, %v2956
        %v2999 = vpack.c.b16 %v2959, %v2957
        %v3000 = vpack.c.b16 %v2962, %v2960
        %v3001 = vpack.c.b16 %v2963, %v2961
        %v3002 = vpack.c.b16 %v2966, %v2964
        %v3003 = vpack.c.b16 %v2967, %v2965
        %v3004 = vpack.c.b16 %v2970, %v2968
        %v3005 = vpack.c.b16 %v2971, %v2969
        %v3006 = vpack.c.b16 %v2974, %v2972
        %v3007 = vpack.c.b16 %v2975, %v2973
        %3040 = vmatprep.subr.bf16.mxu0 %v2977
        %3041 = vmatpush1.bf16.msra.mxu0 %v2976
        %3042 = vmatprep.subr.bf16.mxu0 %v2979
        %3043 = vmatpush1.bf16.msra.mxu0 %v2978
        %3044 = vmatprep.subr.bf16.mxu0 %v2981
        %3045 = vmatpush1.bf16.msra.mxu0 %v2980
        %3046 = vmatprep.subr.bf16.mxu0 %v2983
        %3047 = vmatpush1.bf16.msra.mxu0 %v2982
        %3048 = vmatprep.subr.bf16.mxu0 %v2985
        %3049 = vmatpush1.bf16.msra.mxu0 %v2984
        %3050 = vmatprep.subr.bf16.mxu0 %v2987
        %3051 = vmatpush1.bf16.msra.mxu0 %v2986
        %3052 = vmatprep.subr.bf16.mxu0 %v2989
        %3053 = vmatpush1.bf16.msra.mxu0 %v2988
        %3054 = vmatprep.subr.bf16.mxu0 %v2991
        %3055 = vmatpush1.bf16.msra.mxu0 %v2990
        %3056 = vmatprep.subr.bf16.mxu0 %v2993
        %3057 = vmatpush1.bf16.msra.mxu0 %v2992
        %3058 = vmatprep.subr.bf16.mxu0 %v2995
        %3059 = vmatpush1.bf16.msra.mxu0 %v2994
        %3060 = vmatprep.subr.bf16.mxu0 %v2997
        %3061 = vmatpush1.bf16.msra.mxu0 %v2996
        %3062 = vmatprep.subr.bf16.mxu0 %v2999
        %3063 = vmatpush1.bf16.msra.mxu0 %v2998
        %3064 = vmatprep.subr.bf16.mxu0 %v3001
        %3065 = vmatpush1.bf16.msra.mxu0 %v3000
        %3066 = vmatprep.subr.bf16.mxu0 %v3003
        %3067 = vmatpush1.bf16.msra.mxu0 %v3002
        %3068 = vmatprep.subr.bf16.mxu0 %v3005
        %3069 = vmatpush1.bf16.msra.mxu0 %v3004
        %3070 = vmatprep.subr.bf16.mxu0 %v3007
        %3071 = vmatpush1.bf16.msra.mxu0 %v3006
        %3072 = vmatprep.mubr.bf16.mxu0 %v2877
        %3073 = vmatmul.mubr.bf16.gmra.mrb[0].mxu0 %v2876
        %v3074 = vpop.f32.mrb[0].mxu0
        %v3075 = vadd.f32 0.0, %v3074
        %v3076 = vpop.f32.mrb[0].mxu0
        %v3077 = vadd.f32 0.0, %v3076
        %v3078 = vpop.f32.mrb[0].mxu0
        %v3079 = vpop.f32.mrb[0].mxu0
        %3080 = vdwg.mxu0
        %v3081 = vadd.f32 %v2839, %v3075
        %v3082 = vadd.f32 %v2840, %v3077
        %s3083 = scalar_lea.vmem [#allocation13], 1536
        %v3084 = vld [vmem:[%s3083] sm:$0xff]
        %v3085 = vld [vmem:[%s3083 + $0x8] sm:$0xff]
        %v3086 = vld [vmem:[%s3083 + $0x10] sm:$0xff]
        %v3087 = vld [vmem:[%s3083 + $0x18] sm:$0xff]
        %v3088 = vld [vmem:[%s3083 + $0x20] sm:$0xff]
        %v3089 = vld [vmem:[%s3083 + $0x28] sm:$0xff]
        %v3090 = vld [vmem:[%s3083 + $0x30] sm:$0xff]
        %v3091 = vld [vmem:[%s3083 + $0x38] sm:$0xff]
        %v3092 = vld [vmem:[%s3083 + $0x40] sm:$0xff]
        %v3093 = vld [vmem:[%s3083 + $0x48] sm:$0xff]
        %v3094 = vld [vmem:[%s3083 + $0x50] sm:$0xff]
        %v3095 = vld [vmem:[%s3083 + $0x58] sm:$0xff]
        %v3096 = vld [vmem:[%s3083 + $0x60] sm:$0xff]
        %v3097 = vld [vmem:[%s3083 + $0x68] sm:$0xff]
        %v3098 = vld [vmem:[%s3083 + $0x70] sm:$0xff]
        %v3099 = vld [vmem:[%s3083 + $0x78] sm:$0xff]
        %v3100 = vld [vmem:[%s3083 + $0x80] sm:$0xff]
        %v3101 = vld [vmem:[%s3083 + $0x88] sm:$0xff]
        %v3102 = vld [vmem:[%s3083 + $0x90] sm:$0xff]
        %v3103 = vld [vmem:[%s3083 + $0x98] sm:$0xff]
        %v3104 = vld [vmem:[%s3083 + $0xa0] sm:$0xff]
        %v3105 = vld [vmem:[%s3083 + $0xa8] sm:$0xff]
        %v3106 = vld [vmem:[%s3083 + $0xb0] sm:$0xff]
        %v3107 = vld [vmem:[%s3083 + $0xb8] sm:$0xff]
        %v3108 = vld [vmem:[%s3083 + $0xc0] sm:$0xff]
        %v3109 = vld [vmem:[%s3083 + $0xc8] sm:$0xff]
        %v3110 = vld [vmem:[%s3083 + $0xd0] sm:$0xff]
        %v3111 = vld [vmem:[%s3083 + $0xd8] sm:$0xff]
        %v3112 = vld [vmem:[%s3083 + $0xe0] sm:$0xff]
        %v3113 = vld [vmem:[%s3083 + $0xe8] sm:$0xff]
        %v3114 = vld [vmem:[%s3083 + $0xf0] sm:$0xff]
        %v3115 = vld [vmem:[%s3083 + $0xf8] sm:$0xff]
        %v3148 = vunpack.c.l.b16 %v3084
        %v3149 = vunpack.c.h.b16 %v3084
        %v3150 = vunpack.c.l.b16 %v3085
        %v3151 = vunpack.c.h.b16 %v3085
        %v3152 = vunpack.c.l.b16 %v3086
        %v3153 = vunpack.c.h.b16 %v3086
        %v3154 = vunpack.c.l.b16 %v3087
        %v3155 = vunpack.c.h.b16 %v3087
        %v3156 = vunpack.c.l.b16 %v3088
        %v3157 = vunpack.c.h.b16 %v3088
        %v3158 = vunpack.c.l.b16 %v3089
        %v3159 = vunpack.c.h.b16 %v3089
        %v3160 = vunpack.c.l.b16 %v3090
        %v3161 = vunpack.c.h.b16 %v3090
        %v3162 = vunpack.c.l.b16 %v3091
        %v3163 = vunpack.c.h.b16 %v3091
        %v3164 = vunpack.c.l.b16 %v3092
        %v3165 = vunpack.c.h.b16 %v3092
        %v3166 = vunpack.c.l.b16 %v3093
        %v3167 = vunpack.c.h.b16 %v3093
        %v3168 = vunpack.c.l.b16 %v3094
        %v3169 = vunpack.c.h.b16 %v3094
        %v3170 = vunpack.c.l.b16 %v3095
        %v3171 = vunpack.c.h.b16 %v3095
        %v3172 = vunpack.c.l.b16 %v3096
        %v3173 = vunpack.c.h.b16 %v3096
        %v3174 = vunpack.c.l.b16 %v3097
        %v3175 = vunpack.c.h.b16 %v3097
        %v3176 = vunpack.c.l.b16 %v3098
        %v3177 = vunpack.c.h.b16 %v3098
        %v3178 = vunpack.c.l.b16 %v3099
        %v3179 = vunpack.c.h.b16 %v3099
        %v3180 = vunpack.c.l.b16 %v3100
        %v3181 = vunpack.c.h.b16 %v3100
        %v3182 = vunpack.c.l.b16 %v3101
        %v3183 = vunpack.c.h.b16 %v3101
        %v3184 = vunpack.c.l.b16 %v3102
        %v3185 = vunpack.c.h.b16 %v3102
        %v3186 = vunpack.c.l.b16 %v3103
        %v3187 = vunpack.c.h.b16 %v3103
        %v3188 = vunpack.c.l.b16 %v3104
        %v3189 = vunpack.c.h.b16 %v3104
        %v3190 = vunpack.c.l.b16 %v3105
        %v3191 = vunpack.c.h.b16 %v3105
        %v3192 = vunpack.c.l.b16 %v3106
        %v3193 = vunpack.c.h.b16 %v3106
        %v3194 = vunpack.c.l.b16 %v3107
        %v3195 = vunpack.c.h.b16 %v3107
        %v3196 = vunpack.c.l.b16 %v3108
        %v3197 = vunpack.c.h.b16 %v3108
        %v3198 = vunpack.c.l.b16 %v3109
        %v3199 = vunpack.c.h.b16 %v3109
        %v3200 = vunpack.c.l.b16 %v3110
        %v3201 = vunpack.c.h.b16 %v3110
        %v3202 = vunpack.c.l.b16 %v3111
        %v3203 = vunpack.c.h.b16 %v3111
        %v3204 = vunpack.c.l.b16 %v3112
        %v3205 = vunpack.c.h.b16 %v3112
        %v3206 = vunpack.c.l.b16 %v3113
        %v3207 = vunpack.c.h.b16 %v3113
        %v3208 = vunpack.c.l.b16 %v3114
        %v3209 = vunpack.c.h.b16 %v3114
        %v3210 = vunpack.c.l.b16 %v3115
        %v3211 = vunpack.c.h.b16 %v3115
        %v3212 = vpack.c.b16 %v3150, %v3148
        %v3213 = vpack.c.b16 %v3151, %v3149
        %v3214 = vpack.c.b16 %v3154, %v3152
        %v3215 = vpack.c.b16 %v3155, %v3153
        %v3216 = vpack.c.b16 %v3158, %v3156
        %v3217 = vpack.c.b16 %v3159, %v3157
        %v3218 = vpack.c.b16 %v3162, %v3160
        %v3219 = vpack.c.b16 %v3163, %v3161
        %v3220 = vpack.c.b16 %v3166, %v3164
        %v3221 = vpack.c.b16 %v3167, %v3165
        %v3222 = vpack.c.b16 %v3170, %v3168
        %v3223 = vpack.c.b16 %v3171, %v3169
        %v3224 = vpack.c.b16 %v3174, %v3172
        %v3225 = vpack.c.b16 %v3175, %v3173
        %v3226 = vpack.c.b16 %v3178, %v3176
        %v3227 = vpack.c.b16 %v3179, %v3177
        %v3228 = vpack.c.b16 %v3182, %v3180
        %v3229 = vpack.c.b16 %v3183, %v3181
        %v3230 = vpack.c.b16 %v3186, %v3184
        %v3231 = vpack.c.b16 %v3187, %v3185
        %v3232 = vpack.c.b16 %v3190, %v3188
        %v3233 = vpack.c.b16 %v3191, %v3189
        %v3234 = vpack.c.b16 %v3194, %v3192
        %v3235 = vpack.c.b16 %v3195, %v3193
        %v3236 = vpack.c.b16 %v3198, %v3196
        %v3237 = vpack.c.b16 %v3199, %v3197
        %v3238 = vpack.c.b16 %v3202, %v3200
        %v3239 = vpack.c.b16 %v3203, %v3201
        %v3240 = vpack.c.b16 %v3206, %v3204
        %v3241 = vpack.c.b16 %v3207, %v3205
        %v3242 = vpack.c.b16 %v3210, %v3208
        %v3243 = vpack.c.b16 %v3211, %v3209
        %3276 = vmatprep.subr.bf16.mxu0 %v3213
        %3277 = vmatpush1.bf16.msra.mxu0 %v3212
        %3278 = vmatprep.subr.bf16.mxu0 %v3215
        %3279 = vmatpush1.bf16.msra.mxu0 %v3214
        %3280 = vmatprep.subr.bf16.mxu0 %v3217
        %3281 = vmatpush1.bf16.msra.mxu0 %v3216
        %3282 = vmatprep.subr.bf16.mxu0 %v3219
        %3283 = vmatpush1.bf16.msra.mxu0 %v3218
        %3284 = vmatprep.subr.bf16.mxu0 %v3221
        %3285 = vmatpush1.bf16.msra.mxu0 %v3220
        %3286 = vmatprep.subr.bf16.mxu0 %v3223
        %3287 = vmatpush1.bf16.msra.mxu0 %v3222
        %3288 = vmatprep.subr.bf16.mxu0 %v3225
        %3289 = vmatpush1.bf16.msra.mxu0 %v3224
        %3290 = vmatprep.subr.bf16.mxu0 %v3227
        %3291 = vmatpush1.bf16.msra.mxu0 %v3226
        %3292 = vmatprep.subr.bf16.mxu0 %v3229
        %3293 = vmatpush1.bf16.msra.mxu0 %v3228
        %3294 = vmatprep.subr.bf16.mxu0 %v3231
        %3295 = vmatpush1.bf16.msra.mxu0 %v3230
        %3296 = vmatprep.subr.bf16.mxu0 %v3233
        %3297 = vmatpush1.bf16.msra.mxu0 %v3232
        %3298 = vmatprep.subr.bf16.mxu0 %v3235
        %3299 = vmatpush1.bf16.msra.mxu0 %v3234
        %3300 = vmatprep.subr.bf16.mxu0 %v3237
        %3301 = vmatpush1.bf16.msra.mxu0 %v3236
        %3302 = vmatprep.subr.bf16.mxu0 %v3239
        %3303 = vmatpush1.bf16.msra.mxu0 %v3238
        %3304 = vmatprep.subr.bf16.mxu0 %v3241
        %3305 = vmatpush1.bf16.msra.mxu0 %v3240
        %3306 = vmatprep.subr.bf16.mxu0 %v3243
        %3307 = vmatpush1.bf16.msra.mxu0 %v3242
        %3308 = vmatprep.mubr.bf16.mxu0 %v1649
        %3309 = vmatmul.mubr.bf16.gmra.mrb[0].mxu0 %v1648
        %v3310 = vpop.f32.mrb[0].mxu0
        %v3311 = vadd.f32 0.0, %v3310
        %v3312 = vpop.f32.mrb[0].mxu0
        %v3313 = vadd.f32 0.0, %v3312
        %v3314 = vpop.f32.mrb[0].mxu0
        %v3315 = vpop.f32.mrb[0].mxu0
        %3316 = vdwg.mxu0
        %v3317 = vadd.f32 %v3081, %v3311
        %v3318 = vadd.f32 %v3082, %v3313
        %s3319 = scalar_lea.vmem [#allocation13], 1792
        %v3320 = vld [vmem:[%s3319] sm:$0xff]
        %v3321 = vld [vmem:[%s3319 + $0x8] sm:$0xff]
        %v3322 = vld [vmem:[%s3319 + $0x10] sm:$0xff]
        %v3323 = vld [vmem:[%s3319 + $0x18] sm:$0xff]
        %v3324 = vld [vmem:[%s3319 + $0x20] sm:$0xff]
        %v3325 = vld [vmem:[%s3319 + $0x28] sm:$0xff]
        %v3326 = vld [vmem:[%s3319 + $0x30] sm:$0xff]
        %v3327 = vld [vmem:[%s3319 + $0x38] sm:$0xff]
        %v3328 = vld [vmem:[%s3319 + $0x40] sm:$0xff]
        %v3329 = vld [vmem:[%s3319 + $0x48] sm:$0xff]
        %v3330 = vld [vmem:[%s3319 + $0x50] sm:$0xff]
        %v3331 = vld [vmem:[%s3319 + $0x58] sm:$0xff]
        %v3332 = vld [vmem:[%s3319 + $0x60] sm:$0xff]
        %v3333 = vld [vmem:[%s3319 + $0x68] sm:$0xff]
        %v3334 = vld [vmem:[%s3319 + $0x70] sm:$0xff]
        %v3335 = vld [vmem:[%s3319 + $0x78] sm:$0xff]
        %v3336 = vld [vmem:[%s3319 + $0x80] sm:$0xff]
        %v3337 = vld [vmem:[%s3319 + $0x88] sm:$0xff]
        %v3338 = vld [vmem:[%s3319 + $0x90] sm:$0xff]
        %v3339 = vld [vmem:[%s3319 + $0x98] sm:$0xff]
        %v3340 = vld [vmem:[%s3319 + $0xa0] sm:$0xff]
        %v3341 = vld [vmem:[%s3319 + $0xa8] sm:$0xff]
        %v3342 = vld [vmem:[%s3319 + $0xb0] sm:$0xff]
        %v3343 = vld [vmem:[%s3319 + $0xb8] sm:$0xff]
        %v3344 = vld [vmem:[%s3319 + $0xc0] sm:$0xff]
        %v3345 = vld [vmem:[%s3319 + $0xc8] sm:$0xff]
        %v3346 = vld [vmem:[%s3319 + $0xd0] sm:$0xff]
        %v3347 = vld [vmem:[%s3319 + $0xd8] sm:$0xff]
        %v3348 = vld [vmem:[%s3319 + $0xe0] sm:$0xff]
        %v3349 = vld [vmem:[%s3319 + $0xe8] sm:$0xff]
        %v3350 = vld [vmem:[%s3319 + $0xf0] sm:$0xff]
        %v3351 = vld [vmem:[%s3319 + $0xf8] sm:$0xff]
        %v3354 = vrot.slane %v1648, 4
        %v3355 = vrot.slane %v1649, 4
        %v3390 = vunpack.c.l.b16 %v3320
        %v3391 = vunpack.c.h.b16 %v3320
        %v3392 = vunpack.c.l.b16 %v3321
        %v3393 = vunpack.c.h.b16 %v3321
        %v3394 = vunpack.c.l.b16 %v3322
        %v3395 = vunpack.c.h.b16 %v3322
        %v3396 = vunpack.c.l.b16 %v3323
        %v3397 = vunpack.c.h.b16 %v3323
        %v3398 = vunpack.c.l.b16 %v3324
        %v3399 = vunpack.c.h.b16 %v3324
        %v3400 = vunpack.c.l.b16 %v3325
        %v3401 = vunpack.c.h.b16 %v3325
        %v3402 = vunpack.c.l.b16 %v3326
        %v3403 = vunpack.c.h.b16 %v3326
        %v3404 = vunpack.c.l.b16 %v3327
        %v3405 = vunpack.c.h.b16 %v3327
        %v3406 = vunpack.c.l.b16 %v3328
        %v3407 = vunpack.c.h.b16 %v3328
        %v3408 = vunpack.c.l.b16 %v3329
        %v3409 = vunpack.c.h.b16 %v3329
        %v3410 = vunpack.c.l.b16 %v3330
        %v3411 = vunpack.c.h.b16 %v3330
        %v3412 = vunpack.c.l.b16 %v3331
        %v3413 = vunpack.c.h.b16 %v3331
        %v3414 = vunpack.c.l.b16 %v3332
        %v3415 = vunpack.c.h.b16 %v3332
        %v3416 = vunpack.c.l.b16 %v3333
        %v3417 = vunpack.c.h.b16 %v3333
        %v3418 = vunpack.c.l.b16 %v3334
        %v3419 = vunpack.c.h.b16 %v3334
        %v3420 = vunpack.c.l.b16 %v3335
        %v3421 = vunpack.c.h.b16 %v3335
        %v3422 = vunpack.c.l.b16 %v3336
        %v3423 = vunpack.c.h.b16 %v3336
        %v3424 = vunpack.c.l.b16 %v3337
        %v3425 = vunpack.c.h.b16 %v3337
        %v3426 = vunpack.c.l.b16 %v3338
        %v3427 = vunpack.c.h.b16 %v3338
        %v3428 = vunpack.c.l.b16 %v3339
        %v3429 = vunpack.c.h.b16 %v3339
        %v3430 = vunpack.c.l.b16 %v3340
        %v3431 = vunpack.c.h.b16 %v3340
        %v3432 = vunpack.c.l.b16 %v3341
        %v3433 = vunpack.c.h.b16 %v3341
        %v3434 = vunpack.c.l.b16 %v3342
        %v3435 = vunpack.c.h.b16 %v3342
        %v3436 = vunpack.c.l.b16 %v3343
        %v3437 = vunpack.c.h.b16 %v3343
        %v3438 = vunpack.c.l.b16 %v3344
        %v3439 = vunpack.c.h.b16 %v3344
        %v3440 = vunpack.c.l.b16 %v3345
        %v3441 = vunpack.c.h.b16 %v3345
        %v3442 = vunpack.c.l.b16 %v3346
        %v3443 = vunpack.c.h.b16 %v3346
        %v3444 = vunpack.c.l.b16 %v3347
        %v3445 = vunpack.c.h.b16 %v3347
        %v3446 = vunpack.c.l.b16 %v3348
        %v3447 = vunpack.c.h.b16 %v3348
        %v3448 = vunpack.c.l.b16 %v3349
        %v3449 = vunpack.c.h.b16 %v3349
        %v3450 = vunpack.c.l.b16 %v3350
        %v3451 = vunpack.c.h.b16 %v3350
        %v3452 = vunpack.c.l.b16 %v3351
        %v3453 = vunpack.c.h.b16 %v3351
        %v3454 = vpack.c.b16 %v3392, %v3390
        %v3455 = vpack.c.b16 %v3393, %v3391
        %v3456 = vpack.c.b16 %v3396, %v3394
        %v3457 = vpack.c.b16 %v3397, %v3395
        %v3458 = vpack.c.b16 %v3400, %v3398
        %v3459 = vpack.c.b16 %v3401, %v3399
        %v3460 = vpack.c.b16 %v3404, %v3402
        %v3461 = vpack.c.b16 %v3405, %v3403
        %v3462 = vpack.c.b16 %v3408, %v3406
        %v3463 = vpack.c.b16 %v3409, %v3407
        %v3464 = vpack.c.b16 %v3412, %v3410
        %v3465 = vpack.c.b16 %v3413, %v3411
        %v3466 = vpack.c.b16 %v3416, %v3414
        %v3467 = vpack.c.b16 %v3417, %v3415
        %v3468 = vpack.c.b16 %v3420, %v3418
        %v3469 = vpack.c.b16 %v3421, %v3419
        %v3470 = vpack.c.b16 %v3424, %v3422
        %v3471 = vpack.c.b16 %v3425, %v3423
        %v3472 = vpack.c.b16 %v3428, %v3426
        %v3473 = vpack.c.b16 %v3429, %v3427
        %v3474 = vpack.c.b16 %v3432, %v3430
        %v3475 = vpack.c.b16 %v3433, %v3431
        %v3476 = vpack.c.b16 %v3436, %v3434
        %v3477 = vpack.c.b16 %v3437, %v3435
        %v3478 = vpack.c.b16 %v3440, %v3438
        %v3479 = vpack.c.b16 %v3441, %v3439
        %v3480 = vpack.c.b16 %v3444, %v3442
        %v3481 = vpack.c.b16 %v3445, %v3443
        %v3482 = vpack.c.b16 %v3448, %v3446
        %v3483 = vpack.c.b16 %v3449, %v3447
        %v3484 = vpack.c.b16 %v3452, %v3450
        %v3485 = vpack.c.b16 %v3453, %v3451
        %3518 = vmatprep.subr.bf16.mxu0 %v3455
        %3519 = vmatpush1.bf16.msra.mxu0 %v3454
        %3520 = vmatprep.subr.bf16.mxu0 %v3457
        %3521 = vmatpush1.bf16.msra.mxu0 %v3456
        %3522 = vmatprep.subr.bf16.mxu0 %v3459
        %3523 = vmatpush1.bf16.msra.mxu0 %v3458
        %3524 = vmatprep.subr.bf16.mxu0 %v3461
        %3525 = vmatpush1.bf16.msra.mxu0 %v3460
        %3526 = vmatprep.subr.bf16.mxu0 %v3463
        %3527 = vmatpush1.bf16.msra.mxu0 %v3462
        %3528 = vmatprep.subr.bf16.mxu0 %v3465
        %3529 = vmatpush1.bf16.msra.mxu0 %v3464
        %3530 = vmatprep.subr.bf16.mxu0 %v3467
        %3531 = vmatpush1.bf16.msra.mxu0 %v3466
        %3532 = vmatprep.subr.bf16.mxu0 %v3469
        %3533 = vmatpush1.bf16.msra.mxu0 %v3468
        %3534 = vmatprep.subr.bf16.mxu0 %v3471
        %3535 = vmatpush1.bf16.msra.mxu0 %v3470
        %3536 = vmatprep.subr.bf16.mxu0 %v3473
        %3537 = vmatpush1.bf16.msra.mxu0 %v3472
        %3538 = vmatprep.subr.bf16.mxu0 %v3475
        %3539 = vmatpush1.bf16.msra.mxu0 %v3474
        %3540 = vmatprep.subr.bf16.mxu0 %v3477
        %3541 = vmatpush1.bf16.msra.mxu0 %v3476
        %3542 = vmatprep.subr.bf16.mxu0 %v3479
        %3543 = vmatpush1.bf16.msra.mxu0 %v3478
        %3544 = vmatprep.subr.bf16.mxu0 %v3481
        %3545 = vmatpush1.bf16.msra.mxu0 %v3480
        %3546 = vmatprep.subr.bf16.mxu0 %v3483
        %3547 = vmatpush1.bf16.msra.mxu0 %v3482
        %3548 = vmatprep.subr.bf16.mxu0 %v3485
        %3549 = vmatpush1.bf16.msra.mxu0 %v3484
        %3550 = vmatprep.mubr.bf16.mxu0 %v3355
        %3551 = vmatmul.mubr.bf16.gmra.mrb[0].mxu0 %v3354
        %v3552 = vpop.f32.mrb[0].mxu0
        %v3553 = vadd.f32 0.0, %v3552
        %v3554 = vpop.f32.mrb[0].mxu0
        %v3555 = vadd.f32 0.0, %v3554
        %v3556 = vpop.f32.mrb[0].mxu0
        %v3557 = vpop.f32.mrb[0].mxu0
        %3558 = vdwg.mxu0
        %v3559 = vadd.f32 %v3317, %v3553
        %v3560 = vadd.f32 %v3318, %v3555
        %s3561 = scalar_lea.vmem [#allocation13], 2048
        %v3562 = vld [vmem:[%s3561] sm:$0xff]
        %v3563 = vld [vmem:[%s3561 + $0x8] sm:$0xff]
        %v3564 = vld [vmem:[%s3561 + $0x10] sm:$0xff]
        %v3565 = vld [vmem:[%s3561 + $0x18] sm:$0xff]
        %v3566 = vld [vmem:[%s3561 + $0x20] sm:$0xff]
        %v3567 = vld [vmem:[%s3561 + $0x28] sm:$0xff]
        %v3568 = vld [vmem:[%s3561 + $0x30] sm:$0xff]
        %v3569 = vld [vmem:[%s3561 + $0x38] sm:$0xff]
        %v3570 = vld [vmem:[%s3561 + $0x40] sm:$0xff]
        %v3571 = vld [vmem:[%s3561 + $0x48] sm:$0xff]
        %v3572 = vld [vmem:[%s3561 + $0x50] sm:$0xff]
        %v3573 = vld [vmem:[%s3561 + $0x58] sm:$0xff]
        %v3574 = vld [vmem:[%s3561 + $0x60] sm:$0xff]
        %v3575 = vld [vmem:[%s3561 + $0x68] sm:$0xff]
        %v3576 = vld [vmem:[%s3561 + $0x70] sm:$0xff]
        %v3577 = vld [vmem:[%s3561 + $0x78] sm:$0xff]
        %v3578 = vld [vmem:[%s3561 + $0x80] sm:$0xff]
        %v3579 = vld [vmem:[%s3561 + $0x88] sm:$0xff]
        %v3580 = vld [vmem:[%s3561 + $0x90] sm:$0xff]
        %v3581 = vld [vmem:[%s3561 + $0x98] sm:$0xff]
        %v3582 = vld [vmem:[%s3561 + $0xa0] sm:$0xff]
        %v3583 = vld [vmem:[%s3561 + $0xa8] sm:$0xff]
        %v3584 = vld [vmem:[%s3561 + $0xb0] sm:$0xff]
        %v3585 = vld [vmem:[%s3561 + $0xb8] sm:$0xff]
        %v3586 = vld [vmem:[%s3561 + $0xc0] sm:$0xff]
        %v3587 = vld [vmem:[%s3561 + $0xc8] sm:$0xff]
        %v3588 = vld [vmem:[%s3561 + $0xd0] sm:$0xff]
        %v3589 = vld [vmem:[%s3561 + $0xd8] sm:$0xff]
        %v3590 = vld [vmem:[%s3561 + $0xe0] sm:$0xff]
        %v3591 = vld [vmem:[%s3561 + $0xe8] sm:$0xff]
        %v3592 = vld [vmem:[%s3561 + $0xf0] sm:$0xff]
        %v3593 = vld [vmem:[%s3561 + $0xf8] sm:$0xff]
        %v3626 = vunpack.c.l.b16 %v3562
        %v3627 = vunpack.c.h.b16 %v3562
        %v3628 = vunpack.c.l.b16 %v3563
        %v3629 = vunpack.c.h.b16 %v3563
        %v3630 = vunpack.c.l.b16 %v3564
        %v3631 = vunpack.c.h.b16 %v3564
        %v3632 = vunpack.c.l.b16 %v3565
        %v3633 = vunpack.c.h.b16 %v3565
        %v3634 = vunpack.c.l.b16 %v3566
        %v3635 = vunpack.c.h.b16 %v3566
        %v3636 = vunpack.c.l.b16 %v3567
        %v3637 = vunpack.c.h.b16 %v3567
        %v3638 = vunpack.c.l.b16 %v3568
        %v3639 = vunpack.c.h.b16 %v3568
        %v3640 = vunpack.c.l.b16 %v3569
        %v3641 = vunpack.c.h.b16 %v3569
        %v3642 = vunpack.c.l.b16 %v3570
        %v3643 = vunpack.c.h.b16 %v3570
        %v3644 = vunpack.c.l.b16 %v3571
        %v3645 = vunpack.c.h.b16 %v3571
        %v3646 = vunpack.c.l.b16 %v3572
        %v3647 = vunpack.c.h.b16 %v3572
        %v3648 = vunpack.c.l.b16 %v3573
        %v3649 = vunpack.c.h.b16 %v3573
        %v3650 = vunpack.c.l.b16 %v3574
        %v3651 = vunpack.c.h.b16 %v3574
        %v3652 = vunpack.c.l.b16 %v3575
        %v3653 = vunpack.c.h.b16 %v3575
        %v3654 = vunpack.c.l.b16 %v3576
        %v3655 = vunpack.c.h.b16 %v3576
        %v3656 = vunpack.c.l.b16 %v3577
        %v3657 = vunpack.c.h.b16 %v3577
        %v3658 = vunpack.c.l.b16 %v3578
        %v3659 = vunpack.c.h.b16 %v3578
        %v3660 = vunpack.c.l.b16 %v3579
        %v3661 = vunpack.c.h.b16 %v3579
        %v3662 = vunpack.c.l.b16 %v3580
        %v3663 = vunpack.c.h.b16 %v3580
        %v3664 = vunpack.c.l.b16 %v3581
        %v3665 = vunpack.c.h.b16 %v3581
        %v3666 = vunpack.c.l.b16 %v3582
        %v3667 = vunpack.c.h.b16 %v3582
        %v3668 = vunpack.c.l.b16 %v3583
        %v3669 = vunpack.c.h.b16 %v3583
        %v3670 = vunpack.c.l.b16 %v3584
        %v3671 = vunpack.c.h.b16 %v3584
        %v3672 = vunpack.c.l.b16 %v3585
        %v3673 = vunpack.c.h.b16 %v3585
        %v3674 = vunpack.c.l.b16 %v3586
        %v3675 = vunpack.c.h.b16 %v3586
        %v3676 = vunpack.c.l.b16 %v3587
        %v3677 = vunpack.c.h.b16 %v3587
        %v3678 = vunpack.c.l.b16 %v3588
        %v3679 = vunpack.c.h.b16 %v3588
        %v3680 = vunpack.c.l.b16 %v3589
        %v3681 = vunpack.c.h.b16 %v3589
        %v3682 = vunpack.c.l.b16 %v3590
        %v3683 = vunpack.c.h.b16 %v3590
        %v3684 = vunpack.c.l.b16 %v3591
        %v3685 = vunpack.c.h.b16 %v3591
        %v3686 = vunpack.c.l.b16 %v3592
        %v3687 = vunpack.c.h.b16 %v3592
        %v3688 = vunpack.c.l.b16 %v3593
        %v3689 = vunpack.c.h.b16 %v3593
        %v3690 = vpack.c.b16 %v3628, %v3626
        %v3691 = vpack.c.b16 %v3629, %v3627
        %v3692 = vpack.c.b16 %v3632, %v3630
        %v3693 = vpack.c.b16 %v3633, %v3631
        %v3694 = vpack.c.b16 %v3636, %v3634
        %v3695 = vpack.c.b16 %v3637, %v3635
        %v3696 = vpack.c.b16 %v3640, %v3638
        %v3697 = vpack.c.b16 %v3641, %v3639
        %v3698 = vpack.c.b16 %v3644, %v3642
        %v3699 = vpack.c.b16 %v3645, %v3643
        %v3700 = vpack.c.b16 %v3648, %v3646
        %v3701 = vpack.c.b16 %v3649, %v3647
        %v3702 = vpack.c.b16 %v3652, %v3650
        %v3703 = vpack.c.b16 %v3653, %v3651
        %v3704 = vpack.c.b16 %v3656, %v3654
        %v3705 = vpack.c.b16 %v3657, %v3655
        %v3706 = vpack.c.b16 %v3660, %v3658
        %v3707 = vpack.c.b16 %v3661, %v3659
        %v3708 = vpack.c.b16 %v3664, %v3662
        %v3709 = vpack.c.b16 %v3665, %v3663
        %v3710 = vpack.c.b16 %v3668, %v3666
        %v3711 = vpack.c.b16 %v3669, %v3667
        %v3712 = vpack.c.b16 %v3672, %v3670
        %v3713 = vpack.c.b16 %v3673, %v3671
        %v3714 = vpack.c.b16 %v3676, %v3674
        %v3715 = vpack.c.b16 %v3677, %v3675
        %v3716 = vpack.c.b16 %v3680, %v3678
        %v3717 = vpack.c.b16 %v3681, %v3679
        %v3718 = vpack.c.b16 %v3684, %v3682
        %v3719 = vpack.c.b16 %v3685, %v3683
        %v3720 = vpack.c.b16 %v3688, %v3686
        %v3721 = vpack.c.b16 %v3689, %v3687
        %3754 = vmatprep.subr.bf16.mxu0 %v3691
        %3755 = vmatpush1.bf16.msra.mxu0 %v3690
        %3756 = vmatprep.subr.bf16.mxu0 %v3693
        %3757 = vmatpush1.bf16.msra.mxu0 %v3692
        %3758 = vmatprep.subr.bf16.mxu0 %v3695
        %3759 = vmatpush1.bf16.msra.mxu0 %v3694
        %3760 = vmatprep.subr.bf16.mxu0 %v3697
        %3761 = vmatpush1.bf16.msra.mxu0 %v3696
        %3762 = vmatprep.subr.bf16.mxu0 %v3699
        %3763 = vmatpush1.bf16.msra.mxu0 %v3698
        %3764 = vmatprep.subr.bf16.mxu0 %v3701
        %3765 = vmatpush1.bf16.msra.mxu0 %v3700
        %3766 = vmatprep.subr.bf16.mxu0 %v3703
        %3767 = vmatpush1.bf16.msra.mxu0 %v3702
        %3768 = vmatprep.subr.bf16.mxu0 %v3705
        %3769 = vmatpush1.bf16.msra.mxu0 %v3704
        %3770 = vmatprep.subr.bf16.mxu0 %v3707
        %3771 = vmatpush1.bf16.msra.mxu0 %v3706
        %3772 = vmatprep.subr.bf16.mxu0 %v3709
        %3773 = vmatpush1.bf16.msra.mxu0 %v3708
        %3774 = vmatprep.subr.bf16.mxu0 %v3711
        %3775 = vmatpush1.bf16.msra.mxu0 %v3710
        %3776 = vmatprep.subr.bf16.mxu0 %v3713
        %3777 = vmatpush1.bf16.msra.mxu0 %v3712
        %3778 = vmatprep.subr.bf16.mxu0 %v3715
        %3779 = vmatpush1.bf16.msra.mxu0 %v3714
        %3780 = vmatprep.subr.bf16.mxu0 %v3717
        %3781 = vmatpush1.bf16.msra.mxu0 %v3716
        %3782 = vmatprep.subr.bf16.mxu0 %v3719
        %3783 = vmatpush1.bf16.msra.mxu0 %v3718
        %3784 = vmatprep.subr.bf16.mxu0 %v3721
        %3785 = vmatpush1.bf16.msra.mxu0 %v3720
        %3786 = vmatprep.mubr.bf16.mxu0 %v1651
        %3787 = vmatmul.mubr.bf16.gmra.mrb[0].mxu0 %v1650
        %v3788 = vpop.f32.mrb[0].mxu0
        %v3789 = vadd.f32 0.0, %v3788
        %v3790 = vpop.f32.mrb[0].mxu0
        %v3791 = vadd.f32 0.0, %v3790
        %v3792 = vpop.f32.mrb[0].mxu0
        %v3793 = vpop.f32.mrb[0].mxu0
        %3794 = vdwg.mxu0
        %v3795 = vadd.f32 %v3559, %v3789
        %v3796 = vadd.f32 %v3560, %v3791
        %s3797 = scalar_lea.vmem [#allocation13], 2304
        %v3798 = vld [vmem:[%s3797] sm:$0xff]
        %v3799 = vld [vmem:[%s3797 + $0x8] sm:$0xff]
        %v3800 = vld [vmem:[%s3797 + $0x10] sm:$0xff]
        %v3801 = vld [vmem:[%s3797 + $0x18] sm:$0xff]
        %v3802 = vld [vmem:[%s3797 + $0x20] sm:$0xff]
        %v3803 = vld [vmem:[%s3797 + $0x28] sm:$0xff]
        %v3804 = vld [vmem:[%s3797 + $0x30] sm:$0xff]
        %v3805 = vld [vmem:[%s3797 + $0x38] sm:$0xff]
        %v3806 = vld [vmem:[%s3797 + $0x40] sm:$0xff]
        %v3807 = vld [vmem:[%s3797 + $0x48] sm:$0xff]
        %v3808 = vld [vmem:[%s3797 + $0x50] sm:$0xff]
        %v3809 = vld [vmem:[%s3797 + $0x58] sm:$0xff]
        %v3810 = vld [vmem:[%s3797 + $0x60] sm:$0xff]
        %v3811 = vld [vmem:[%s3797 + $0x68] sm:$0xff]
        %v3812 = vld [vmem:[%s3797 + $0x70] sm:$0xff]
        %v3813 = vld [vmem:[%s3797 + $0x78] sm:$0xff]
        %v3814 = vld [vmem:[%s3797 + $0x80] sm:$0xff]
        %v3815 = vld [vmem:[%s3797 + $0x88] sm:$0xff]
        %v3816 = vld [vmem:[%s3797 + $0x90] sm:$0xff]
        %v3817 = vld [vmem:[%s3797 + $0x98] sm:$0xff]
        %v3818 = vld [vmem:[%s3797 + $0xa0] sm:$0xff]
        %v3819 = vld [vmem:[%s3797 + $0xa8] sm:$0xff]
        %v3820 = vld [vmem:[%s3797 + $0xb0] sm:$0xff]
        %v3821 = vld [vmem:[%s3797 + $0xb8] sm:$0xff]
        %v3822 = vld [vmem:[%s3797 + $0xc0] sm:$0xff]
        %v3823 = vld [vmem:[%s3797 + $0xc8] sm:$0xff]
        %v3824 = vld [vmem:[%s3797 + $0xd0] sm:$0xff]
        %v3825 = vld [vmem:[%s3797 + $0xd8] sm:$0xff]
        %v3826 = vld [vmem:[%s3797 + $0xe0] sm:$0xff]
        %v3827 = vld [vmem:[%s3797 + $0xe8] sm:$0xff]
        %v3828 = vld [vmem:[%s3797 + $0xf0] sm:$0xff]
        %v3829 = vld [vmem:[%s3797 + $0xf8] sm:$0xff]
        %v3832 = vrot.slane %v1650, 4
        %v3833 = vrot.slane %v1651, 4
        %v3868 = vunpack.c.l.b16 %v3798
        %v3869 = vunpack.c.h.b16 %v3798
        %v3870 = vunpack.c.l.b16 %v3799
        %v3871 = vunpack.c.h.b16 %v3799
        %v3872 = vunpack.c.l.b16 %v3800
        %v3873 = vunpack.c.h.b16 %v3800
        %v3874 = vunpack.c.l.b16 %v3801
        %v3875 = vunpack.c.h.b16 %v3801
        %v3876 = vunpack.c.l.b16 %v3802
        %v3877 = vunpack.c.h.b16 %v3802
        %v3878 = vunpack.c.l.b16 %v3803
        %v3879 = vunpack.c.h.b16 %v3803
        %v3880 = vunpack.c.l.b16 %v3804
        %v3881 = vunpack.c.h.b16 %v3804
        %v3882 = vunpack.c.l.b16 %v3805
        %v3883 = vunpack.c.h.b16 %v3805
        %v3884 = vunpack.c.l.b16 %v3806
        %v3885 = vunpack.c.h.b16 %v3806
        %v3886 = vunpack.c.l.b16 %v3807
        %v3887 = vunpack.c.h.b16 %v3807
        %v3888 = vunpack.c.l.b16 %v3808
        %v3889 = vunpack.c.h.b16 %v3808
        %v3890 = vunpack.c.l.b16 %v3809
        %v3891 = vunpack.c.h.b16 %v3809
        %v3892 = vunpack.c.l.b16 %v3810
        %v3893 = vunpack.c.h.b16 %v3810
        %v3894 = vunpack.c.l.b16 %v3811
        %v3895 = vunpack.c.h.b16 %v3811
        %v3896 = vunpack.c.l.b16 %v3812
        %v3897 = vunpack.c.h.b16 %v3812
        %v3898 = vunpack.c.l.b16 %v3813
        %v3899 = vunpack.c.h.b16 %v3813
        %v3900 = vunpack.c.l.b16 %v3814
        %v3901 = vunpack.c.h.b16 %v3814
        %v3902 = vunpack.c.l.b16 %v3815
        %v3903 = vunpack.c.h.b16 %v3815
        %v3904 = vunpack.c.l.b16 %v3816
        %v3905 = vunpack.c.h.b16 %v3816
        %v3906 = vunpack.c.l.b16 %v3817
        %v3907 = vunpack.c.h.b16 %v3817
        %v3908 = vunpack.c.l.b16 %v3818
        %v3909 = vunpack.c.h.b16 %v3818
        %v3910 = vunpack.c.l.b16 %v3819
        %v3911 = vunpack.c.h.b16 %v3819
        %v3912 = vunpack.c.l.b16 %v3820
        %v3913 = vunpack.c.h.b16 %v3820
        %v3914 = vunpack.c.l.b16 %v3821
        %v3915 = vunpack.c.h.b16 %v3821
        %v3916 = vunpack.c.l.b16 %v3822
        %v3917 = vunpack.c.h.b16 %v3822
        %v3918 = vunpack.c.l.b16 %v3823
        %v3919 = vunpack.c.h.b16 %v3823
        %v3920 = vunpack.c.l.b16 %v3824
        %v3921 = vunpack.c.h.b16 %v3824
        %v3922 = vunpack.c.l.b16 %v3825
        %v3923 = vunpack.c.h.b16 %v3825
        %v3924 = vunpack.c.l.b16 %v3826
        %v3925 = vunpack.c.h.b16 %v3826
        %v3926 = vunpack.c.l.b16 %v3827
        %v3927 = vunpack.c.h.b16 %v3827
        %v3928 = vunpack.c.l.b16 %v3828
        %v3929 = vunpack.c.h.b16 %v3828
        %v3930 = vunpack.c.l.b16 %v3829
        %v3931 = vunpack.c.h.b16 %v3829
        %v3932 = vpack.c.b16 %v3870, %v3868
        %v3933 = vpack.c.b16 %v3871, %v3869
        %v3934 = vpack.c.b16 %v3874, %v3872
        %v3935 = vpack.c.b16 %v3875, %v3873
        %v3936 = vpack.c.b16 %v3878, %v3876
        %v3937 = vpack.c.b16 %v3879, %v3877
        %v3938 = vpack.c.b16 %v3882, %v3880
        %v3939 = vpack.c.b16 %v3883, %v3881
        %v3940 = vpack.c.b16 %v3886, %v3884
        %v3941 = vpack.c.b16 %v3887, %v3885
        %v3942 = vpack.c.b16 %v3890, %v3888
        %v3943 = vpack.c.b16 %v3891, %v3889
        %v3944 = vpack.c.b16 %v3894, %v3892
        %v3945 = vpack.c.b16 %v3895, %v3893
        %v3946 = vpack.c.b16 %v3898, %v3896
        %v3947 = vpack.c.b16 %v3899, %v3897
        %v3948 = vpack.c.b16 %v3902, %v3900
        %v3949 = vpack.c.b16 %v3903, %v3901
        %v3950 = vpack.c.b16 %v3906, %v3904
        %v3951 = vpack.c.b16 %v3907, %v3905
        %v3952 = vpack.c.b16 %v3910, %v3908
        %v3953 = vpack.c.b16 %v3911, %v3909
        %v3954 = vpack.c.b16 %v3914, %v3912
        %v3955 = vpack.c.b16 %v3915, %v3913
        %v3956 = vpack.c.b16 %v3918, %v3916
        %v3957 = vpack.c.b16 %v3919, %v3917
        %v3958 = vpack.c.b16 %v3922, %v3920
        %v3959 = vpack.c.b16 %v3923, %v3921
        %v3960 = vpack.c.b16 %v3926, %v3924
        %v3961 = vpack.c.b16 %v3927, %v3925
        %v3962 = vpack.c.b16 %v3930, %v3928
        %v3963 = vpack.c.b16 %v3931, %v3929
        %3996 = vmatprep.subr.bf16.mxu0 %v3933
        %3997 = vmatpush1.bf16.msra.mxu0 %v3932
        %3998 = vmatprep.subr.bf16.mxu0 %v3935
        %3999 = vmatpush1.bf16.msra.mxu0 %v3934
        %4000 = vmatprep.subr.bf16.mxu0 %v3937
        %4001 = vmatpush1.bf16.msra.mxu0 %v3936
        %4002 = vmatprep.subr.bf16.mxu0 %v3939
        %4003 = vmatpush1.bf16.msra.mxu0 %v3938
        %4004 = vmatprep.subr.bf16.mxu0 %v3941
        %4005 = vmatpush1.bf16.msra.mxu0 %v3940
        %4006 = vmatprep.subr.bf16.mxu0 %v3943
        %4007 = vmatpush1.bf16.msra.mxu0 %v3942
        %4008 = vmatprep.subr.bf16.mxu0 %v3945
        %4009 = vmatpush1.bf16.msra.mxu0 %v3944
        %4010 = vmatprep.subr.bf16.mxu0 %v3947
        %4011 = vmatpush1.bf16.msra.mxu0 %v3946
        %4012 = vmatprep.subr.bf16.mxu0 %v3949
        %4013 = vmatpush1.bf16.msra.mxu0 %v3948
        %4014 = vmatprep.subr.bf16.mxu0 %v3951
        %4015 = vmatpush1.bf16.msra.mxu0 %v3950
        %4016 = vmatprep.subr.bf16.mxu0 %v3953
        %4017 = vmatpush1.bf16.msra.mxu0 %v3952
        %4018 = vmatprep.subr.bf16.mxu0 %v3955
        %4019 = vmatpush1.bf16.msra.mxu0 %v3954
        %4020 = vmatprep.subr.bf16.mxu0 %v3957
        %4021 = vmatpush1.bf16.msra.mxu0 %v3956
        %4022 = vmatprep.subr.bf16.mxu0 %v3959
        %4023 = vmatpush1.bf16.msra.mxu0 %v3958
        %4024 = vmatprep.subr.bf16.mxu0 %v3961
        %4025 = vmatpush1.bf16.msra.mxu0 %v3960
        %4026 = vmatprep.subr.bf16.mxu0 %v3963
        %4027 = vmatpush1.bf16.msra.mxu0 %v3962
        %4028 = vmatprep.mubr.bf16.mxu0 %v3833
        %4029 = vmatmul.mubr.bf16.gmra.mrb[0].mxu0 %v3832
        %v4030 = vpop.f32.mrb[0].mxu0
        %v4031 = vadd.f32 0.0, %v4030
        %v4032 = vpop.f32.mrb[0].mxu0
        %v4033 = vadd.f32 0.0, %v4032
        %v4034 = vpop.f32.mrb[0].mxu0
        %v4035 = vpop.f32.mrb[0].mxu0
        %4036 = vdwg.mxu0
        %v4037 = vadd.f32 %v3795, %v4031
        %v4038 = vadd.f32 %v3796, %v4033
        %s4039 = scalar_lea.vmem [#allocation13], 2560
        %v4040 = vld [vmem:[%s4039] sm:$0xff]
        %v4041 = vld [vmem:[%s4039 + $0x8] sm:$0xff]
        %v4042 = vld [vmem:[%s4039 + $0x10] sm:$0xff]
        %v4043 = vld [vmem:[%s4039 + $0x18] sm:$0xff]
        %v4044 = vld [vmem:[%s4039 + $0x20] sm:$0xff]
        %v4045 = vld [vmem:[%s4039 + $0x28] sm:$0xff]
        %v4046 = vld [vmem:[%s4039 + $0x30] sm:$0xff]
        %v4047 = vld [vmem:[%s4039 + $0x38] sm:$0xff]
        %v4048 = vld [vmem:[%s4039 + $0x40] sm:$0xff]
        %v4049 = vld [vmem:[%s4039 + $0x48] sm:$0xff]
        %v4050 = vld [vmem:[%s4039 + $0x50] sm:$0xff]
        %v4051 = vld [vmem:[%s4039 + $0x58] sm:$0xff]
        %v4052 = vld [vmem:[%s4039 + $0x60] sm:$0xff]
        %v4053 = vld [vmem:[%s4039 + $0x68] sm:$0xff]
        %v4054 = vld [vmem:[%s4039 + $0x70] sm:$0xff]
        %v4055 = vld [vmem:[%s4039 + $0x78] sm:$0xff]
        %v4056 = vld [vmem:[%s4039 + $0x80] sm:$0xff]
        %v4057 = vld [vmem:[%s4039 + $0x88] sm:$0xff]
        %v4058 = vld [vmem:[%s4039 + $0x90] sm:$0xff]
        %v4059 = vld [vmem:[%s4039 + $0x98] sm:$0xff]
        %v4060 = vld [vmem:[%s4039 + $0xa0] sm:$0xff]
        %v4061 = vld [vmem:[%s4039 + $0xa8] sm:$0xff]
        %v4062 = vld [vmem:[%s4039 + $0xb0] sm:$0xff]
        %v4063 = vld [vmem:[%s4039 + $0xb8] sm:$0xff]
        %v4064 = vld [vmem:[%s4039 + $0xc0] sm:$0xff]
        %v4065 = vld [vmem:[%s4039 + $0xc8] sm:$0xff]
        %v4066 = vld [vmem:[%s4039 + $0xd0] sm:$0xff]
        %v4067 = vld [vmem:[%s4039 + $0xd8] sm:$0xff]
        %v4068 = vld [vmem:[%s4039 + $0xe0] sm:$0xff]
        %v4069 = vld [vmem:[%s4039 + $0xe8] sm:$0xff]
        %v4070 = vld [vmem:[%s4039 + $0xf0] sm:$0xff]
        %v4071 = vld [vmem:[%s4039 + $0xf8] sm:$0xff]
        %v4104 = vunpack.c.l.b16 %v4040
        %v4105 = vunpack.c.h.b16 %v4040
        %v4106 = vunpack.c.l.b16 %v4041
        %v4107 = vunpack.c.h.b16 %v4041
        %v4108 = vunpack.c.l.b16 %v4042
        %v4109 = vunpack.c.h.b16 %v4042
        %v4110 = vunpack.c.l.b16 %v4043
        %v4111 = vunpack.c.h.b16 %v4043
        %v4112 = vunpack.c.l.b16 %v4044
        %v4113 = vunpack.c.h.b16 %v4044
        %v4114 = vunpack.c.l.b16 %v4045
        %v4115 = vunpack.c.h.b16 %v4045
        %v4116 = vunpack.c.l.b16 %v4046
        %v4117 = vunpack.c.h.b16 %v4046
        %v4118 = vunpack.c.l.b16 %v4047
        %v4119 = vunpack.c.h.b16 %v4047
        %v4120 = vunpack.c.l.b16 %v4048
        %v4121 = vunpack.c.h.b16 %v4048
        %v4122 = vunpack.c.l.b16 %v4049
        %v4123 = vunpack.c.h.b16 %v4049
        %v4124 = vunpack.c.l.b16 %v4050
        %v4125 = vunpack.c.h.b16 %v4050
        %v4126 = vunpack.c.l.b16 %v4051
        %v4127 = vunpack.c.h.b16 %v4051
        %v4128 = vunpack.c.l.b16 %v4052
        %v4129 = vunpack.c.h.b16 %v4052
        %v4130 = vunpack.c.l.b16 %v4053
        %v4131 = vunpack.c.h.b16 %v4053
        %v4132 = vunpack.c.l.b16 %v4054
        %v4133 = vunpack.c.h.b16 %v4054
        %v4134 = vunpack.c.l.b16 %v4055
        %v4135 = vunpack.c.h.b16 %v4055
        %v4136 = vunpack.c.l.b16 %v4056
        %v4137 = vunpack.c.h.b16 %v4056
        %v4138 = vunpack.c.l.b16 %v4057
        %v4139 = vunpack.c.h.b16 %v4057
        %v4140 = vunpack.c.l.b16 %v4058
        %v4141 = vunpack.c.h.b16 %v4058
        %v4142 = vunpack.c.l.b16 %v4059
        %v4143 = vunpack.c.h.b16 %v4059
        %v4144 = vunpack.c.l.b16 %v4060
        %v4145 = vunpack.c.h.b16 %v4060
        %v4146 = vunpack.c.l.b16 %v4061
        %v4147 = vunpack.c.h.b16 %v4061
        %v4148 = vunpack.c.l.b16 %v4062
        %v4149 = vunpack.c.h.b16 %v4062
        %v4150 = vunpack.c.l.b16 %v4063
        %v4151 = vunpack.c.h.b16 %v4063
        %v4152 = vunpack.c.l.b16 %v4064
        %v4153 = vunpack.c.h.b16 %v4064
        %v4154 = vunpack.c.l.b16 %v4065
        %v4155 = vunpack.c.h.b16 %v4065
        %v4156 = vunpack.c.l.b16 %v4066
        %v4157 = vunpack.c.h.b16 %v4066
        %v4158 = vunpack.c.l.b16 %v4067
        %v4159 = vunpack.c.h.b16 %v4067
        %v4160 = vunpack.c.l.b16 %v4068
        %v4161 = vunpack.c.h.b16 %v4068
        %v4162 = vunpack.c.l.b16 %v4069
        %v4163 = vunpack.c.h.b16 %v4069
        %v4164 = vunpack.c.l.b16 %v4070
        %v4165 = vunpack.c.h.b16 %v4070
        %v4166 = vunpack.c.l.b16 %v4071
        %v4167 = vunpack.c.h.b16 %v4071
        %v4168 = vpack.c.b16 %v4106, %v4104
        %v4169 = vpack.c.b16 %v4107, %v4105
        %v4170 = vpack.c.b16 %v4110, %v4108
        %v4171 = vpack.c.b16 %v4111, %v4109
        %v4172 = vpack.c.b16 %v4114, %v4112
        %v4173 = vpack.c.b16 %v4115, %v4113
        %v4174 = vpack.c.b16 %v4118, %v4116
        %v4175 = vpack.c.b16 %v4119, %v4117
        %v4176 = vpack.c.b16 %v4122, %v4120
        %v4177 = vpack.c.b16 %v4123, %v4121
        %v4178 = vpack.c.b16 %v4126, %v4124
        %v4179 = vpack.c.b16 %v4127, %v4125
        %v4180 = vpack.c.b16 %v4130, %v4128
        %v4181 = vpack.c.b16 %v4131, %v4129
        %v4182 = vpack.c.b16 %v4134, %v4132
        %v4183 = vpack.c.b16 %v4135, %v4133
        %v4184 = vpack.c.b16 %v4138, %v4136
        %v4185 = vpack.c.b16 %v4139, %v4137
        %v4186 = vpack.c.b16 %v4142, %v4140
        %v4187 = vpack.c.b16 %v4143, %v4141
        %v4188 = vpack.c.b16 %v4146, %v4144
        %v4189 = vpack.c.b16 %v4147, %v4145
        %v4190 = vpack.c.b16 %v4150, %v4148
        %v4191 = vpack.c.b16 %v4151, %v4149
        %v4192 = vpack.c.b16 %v4154, %v4152
        %v4193 = vpack.c.b16 %v4155, %v4153
        %v4194 = vpack.c.b16 %v4158, %v4156
        %v4195 = vpack.c.b16 %v4159, %v4157
        %v4196 = vpack.c.b16 %v4162, %v4160
        %v4197 = vpack.c.b16 %v4163, %v4161
        %v4198 = vpack.c.b16 %v4166, %v4164
        %v4199 = vpack.c.b16 %v4167, %v4165
        %4232 = vmatprep.subr.bf16.mxu0 %v4169
        %4233 = vmatpush1.bf16.msra.mxu0 %v4168
        %4234 = vmatprep.subr.bf16.mxu0 %v4171
        %4235 = vmatpush1.bf16.msra.mxu0 %v4170
        %4236 = vmatprep.subr.bf16.mxu0 %v4173
        %4237 = vmatpush1.bf16.msra.mxu0 %v4172
        %4238 = vmatprep.subr.bf16.mxu0 %v4175
        %4239 = vmatpush1.bf16.msra.mxu0 %v4174
        %4240 = vmatprep.subr.bf16.mxu0 %v4177
        %4241 = vmatpush1.bf16.msra.mxu0 %v4176
        %4242 = vmatprep.subr.bf16.mxu0 %v4179
        %4243 = vmatpush1.bf16.msra.mxu0 %v4178
        %4244 = vmatprep.subr.bf16.mxu0 %v4181
        %4245 = vmatpush1.bf16.msra.mxu0 %v4180
        %4246 = vmatprep.subr.bf16.mxu0 %v4183
        %4247 = vmatpush1.bf16.msra.mxu0 %v4182
        %4248 = vmatprep.subr.bf16.mxu0 %v4185
        %4249 = vmatpush1.bf16.msra.mxu0 %v4184
        %4250 = vmatprep.subr.bf16.mxu0 %v4187
        %4251 = vmatpush1.bf16.msra.mxu0 %v4186
        %4252 = vmatprep.subr.bf16.mxu0 %v4189
        %4253 = vmatpush1.bf16.msra.mxu0 %v4188
        %4254 = vmatprep.subr.bf16.mxu0 %v4191
        %4255 = vmatpush1.bf16.msra.mxu0 %v4190
        %4256 = vmatprep.subr.bf16.mxu0 %v4193
        %4257 = vmatpush1.bf16.msra.mxu0 %v4192
        %4258 = vmatprep.subr.bf16.mxu0 %v4195
        %4259 = vmatpush1.bf16.msra.mxu0 %v4194
        %4260 = vmatprep.subr.bf16.mxu0 %v4197
        %4261 = vmatpush1.bf16.msra.mxu0 %v4196
        %4262 = vmatprep.subr.bf16.mxu0 %v4199
        %4263 = vmatpush1.bf16.msra.mxu0 %v4198
        %4264 = vmatprep.mubr.bf16.mxu0 %v1653
        %4265 = vmatmul.mubr.bf16.gmra.mrb[0].mxu0 %v1652
        %v4266 = vpop.f32.mrb[0].mxu0
        %v4267 = vadd.f32 0.0, %v4266
        %v4268 = vpop.f32.mrb[0].mxu0
        %v4269 = vadd.f32 0.0, %v4268
        %v4270 = vpop.f32.mrb[0].mxu0
        %v4271 = vpop.f32.mrb[0].mxu0
        %4272 = vdwg.mxu0
        %v4273 = vadd.f32 %v4037, %v4267
        %v4274 = vadd.f32 %v4038, %v4269
        %v4275 = vld [vmem:[#allocation14] sm:$0x3]
        %v4277 = vlaneseq
        %v4278 = vshrl.u32 %v4277, 7
        %v4279 = vsub.s32 0, %v4278
        %v4280 = vrot.slane %v4275, %v4279
        %v4281 = vlaneseq
        %v4282 = vshrl.u32 %v4281, 7
        %v4283 = vsub.s32 1, %v4282
        %v4284 = vrot.slane %v4275, %v4283
        %v4287 = vadd.f32 %v4273, %v4280
        %v4288 = vadd.f32 %v4274, %v4284
        %4289 = vst [vmem:[%s435] sm:$0xff] %v4287
        %4290 = vst [vmem:[%s435 + $0x8] sm:$0xff] %v4288
        %s4291 = sand.u32 %s230, 1
        %s4292 = scalar_lea.sflag [#allocation4], %s4291
        %s4293 = sand.u32 %s230, 1
        %s4294 = smul.addr %s4293, 16
        %s4295 = scalar_lea.vmem [#allocation16], %s4294
        // Predicated region
        $region89: #{tpu_custom_call.1} parent=55 // pred_check
          %p4296 = pneg %p240
        $region90: #{tpu_custom_call.1} parent=55 // pred_check_branch
          %4298 = sbr.rel (%p4296) target = $region92
        $region91: #{tpu_custom_call.1} parent=55 // pred_region
          %s4300 = ssub.s32 256, 256
          %4301 = vsyncadd %s4292, %s4300
          %s4302 = smul.addr %s28, 2
          %s4303 = smul.addr %s4302, 128
          %s4304 = scalar_lea.hbm %s9, %s4303
          %s4306 = sshll.u32 %s4295, 4
          %s4307 = int_to_ptr.vmem [resolvable:$true] %s4306
          %4309 = dma.vmem_to_hbm [thread:$0]  %s4307, 256, %s4304, %s4292
        $region92: #{tpu_custom_call.1} parent=55 // pred_fallthru
          _
      $region56: #{tpu_custom_call.1} parent=5 // pred_fallthru
        _
      %p4310 = scmp.le.s32.totalorder 2, %s23
      // Predicated region
      $region93: #{tpu_custom_call.1} parent=5 // pred_check
        %p4311 = pneg %p4310
      $region94: #{tpu_custom_call.1} parent=5 // pred_check_branch
        %4313 = sbr.rel (%p4311) target = $region96
      $region95: #{tpu_custom_call.1} parent=5 // pred_region
        %s4314 = ssub.s32 %s23, 2
        // Predicated region
        $region97: #{tpu_custom_call.1} parent=95 // pred_check
          %p4315 = pneg %p246
        $region98: #{tpu_custom_call.1} parent=95 // pred_check_branch
          %4317 = sbr.rel (%p4315) target = $region100
        $region99: #{tpu_custom_call.1} parent=95 // pred_region
          %s4318 = sand.u32 %s231, 1
          %s4319 = scalar_lea.sflag [#allocation4], %s4318
          %s4320 = sand.u32 %s231, 1
          %s4321 = smul.addr %s4320, 16
          %s4322 = scalar_lea.vmem [#allocation16], %s4321
          %4323 = dma.done %s4319, 256
        $region100: #{tpu_custom_call.1} parent=95 // pred_fallthru
          _
      $region96: #{tpu_custom_call.1} parent=5 // pred_fallthru
        _
    $region6: #{tpu_custom_call.1} parent=1 // loop_footer
      %s27 = sadd.s32 1, %s23
    $region7: #{tpu_custom_call.1} parent=1 // loop_footer_branch
      %22 = sbr.rel target = $region3
    $region8: #{tpu_custom_call.1} parent=1 // loop_exit
      _
    %4324 = vsyncpa [#allocation3], 1
    %s4325 = scalar_lea.sflag [#allocation3], 1
    %4326 = vsyncpa %s4325, 1
    %4327 = vsyncpa [#allocation6], 1
    %4328 = vsyncpa [#allocation9], 1
    %4329 = vsyncpa [#allocation12], 1
    %4330 = vsyncpa [#allocation15], 1
    %4331 = vsyncpa [#allocation4], 1
    %s4332 = scalar_lea.sflag [#allocation4], 1
    %4333 = vsyncpa %s4332, 1

</llo_original>
